<compile_context>
chip_gen: v7x
topology: tpu7x:2x2x1
jax: 0.10.0
libtpu: 0.0.40
codegen_flags: <defaults>
</compile_context>

<pallas_src>
import functools

import jax
import jax.numpy as jnp
import numpy as np
from jax.experimental import pallas as pl
from jax.experimental.pallas import tpu as pltpu


# --------------------------------------------------------------------------- #
# Kernel
# --------------------------------------------------------------------------- #
def hopfield_scorer_kernel(label_ref, kq_ref, value_ref,
                           w1_ref, b1_ref, w2_ref, b2_ref, w3_ref,
                           out_ref, *, beta, num_iteration, compute_dtype, b3):
    f32 = jnp.float32
    labels0 = label_ref[...].astype(f32)          # [TB, L, H]  (f32 Hopfield path)
    kq = kq_ref[...].astype(f32)                  # [TB, H]  precomputed text @ (Wk Wq^T)
    value = value_ref[...].astype(f32)            # [TB, H]  precomputed text @ Wv
    tb, nl, _ = labels0.shape

    # ---- Hopfield update (collapsed recurrence, zero MXU work per iter) ----
    logits = beta * jnp.sum(labels0 * kq[:, None, :], axis=-1)    # [TB, L]
    vk = beta * jnp.sum(value * kq, axis=-1, keepdims=True)       # [TB, 1]

    cum_attn = jnp.zeros_like(logits)
    for t in range(num_iteration):
        m = jnp.max(logits, axis=-1, keepdims=True)
        e = jnp.exp(logits - m)
        denom = jnp.sum(e, axis=-1, keepdims=True)
        # divide -> EUP reciprocal (free slot; exp already lives there)
        attn = e * pl.reciprocal(denom, approx=True)              # softmax over L
        cum_attn = cum_attn + attn
        if t + 1 < num_iteration:
            logits = logits + attn * vk

    labels = labels0 + cum_attn[:, :, None] * value[:, None, :]   # [TB, L, H]

    # ---- MLP scorer: Linear(H,M1) -> ReLU -> Linear(M1,M2) -> ReLU -> Linear(M2,1)
    # The two big matmuls run with bf16 operands by default (f32 accumulation).
    x = labels.reshape(tb * nl, -1).astype(compute_dtype)         # [TB*L, H]
    h1 = jnp.dot(x, w1_ref[...].astype(compute_dtype),
                 preferred_element_type=f32) + b1_ref[...].astype(f32)
    h1 = jnp.maximum(h1, 0.0)
    h2 = jnp.dot(h1.astype(compute_dtype), w2_ref[...].astype(compute_dtype),
                 preferred_element_type=f32) + b2_ref[...].astype(f32)
    h2 = jnp.maximum(h2, 0.0)                                     # [TB*L, M2]

    # Final Linear(M2, 1): VPU multiply + lane reduce (avoids an N=1 MXU pass).
    w3row = w3_ref[...].astype(f32)                               # [1, M2]
    scores = jnp.sum(h2.reshape(tb, nl, -1) * w3row[None, :, :], axis=-1)
    scores = scores + b3                                          # b3: closure constant

    out_ref[...] = scores.astype(out_ref.dtype)


# --------------------------------------------------------------------------- #
# Generation-aware knobs & batch-tile picker
# --------------------------------------------------------------------------- #
def _tpu_caps():
    """Best-effort (never-raising) per-generation knobs."""
    caps = {"cores": 1, "mxu": 256,
            "vmem_budget": 80 << 20, "vmem_limit": 100 << 20}   # v5e/v6e defaults
    kind = ""
    try:
        kind = jax.devices()[0].device_kind.lower()
    except Exception:
        pass
    try:  # refine from the runtime when available
        vmem = getattr(pltpu.get_tpu_info(), "vmem_capacity_bytes", None)
        if vmem:
            caps["vmem_budget"] = min(caps["vmem_budget"], int(vmem) * 5 // 8)
            caps["vmem_limit"] = min(caps["vmem_limit"], int(vmem) * 7 // 8)
    except Exception:
        pass
    if ("v5 lite" in kind) or ("v5e" in kind) or ("v5lite" in kind):
        caps["mxu"] = 128                       # v5e MXUs are 128x128
    if "7" in kind:                             # v7x: 2 TCs/chip, 64 MiB VMEM/core
        caps.update(cores=2, mxu=256, vmem_budget=44 << 20, vmem_limit=56 << 20)
    return caps


def _pick_batch_tile(B, L, H, M1, M2, *, label_bytes, compute_bytes,
                     batch_tile=None, caps=None):
    """Largest batch tile TB that fits the generation-aware VMEM budget.

    TB must divide B and be a multiple of 8 (or equal B) so the 2-D blocks
    (TB, H) / (TB, L) satisfy the (8, 128) rule.  On multi-TC chips (v7x) we
    additionally keep >= cores (and a multiple of cores) grid steps so the
    "parallel" grid axis can be sharded across both TensorCores.  Returning
    the largest fitting tile amortises the ~0.35us/step grid overhead and
    keeps TB*L comfortably above the native MXU tile (128 on v5e, 256 later).
    """
    caps = caps or _tpu_caps()

    def tile_ok(tb):
        return B % tb == 0 and (tb == B or tb % 8 == 0)

    if batch_tile is not None:
        if not tile_ok(batch_tile):
            raise ValueError("batch_tile must divide B and be a multiple of 8 (or == B)")
        return batch_tile

    def vmem_bytes(tb):
        # Pipelined (double-buffered) per-step blocks; label_rep dominates.
        blocks = 2 * (tb * L * H * label_bytes + 2 * tb * H * 4 + tb * L * 4)
        # Grid-invariant weights: single-buffered when pl.Buffered(1) is
        # honoured; charge 1.5x so a double-buffered fallback still fits.
        weights = ((H * M1 + M1 * M2) * compute_bytes + (M1 + 2 * M2) * 4) * 3 // 2
        # Live f32 intermediates (labels copy, h1, h2) inside the body.
        live = tb * L * (2 * H + M1 + M2) * 4
        return blocks + weights + live

    cands = [d for d in range(1, B + 1) if tile_ok(d)]
    if caps["cores"] > 1:
        multi = [d for d in cands
                 if (B // d) >= caps["cores"] and (B // d) % caps["cores"] == 0]
        cands = multi or cands       # fall back if B is too small to split
    fitting = [d for d in cands if vmem_bytes(d) <= caps["vmem_budget"]] or [min(cands)]
    return max(fitting)


# --------------------------------------------------------------------------- #
# Wrapper
# --------------------------------------------------------------------------- #
def fold_params(params, *, compute_dtype=jnp.bfloat16):
    """One-time fold/cast of the weights.  Cache the result across calls."""
    f32 = jnp.float32
    return {
        # (labels @ Wq) . (text @ Wk) == labels . (text @ (Wk @ Wq^T))
        "a_fold": jnp.dot(params["wk"].astype(f32), params["wq"].astype(f32).T,
                          preferred_element_type=f32),            # [H, H]
        "wv": params["wv"].astype(f32),                           # [H, H]
        "w1": params["w1"].astype(compute_dtype),                 # [H, M1]
        "b1": params["b1"].astype(f32),                           # [1, M1]
        "w2": params["w2"].astype(compute_dtype),                 # [M1, M2]
        "b2": params["b2"].astype(f32),                           # [1, M2]
        "w3_row": params["w3"].T.astype(f32),                     # [1, M2] lane-dense
        "b3": params["b3"],                                       # scalar
    }


def _weight_spec(shape, single_buffer):
    """BlockSpec for a grid-invariant weight block (constant index_map)."""
    index_map = lambda b: (0,) * len(shape)
    if single_buffer and hasattr(pl, "Buffered"):
        try:
            # Nothing to double-buffer for a constant block index.
            return pl.BlockSpec(shape, index_map, pipeline_mode=pl.Buffered(1))
        except Exception:
            pass
    return pl.BlockSpec(shape, index_map)


def hopfield_scorer(text_rep, label_rep, params, *, beta=4.0, num_iteration=1,
                    batch_tile=None, compute_dtype=jnp.bfloat16,
                    label_stream_dtype=None, folded=None):
    B, H = text_rep.shape
    _, L, _ = label_rep.shape

    # Fold/cast weights once (pass `folded=fold_params(params, ...)` from the
    # model level to cache across calls instead of recomputing here).
    if folded is None:
        folded = fold_params(params, compute_dtype=compute_dtype)
    M1 = folded["w1"].shape[1]
    M2 = folded["w2"].shape[1]

    if label_stream_dtype is not None:
        label_rep = label_rep.astype(label_stream_dtype)   # halves the dominant DMA

    # Hopfield projections precomputed outside the kernel (tiny, exact f32):
    #   kq = text @ (Wk @ Wq^T),  value = text @ Wv
    text32 = text_rep.astype(jnp.float32)
    kq = jnp.dot(text32, folded["a_fold"], preferred_element_type=jnp.float32)
    value = jnp.dot(text32, folded["wv"], preferred_element_type=jnp.float32)

    caps = _tpu_caps()
    TB = _pick_batch_tile(B, L, H, M1, M2,
                          label_bytes=jnp.dtype(label_rep.dtype).itemsize,
                          compute_bytes=jnp.dtype(compute_dtype).itemsize,
                          batch_tile=batch_tile, caps=caps)
    grid = (B // TB,)

    # b3 travels as a trace-time Python constant (like beta).  If params are
    # traced under jit, hoist fold_params() outside the jit boundary.
    b3 = float(np.asarray(folded["b3"]).reshape(-1)[0])

    kernel = functools.partial(hopfield_scorer_kernel,
                               beta=float(beta),
                               num_iteration=int(num_iteration),
                               compute_dtype=compute_dtype,
                               b3=b3)

    args = (label_rep, kq, value,
            folded["w1"], folded["b1"], folded["w2"], folded["b2"],
            folded["w3_row"])

    def _build_call(single_buffer):
        return pl.pallas_call(
            kernel,
            out_shape=jax.ShapeDtypeStruct((B, L), jnp.float32),
            grid_spec=pltpu.PrefetchScalarGridSpec(
                num_scalar_prefetch=0,
                grid=grid,
                in_specs=[
                    pl.BlockSpec((TB, L, H), lambda b: (b, 0, 0)),   # label_rep
                    pl.BlockSpec((TB, H), lambda b: (b, 0)),         # kq
                    pl.BlockSpec((TB, H), lambda b: (b, 0)),         # value
                    _weight_spec((H, M1), single_buffer),            # W1
                    _weight_spec((1, M1), single_buffer),            # b1
                    _weight_spec((M1, M2), single_buffer),           # W2
                    _weight_spec((1, M2), single_buffer),            # b2
                    _weight_spec((1, M2), single_buffer),            # W3 row
                ],
                # [TB, L] tile; with L < 128 this is a masked store (output
                # bytes are tiny), with L >= 128 it is already lane-dense.
                out_specs=pl.BlockSpec((TB, L), lambda b: (b, 0)),
            ),
            compiler_params=pltpu.CompilerParams(
                dimension_semantics=("parallel",),
                vmem_limit_bytes=int(caps["vmem_limit"])),
        )

    try:
        return _build_call(True)(*args)
    except Exception:
        # pipeline_mode=pl.Buffered(1) not honoured on this jax/libtpu:
        # fall back to default double-buffered weight blocks.
        return _build_call(False)(*args)


# --------------------------------------------------------------------------- #
# Pure-JAX reference mirroring the PyTorch module
# --------------------------------------------------------------------------- #
def hopfield_scorer_ref(text_rep, label_rep, params, *, beta=4.0, num_iteration=1):
    labels = label_rep.astype(jnp.float32)
    text = text_rep.astype(jnp.float32)[:, None, :]                  # [B, 1, H]
    for _ in range(num_iteration):
        q = labels @ params["wq"]                                    # [B, L, H]
        k = text @ params["wk"]                                      # [B, 1, H]
        v = text @ params["wv"]                                      # [B, 1, H]
        attn = jnp.einsum("blh,bkh->blk", q, k) * beta               # [B, L, 1]
        attn = jax.nn.softmax(attn, axis=1)
        labels = labels + attn * v
    h1 = jax.nn.relu(labels @ params["w1"] + params["b1"][0])
    h2 = jax.nn.relu(h1 @ params["w2"] + params["b2"][0])
    return (h2 @ params["w3"] + params["b3"][0])[..., 0]             # [B, L]


def make_params(key, hidden_size, mlp_hidden_size):
    ks = jax.random.split(key, 9)
    H, M1 = hidden_size, mlp_hidden_size
    M2 = M1 // 2
    s = lambda fan_in: 1.0 / jnp.sqrt(fan_in)
    return {
        "wq": jax.random.normal(ks[0], (H, H), jnp.float32) * s(H),
        "wk": jax.random.normal(ks[1], (H, H), jnp.float32) * s(H),
        "wv": jax.random.normal(ks[2], (H, H), jnp.float32) * s(H),
        "w1": jax.random.normal(ks[3], (H, M1), jnp.float32) * s(H),
        "b1": jax.random.normal(ks[4], (1, M1), jnp.float32) * 0.1,
        "w2": jax.random.normal(ks[5], (M1, M2), jnp.float32) * s(M1),
        "b2": jax.random.normal(ks[6], (1, M2), jnp.float32) * 0.1,
        "w3": jax.random.normal(ks[7], (M2, 1), jnp.float32) * s(M2),
        "b3": jax.random.normal(ks[8], (1, 1), jnp.float32) * 0.1,
    }


if __name__ == "__main__":
    B, L, H = 16, 8, 32
    MLP_HIDDEN = 256
    BETA = 4.0

    key = jax.random.PRNGKey(0)
    k_text, k_label, k_params = jax.random.split(key, 3)
    text_rep = 0.5 * jax.random.normal(k_text, (B, H), jnp.float32)
    label_rep = 0.5 * jax.random.normal(k_label, (B, L, H), jnp.float32)
    params = make_params(k_params, H, MLP_HIDDEN)

    ref1 = hopfield_scorer_ref(text_rep, label_rep, params, beta=BETA, num_iteration=1)
    ref3 = hopfield_scorer_ref(text_rep, label_rep, params, beta=BETA, num_iteration=3)

    # Cached fold (demonstrates the "cache a_fold / bf16 casts across calls" item).
    folded_bf16 = fold_params(params, compute_dtype=jnp.bfloat16)

    # 1) Default path: bf16 MXU operands for the MLP matmuls (f32 accumulation),
    #    auto batch tile (whole batch on v5e/v6e; >=2 even grid steps on v7x).
    out = hopfield_scorer(text_rep, label_rep, params, beta=BETA, num_iteration=1,
                          folded=folded_bf16)
    out = jax.block_until_ready(out)
    np.testing.assert_allclose(np.asarray(out), np.asarray(ref1), rtol=5e-2, atol=5e-2)

    # 2) f32 compute path, explicit batch tiling (TB=8 -> 2 grid steps) and a
    #    multi-iteration Hopfield update (validates the collapsed recurrence).
    out3 = hopfield_scorer(text_rep, label_rep, params, beta=BETA, num_iteration=3,
                           batch_tile=8, compute_dtype=jnp.float32)
    out3 = jax.block_until_ready(out3)
    np.testing.assert_allclose(np.asarray(out3), np.asarray(ref3), rtol=5e-3, atol=5e-3)

    # 3) bf16 label stream (halves the dominant per-step DMA) + bf16 MLP weights.
    out_bf = hopfield_scorer(text_rep, label_rep, params, beta=BETA, num_iteration=1,
                             label_stream_dtype=jnp.bfloat16, folded=folded_bf16)
    out_bf = jax.block_until_ready(out_bf)
    np.testing.assert_allclose(np.asarray(out_bf), np.asarray(ref1), rtol=7e-2, atol=7e-2)

    print("KERNEL_OK")
</pallas_src>

<mosaic_0001>
module attributes {stable_mosaic.version = 11 : i64} {
  func.func @hopfield_scorer_kernel(%arg0: i32, %arg1: memref<16x8x32xf32, #tpu.memory_space<vmem>>, %arg2: memref<16x32xf32, #tpu.memory_space<vmem>>, %arg3: memref<16x32xf32, #tpu.memory_space<vmem>>, %arg4: memref<32x256xbf16, #tpu.memory_space<vmem>>, %arg5: memref<1x256xf32, #tpu.memory_space<vmem>>, %arg6: memref<256x128xbf16, #tpu.memory_space<vmem>>, %arg7: memref<1x128xf32, #tpu.memory_space<vmem>>, %arg8: memref<1x128xf32, #tpu.memory_space<vmem>>, %arg9: memref<16x8xf32, #tpu.memory_space<vmem>>) attributes {dimension_semantics = [#tpu.dimension_semantics<parallel>], iteration_bounds = array<i64: 1>, scalar_prefetch = 0 : i64, scratch_operands = 0 : i64, tpu.core_type = #tpu.core_type<tc>, window_params = [{transform_indices = @transform_0, window_bounds = array<i64: 16, 8, 32>}, {transform_indices = @transform_1, window_bounds = array<i64: 16, 32>}, {transform_indices = @transform_2, window_bounds = array<i64: 16, 32>}, {pipeline_mode = #tpu.pipeline_mode<synchronous>, transform_indices = @transform_3, window_bounds = array<i64: 32, 256>}, {pipeline_mode = #tpu.pipeline_mode<synchronous>, transform_indices = @transform_4, window_bounds = array<i64: 1, 256>}, {pipeline_mode = #tpu.pipeline_mode<synchronous>, transform_indices = @transform_5, window_bounds = array<i64: 256, 128>}, {pipeline_mode = #tpu.pipeline_mode<synchronous>, transform_indices = @transform_6, window_bounds = array<i64: 1, 128>}, {pipeline_mode = #tpu.pipeline_mode<synchronous>, transform_indices = @transform_7, window_bounds = array<i64: 1, 128>}, {transform_indices = @transform_8, window_bounds = array<i64: 16, 8>}]} {
    %c0 = arith.constant 0 : index
    %c0_0 = arith.constant 0 : index
    %c0_1 = arith.constant 0 : index
    %0 = vector.load %arg1[%c0, %c0_0, %c0_1] : memref<16x8x32xf32, #tpu.memory_space<vmem>>, vector<16x8x32xf32>
    %c0_2 = arith.constant 0 : index
    %c0_3 = arith.constant 0 : index
    %1 = vector.load %arg2[%c0_2, %c0_3] : memref<16x32xf32, #tpu.memory_space<vmem>>, vector<16x32xf32>
    %c0_4 = arith.constant 0 : index
    %c0_5 = arith.constant 0 : index
    %2 = vector.load %arg3[%c0_4, %c0_5] : memref<16x32xf32, #tpu.memory_space<vmem>>, vector<16x32xf32>
    %3 = vector.shape_cast %1 : vector<16x32xf32> to vector<16x1x32xf32>
    %4 = vector.broadcast %3 : vector<16x1x32xf32> to vector<16x8x32xf32>
    %5 = arith.mulf %0, %4 : vector<16x8x32xf32>
    %cst = arith.constant dense<0.000000e+00> : vector<16x8xf32>
    %6 = vector.multi_reduction <add>, %5, %cst [2] : vector<16x8x32xf32> to vector<16x8xf32>
    %cst_6 = arith.constant 4.000000e+00 : f32
    %7 = vector.broadcast %cst_6 : f32 to vector<16x8xf32>
    %8 = arith.mulf %7, %6 : vector<16x8xf32>
    %cst_7 = arith.constant 0.000000e+00 : f32
    %9 = vector.broadcast %cst_7 : f32 to vector<16x8xf32>
    %cst_8 = arith.constant dense<0xFF800000> : vector<16xf32>
    %10 = vector.multi_reduction <maximumf>, %8, %cst_8 [1] : vector<16x8xf32> to vector<16xf32>
    %11 = vector.shape_cast %10 : vector<16xf32> to vector<16x1xf32>
    %12 = vector.broadcast %11 : vector<16x1xf32> to vector<16x8xf32>
    %13 = arith.subf %8, %12 : vector<16x8xf32>
    %14 = math.exp %13 : vector<16x8xf32>
    %cst_9 = arith.constant dense<0.000000e+00> : vector<16xf32>
    %15 = vector.multi_reduction <add>, %14, %cst_9 [1] : vector<16x8xf32> to vector<16xf32>
    %16 = vector.shape_cast %15 : vector<16xf32> to vector<16x1xf32>
    %17 = tpu.reciprocal %16 {approx = true} : vector<16x1xf32> -> vector<16x1xf32>
    %18 = vector.broadcast %17 : vector<16x1xf32> to vector<16x8xf32>
    %19 = arith.mulf %14, %18 : vector<16x8xf32>
    %20 = arith.addf %9, %19 : vector<16x8xf32>
    %21 = vector.shape_cast %20 : vector<16x8xf32> to vector<16x8x1xf32>
    %22 = vector.shape_cast %2 : vector<16x32xf32> to vector<16x1x32xf32>
    %23 = vector.broadcast %21 : vector<16x8x1xf32> to vector<16x8x32xf32>
    %24 = vector.broadcast %22 : vector<16x1x32xf32> to vector<16x8x32xf32>
    %25 = arith.mulf %23, %24 : vector<16x8x32xf32>
    %26 = arith.addf %0, %25 : vector<16x8x32xf32>
    %27 = vector.shape_cast %26 : vector<16x8x32xf32> to vector<128x32xf32>
    %28 = arith.truncf %27 : vector<128x32xf32> to vector<128x32xbf16>
    %c0_10 = arith.constant 0 : index
    %c0_11 = arith.constant 0 : index
    %29 = vector.load %arg4[%c0_10, %c0_11] : memref<32x256xbf16, #tpu.memory_space<vmem>>, vector<32x256xbf16>
    %cst_12 = arith.constant dense<0.000000e+00> : vector<128x256xf32>
    %30 = tpu.matmul %28, %29, %cst_12 {dimension_numbers = #tpu.dot_dimension_numbers<[1], [0], [0], [1], [0, 0, 1, 1], [], []>} : vector<128x32xbf16>, vector<32x256xbf16>, vector<128x256xf32> -> vector<128x256xf32>
    %c0_13 = arith.constant 0 : index
    %c0_14 = arith.constant 0 : index
    %31 = vector.load %arg5[%c0_13, %c0_14] : memref<1x256xf32, #tpu.memory_space<vmem>>, vector<1x256xf32>
    %32 = vector.broadcast %31 : vector<1x256xf32> to vector<128x256xf32>
    %33 = arith.addf %30, %32 : vector<128x256xf32>
    %cst_15 = arith.constant 0.000000e+00 : f32
    %34 = vector.broadcast %cst_15 : f32 to vector<128x256xf32>
    %35 = arith.maximumf %33, %34 : vector<128x256xf32>
    %36 = arith.truncf %35 : vector<128x256xf32> to vector<128x256xbf16>
    %c0_16 = arith.constant 0 : index
    %c0_17 = arith.constant 0 : index
    %37 = vector.load %arg6[%c0_16, %c0_17] : memref<256x128xbf16, #tpu.memory_space<vmem>>, vector<256x128xbf16>
    %cst_18 = arith.constant dense<0.000000e+00> : vector<128x128xf32>
    %38 = tpu.matmul %36, %37, %cst_18 {dimension_numbers = #tpu.dot_dimension_numbers<[1], [0], [0], [1], [0, 0, 1, 1], [], []>} : vector<128x256xbf16>, vector<256x128xbf16>, vector<128x128xf32> -> vector<128x128xf32>
    %c0_19 = arith.constant 0 : index
    %c0_20 = arith.constant 0 : index
    %39 = vector.load %arg7[%c0_19, %c0_20] : memref<1x128xf32, #tpu.memory_space<vmem>>, vector<1x128xf32>
    %40 = vector.broadcast %39 : vector<1x128xf32> to vector<128x128xf32>
    %41 = arith.addf %38, %40 : vector<128x128xf32>
    %cst_21 = arith.constant 0.000000e+00 : f32
    %42 = vector.broadcast %cst_21 : f32 to vector<128x128xf32>
    %43 = arith.maximumf %41, %42 : vector<128x128xf32>
    %c0_22 = arith.constant 0 : index
    %c0_23 = arith.constant 0 : index
    %44 = vector.load %arg8[%c0_22, %c0_23] : memref<1x128xf32, #tpu.memory_space<vmem>>, vector<1x128xf32>
    %45 = vector.shape_cast %43 : vector<128x128xf32> to vector<16x8x128xf32>
    %46 = vector.shape_cast %44 : vector<1x128xf32> to vector<1x1x128xf32>
    %47 = vector.broadcast %46 : vector<1x1x128xf32> to vector<16x8x128xf32>
    %48 = arith.mulf %45, %47 : vector<16x8x128xf32>
    %cst_24 = arith.constant dense<0.000000e+00> : vector<16x8xf32>
    %49 = vector.multi_reduction <add>, %48, %cst_24 [2] : vector<16x8x128xf32> to vector<16x8xf32>
    %cst_25 = arith.constant -0.0980667918 : f32
    %50 = vector.broadcast %cst_25 : f32 to vector<16x8xf32>
    %51 = arith.addf %49, %50 : vector<16x8xf32>
    %c0_26 = arith.constant 0 : index
    %c0_27 = arith.constant 0 : index
    %52 = vector.load %arg9[%c0_26, %c0_27] : memref<16x8xf32, #tpu.memory_space<vmem>>, vector<16x8xf32>
    tpu.vector_store %arg9[%c0_26, %c0_27], %51 {strides = array<i32>} : memref<16x8xf32, #tpu.memory_space<vmem>>, vector<16x8xf32>,
    return
  }
  func.func @transform_0(%arg0: i32) -> (i32, i32, i32) {
    %c0_i32 = arith.constant 0 : i32
    %c0_i32_0 = arith.constant 0 : i32
    %c0_i32_1 = arith.constant 0 : i32
    return %arg0, %c0_i32, %c0_i32_0 : i32, i32, i32
  }
  func.func @transform_1(%arg0: i32) -> (i32, i32) {
    %c0_i32 = arith.constant 0 : i32
    %c0_i32_0 = arith.constant 0 : i32
    return %arg0, %c0_i32 : i32, i32
  }
  func.func @transform_2(%arg0: i32) -> (i32, i32) {
    %c0_i32 = arith.constant 0 : i32
    %c0_i32_0 = arith.constant 0 : i32
    return %arg0, %c0_i32 : i32, i32
  }
  func.func @transform_3(%arg0: i32) -> (i32, i32) {
    %c0_i32 = arith.constant 0 : i32
    %c0_i32_0 = arith.constant 0 : i32
    %c0_i32_1 = arith.constant 0 : i32
    return %c0_i32, %c0_i32_0 : i32, i32
  }
  func.func @transform_4(%arg0: i32) -> (i32, i32) {
    %c0_i32 = arith.constant 0 : i32
    %c0_i32_0 = arith.constant 0 : i32
    %c0_i32_1 = arith.constant 0 : i32
    return %c0_i32, %c0_i32_0 : i32, i32
  }
  func.func @transform_5(%arg0: i32) -> (i32, i32) {
    %c0_i32 = arith.constant 0 : i32
    %c0_i32_0 = arith.constant 0 : i32
    %c0_i32_1 = arith.constant 0 : i32
    return %c0_i32, %c0_i32_0 : i32, i32
  }
  func.func @transform_6(%arg0: i32) -> (i32, i32) {
    %c0_i32 = arith.constant 0 : i32
    %c0_i32_0 = arith.constant 0 : i32
    %c0_i32_1 = arith.constant 0 : i32
    return %c0_i32, %c0_i32_0 : i32, i32
  }
  func.func @transform_7(%arg0: i32) -> (i32, i32) {
    %c0_i32 = arith.constant 0 : i32
    %c0_i32_0 = arith.constant 0 : i32
    %c0_i32_1 = arith.constant 0 : i32
    return %c0_i32, %c0_i32_0 : i32, i32
  }
  func.func @transform_8(%arg0: i32) -> (i32, i32) {
    %c0_i32 = arith.constant 0 : i32
    %c0_i32_0 = arith.constant 0 : i32
    return %arg0, %c0_i32 : i32, i32
  }
}

module attributes {stable_mosaic.version = 11 : i64} {
  func.func @hopfield_scorer_kernel(%arg0: i32, %arg1: memref<16x8x32xf32, #tpu.memory_space<vmem>>, %arg2: memref<16x32xf32, #tpu.memory_space<vmem>>, %arg3: memref<16x32xf32, #tpu.memory_space<vmem>>, %arg4: memref<32x256xbf16, #tpu.memory_space<vmem>>, %arg5: memref<1x256xf32, #tpu.memory_space<vmem>>, %arg6: memref<256x128xbf16, #tpu.memory_space<vmem>>, %arg7: memref<1x128xf32, #tpu.memory_space<vmem>>, %arg8: memref<1x128xf32, #tpu.memory_space<vmem>>, %arg9: memref<16x8xf32, #tpu.memory_space<vmem>>) attributes {dimension_semantics = [#tpu.dimension_semantics<parallel>], iteration_bounds = array<i64: 1>, scalar_prefetch = 0 : i64, scratch_operands = 0 : i64, tpu.core_type = #tpu.core_type<tc>, window_params = [{transform_indices = @transform_0, window_bounds = array<i64: 16, 8, 32>}, {transform_indices = @transform_1, window_bounds = array<i64: 16, 32>}, {transform_indices = @transform_2, window_bounds = array<i64: 16, 32>}, {pipeline_mode = #tpu.pipeline_mode<synchronous>, transform_indices = @transform_3, window_bounds = array<i64: 32, 256>}, {pipeline_mode = #tpu.pipeline_mode<synchronous>, transform_indices = @transform_4, window_bounds = array<i64: 1, 256>}, {pipeline_mode = #tpu.pipeline_mode<synchronous>, transform_indices = @transform_5, window_bounds = array<i64: 256, 128>}, {pipeline_mode = #tpu.pipeline_mode<synchronous>, transform_indices = @transform_6, window_bounds = array<i64: 1, 128>}, {pipeline_mode = #tpu.pipeline_mode<synchronous>, transform_indices = @transform_7, window_bounds = array<i64: 1, 128>}, {transform_indices = @transform_8, window_bounds = array<i64: 16, 8>}]} {
    %c0 = arith.constant 0 : index
    %c0_0 = arith.constant 0 : index
    %c0_1 = arith.constant 0 : index
    %0 = vector.load %arg1[%c0, %c0_0, %c0_1] : memref<16x8x32xf32, #tpu.memory_space<vmem>>, vector<16x8x32xf32>
    %c0_2 = arith.constant 0 : index
    %c0_3 = arith.constant 0 : index
    %1 = vector.load %arg2[%c0_2, %c0_3] : memref<16x32xf32, #tpu.memory_space<vmem>>, vector<16x32xf32>
    %c0_4 = arith.constant 0 : index
    %c0_5 = arith.constant 0 : index
    %2 = vector.load %arg3[%c0_4, %c0_5] : memref<16x32xf32, #tpu.memory_space<vmem>>, vector<16x32xf32>
    %3 = vector.shape_cast %1 : vector<16x32xf32> to vector<16x1x32xf32>
    %4 = vector.broadcast %3 : vector<16x1x32xf32> to vector<16x8x32xf32>
    %5 = arith.mulf %0, %4 : vector<16x8x32xf32>
    %cst = arith.constant dense<0.000000e+00> : vector<16x8xf32>
    %6 = vector.multi_reduction <add>, %5, %cst [2] : vector<16x8x32xf32> to vector<16x8xf32>
    %cst_6 = arith.constant 4.000000e+00 : f32
    %7 = vector.broadcast %cst_6 : f32 to vector<16x8xf32>
    %8 = arith.mulf %7, %6 : vector<16x8xf32>
    %cst_7 = arith.constant 0.000000e+00 : f32
    %9 = vector.broadcast %cst_7 : f32 to vector<16x8xf32>
    %cst_8 = arith.constant dense<0xFF800000> : vector<16xf32>
    %10 = vector.multi_reduction <maximumf>, %8, %cst_8 [1] : vector<16x8xf32> to vector<16xf32>
    %11 = vector.shape_cast %10 : vector<16xf32> to vector<16x1xf32>
    %12 = vector.broadcast %11 : vector<16x1xf32> to vector<16x8xf32>
    %13 = arith.subf %8, %12 : vector<16x8xf32>
    %14 = math.exp %13 : vector<16x8xf32>
    %cst_9 = arith.constant dense<0.000000e+00> : vector<16xf32>
    %15 = vector.multi_reduction <add>, %14, %cst_9 [1] : vector<16x8xf32> to vector<16xf32>
    %16 = vector.shape_cast %15 : vector<16xf32> to vector<16x1xf32>
    %17 = tpu.reciprocal %16 {approx = true} : vector<16x1xf32> -> vector<16x1xf32>
    %18 = vector.broadcast %17 : vector<16x1xf32> to vector<16x8xf32>
    %19 = arith.mulf %14, %18 : vector<16x8xf32>
    %20 = arith.addf %9, %19 : vector<16x8xf32>
    %21 = vector.shape_cast %20 : vector<16x8xf32> to vector<16x8x1xf32>
    %22 = vector.shape_cast %2 : vector<16x32xf32> to vector<16x1x32xf32>
    %23 = vector.broadcast %21 : vector<16x8x1xf32> to vector<16x8x32xf32>
    %24 = vector.broadcast %22 : vector<16x1x32xf32> to vector<16x8x32xf32>
    %25 = arith.mulf %23, %24 : vector<16x8x32xf32>
    %26 = arith.addf %0, %25 : vector<16x8x32xf32>
    %27 = vector.shape_cast %26 : vector<16x8x32xf32> to vector<128x32xf32>
    %28 = arith.truncf %27 : vector<128x32xf32> to vector<128x32xbf16>
    %c0_10 = arith.constant 0 : index
    %c0_11 = arith.constant 0 : index
    %29 = vector.load %arg4[%c0_10, %c0_11] : memref<32x256xbf16, #tpu.memory_space<vmem>>, vector<32x256xbf16>
    %cst_12 = arith.constant dense<0.000000e+00> : vector<128x256xf32>
    %30 = tpu.matmul %28, %29, %cst_12 {dimension_numbers = #tpu.dot_dimension_numbers<[1], [0], [0], [1], [0, 0, 1, 1], [], []>} : vector<128x32xbf16>, vector<32x256xbf16>, vector<128x256xf32> -> vector<128x256xf32>
    %c0_13 = arith.constant 0 : index
    %c0_14 = arith.constant 0 : index
    %31 = vector.load %arg5[%c0_13, %c0_14] : memref<1x256xf32, #tpu.memory_space<vmem>>, vector<1x256xf32>
    %32 = vector.broadcast %31 : vector<1x256xf32> to vector<128x256xf32>
    %33 = arith.addf %30, %32 : vector<128x256xf32>
    %cst_15 = arith.constant 0.000000e+00 : f32
    %34 = vector.broadcast %cst_15 : f32 to vector<128x256xf32>
    %35 = arith.maximumf %33, %34 : vector<128x256xf32>
    %36 = arith.truncf %35 : vector<128x256xf32> to vector<128x256xbf16>
    %c0_16 = arith.constant 0 : index
    %c0_17 = arith.constant 0 : index
    %37 = vector.load %arg6[%c0_16, %c0_17] : memref<256x128xbf16, #tpu.memory_space<vmem>>, vector<256x128xbf16>
    %cst_18 = arith.constant dense<0.000000e+00> : vector<128x128xf32>
    %38 = tpu.matmul %36, %37, %cst_18 {dimension_numbers = #tpu.dot_dimension_numbers<[1], [0], [0], [1], [0, 0, 1, 1], [], []>} : vector<128x256xbf16>, vector<256x128xbf16>, vector<128x128xf32> -> vector<128x128xf32>
    %c0_19 = arith.constant 0 : index
    %c0_20 = arith.constant 0 : index
    %39 = vector.load %arg7[%c0_19, %c0_20] : memref<1x128xf32, #tpu.memory_space<vmem>>, vector<1x128xf32>
    %40 = vector.broadcast %39 : vector<1x128xf32> to vector<128x128xf32>
    %41 = arith.addf %38, %40 : vector<128x128xf32>
    %cst_21 = arith.constant 0.000000e+00 : f32
    %42 = vector.broadcast %cst_21 : f32 to vector<128x128xf32>
    %43 = arith.maximumf %41, %42 : vector<128x128xf32>
    %c0_22 = arith.constant 0 : index
    %c0_23 = arith.constant 0 : index
    %44 = vector.load %arg8[%c0_22, %c0_23] : memref<1x128xf32, #tpu.memory_space<vmem>>, vector<1x128xf32>
    %45 = vector.shape_cast %43 : vector<128x128xf32> to vector<16x8x128xf32>
    %46 = vector.shape_cast %44 : vector<1x128xf32> to vector<1x1x128xf32>
    %47 = vector.broadcast %46 : vector<1x1x128xf32> to vector<16x8x128xf32>
    %48 = arith.mulf %45, %47 : vector<16x8x128xf32>
    %cst_24 = arith.constant dense<0.000000e+00> : vector<16x8xf32>
    %49 = vector.multi_reduction <add>, %48, %cst_24 [2] : vector<16x8x128xf32> to vector<16x8xf32>
    %cst_25 = arith.constant -0.0980667918 : f32
    %50 = vector.broadcast %cst_25 : f32 to vector<16x8xf32>
    %51 = arith.addf %49, %50 : vector<16x8xf32>
    %c0_26 = arith.constant 0 : index
    %c0_27 = arith.constant 0 : index
    %52 = vector.load %arg9[%c0_26, %c0_27] : memref<16x8xf32, #tpu.memory_space<vmem>>, vector<16x8xf32>
    tpu.vector_store %arg9[%c0_26, %c0_27], %51 {strides = array<i32>} : memref<16x8xf32, #tpu.memory_space<vmem>>, vector<16x8xf32>,
    return
  }
  func.func @transform_0(%arg0: i32) -> (i32, i32, i32) {
    %c0_i32 = arith.constant 0 : i32
    %c0_i32_0 = arith.constant 0 : i32
    %c0_i32_1 = arith.constant 0 : i32
    return %arg0, %c0_i32, %c0_i32_0 : i32, i32, i32
  }
  func.func @transform_1(%arg0: i32) -> (i32, i32) {
    %c0_i32 = arith.constant 0 : i32
    %c0_i32_0 = arith.constant 0 : i32
    return %arg0, %c0_i32 : i32, i32
  }
  func.func @transform_2(%arg0: i32) -> (i32, i32) {
    %c0_i32 = arith.constant 0 : i32
    %c0_i32_0 = arith.constant 0 : i32
    return %arg0, %c0_i32 : i32, i32
  }
  func.func @transform_3(%arg0: i32) -> (i32, i32) {
    %c0_i32 = arith.constant 0 : i32
    %c0_i32_0 = arith.constant 0 : i32
    %c0_i32_1 = arith.constant 0 : i32
    return %c0_i32, %c0_i32_0 : i32, i32
  }
  func.func @transform_4(%arg0: i32) -> (i32, i32) {
    %c0_i32 = arith.constant 0 : i32
    %c0_i32_0 = arith.constant 0 : i32
    %c0_i32_1 = arith.constant 0 : i32
    return %c0_i32, %c0_i32_0 : i32, i32
  }
  func.func @transform_5(%arg0: i32) -> (i32, i32) {
    %c0_i32 = arith.constant 0 : i32
    %c0_i32_0 = arith.constant 0 : i32
    %c0_i32_1 = arith.constant 0 : i32
    return %c0_i32, %c0_i32_0 : i32, i32
  }
  func.func @transform_6(%arg0: i32) -> (i32, i32) {
    %c0_i32 = arith.constant 0 : i32
    %c0_i32_0 = arith.constant 0 : i32
    %c0_i32_1 = arith.constant 0 : i32
    return %c0_i32, %c0_i32_0 : i32, i32
  }
  func.func @transform_7(%arg0: i32) -> (i32, i32) {
    %c0_i32 = arith.constant 0 : i32
    %c0_i32_0 = arith.constant 0 : i32
    %c0_i32_1 = arith.constant 0 : i32
    return %c0_i32, %c0_i32_0 : i32, i32
  }
  func.func @transform_8(%arg0: i32) -> (i32, i32) {
    %c0_i32 = arith.constant 0 : i32
    %c0_i32_0 = arith.constant 0 : i32
    return %arg0, %c0_i32 : i32, i32
  }
}

</mosaic_0001>

<llo_original>
// kernel: tpu_custom_call.1
$region0: #{tpu_custom_call.1}
  #allocation0 [shape = 'u32[]', space=smem, size = 0x4, offset = 0x4, fixed_abs, tag = 'smem constant byte address 0x4 - core index']
  #allocation1 [shape = 'u32[144,128]{1,0:T(1,128)}', space=vmem, size = 0x12000, scoped, tag = 'internal scratch']
  %s0 = inlined_call_operand.hbm [shape: f32[16,8,32], index: 0, kind: input, shape index: {}]
  %s1 = inlined_call_operand.hbm [shape: f32[16,32], index: 1, kind: input, shape index: {}]
  %s2 = inlined_call_operand.hbm [shape: f32[16,32], index: 2, kind: input, shape index: {}]
  %s3 = inlined_call_operand.hbm [shape: bf16[32,256], index: 3, kind: input, shape index: {}]
  %s4 = inlined_call_operand.hbm [shape: f32[1,256], index: 4, kind: input, shape index: {}]
  %s5 = inlined_call_operand.hbm [shape: bf16[256,128], index: 5, kind: input, shape index: {}]
  %s6 = inlined_call_operand.hbm [shape: f32[1,128], index: 6, kind: input, shape index: {}]
  %s7 = inlined_call_operand.hbm [shape: f32[1,128], index: 7, kind: input, shape index: {}]
  %s8 = inlined_call_operand.hbm [shape: f32[16,8], index: 8, kind: output, shape index: {}]
  %s9 = sld [smem:[#allocation0]]
  $region74: #{tpu_custom_call.1} parent=0
    _
  %s11 = ssub.s32 1, %s9
  %s12 = scalar_select 0, %s11, %s9
  $region1: #{tpu_custom_call.1} parent=0
    #allocation2 [shape = 'u8[65536]{0}', space=vmem, size = 0x10000, scoped, tag = 'input window, operand 0, single buffered']
    #allocation3 [shape = 's32[1]{0}', space=sflag, size = 0x4, scoped, tag = 'scoped memory for tpu_custom_call.1']
    #allocation4 [shape = 's32[1]{0}', space=sflag, size = 0x4, scoped, tag = 'scoped memory for tpu_custom_call.1']
    #allocation5 [shape = 'u8[8192]{0}', space=vmem, size = 0x2000, scoped, tag = 'input window, operand 1, single buffered']
    #allocation6 [shape = 's32[1]{0}', space=sflag, size = 0x4, scoped, tag = 'scoped memory for tpu_custom_call.1']
    #allocation7 [shape = 'u8[8192]{0}', space=vmem, size = 0x2000, scoped, tag = 'input window, operand 2, single buffered']
    #allocation8 [shape = 'u8[16384]{0}', space=vmem, size = 0x4000, scoped, tag = 'input window, operand 3, single buffered']
    #allocation9 [shape = 's32[1]{0}', space=sflag, size = 0x4, scoped, tag = 'scoped memory for tpu_custom_call.1']
    #allocation10 [shape = 'u8[1024]{0}', space=vmem, size = 0x400, scoped, tag = 'input window, operand 4, single buffered']
    #allocation11 [shape = 'u8[65536]{0}', space=vmem, size = 0x10000, scoped, tag = 'input window, operand 5, single buffered']
    #allocation12 [shape = 's32[1]{0}', space=sflag, size = 0x4, scoped, tag = 'scoped memory for tpu_custom_call.1']
    #allocation13 [shape = 'u8[512]{0}', space=vmem, size = 0x400, scoped, tag = 'input window, operand 6, single buffered']
    #allocation14 [shape = 'u8[512]{0}', space=vmem, size = 0x400, scoped, tag = 'input window, operand 7, single buffered']
    #allocation15 [shape = 's32[1]{0}', space=sflag, size = 0x4, scoped, tag = 'scoped memory for tpu_custom_call.1']
    #allocation16 [shape = 'u8[8192]{0}', space=vmem, size = 0x2000, scoped, tag = 'output window, operand 0, single buffered']
    %13 = vsyncpa [#allocation3], 0
    %14 = vsyncpa [#allocation6], 0
    %15 = vsyncpa [#allocation9], 0
    %16 = vsyncpa [#allocation12], 0
    %17 = vsyncpa [#allocation15], 0
    %18 = vsyncpa [#allocation4], 0
    // Predicated region
    $region2: #{tpu_custom_call.1} parent=1 // pred_check
      _
    $region3: #{tpu_custom_call.1} parent=1 // pred_check_branch
      %20 = sbr.rel (0) target = $region5
    $region4: #{tpu_custom_call.1} parent=1 // pred_region
      %s22 = ssub.s32 2048, 2048
      %23 = vsyncadd [#allocation3], %s22
      %s24 = sshll.u32 [#allocation2], 4
      %s25 = int_to_ptr.vmem [resolvable:$true] %s24
      %30 = dma.hbm_to_vmem [thread:$0]  %s0, 2048, %s25, [#allocation3], 128, 128, 8
    $region5: #{tpu_custom_call.1} parent=1 // pred_fallthru
      _
    // Predicated region
    $region6: #{tpu_custom_call.1} parent=1 // pred_check
      _
    $region7: #{tpu_custom_call.1} parent=1 // pred_check_branch
      %32 = sbr.rel (0) target = $region9
    $region8: #{tpu_custom_call.1} parent=1 // pred_region
      %s34 = ssub.s32 256, 256
      %35 = vsyncadd [#allocation6], %s34
      %s36 = sshll.u32 [#allocation5], 4
      %s37 = int_to_ptr.vmem [resolvable:$true] %s36
      %42 = dma.hbm_to_vmem [thread:$0]  %s1, 256, %s37, [#allocation6], 128, 128, 8
    $region9: #{tpu_custom_call.1} parent=1 // pred_fallthru
      _
    // Predicated region
    $region10: #{tpu_custom_call.1} parent=1 // pred_check
      _
    $region11: #{tpu_custom_call.1} parent=1 // pred_check_branch
      %44 = sbr.rel (0) target = $region13
    $region12: #{tpu_custom_call.1} parent=1 // pred_region
      %s46 = ssub.s32 256, 256
      %47 = vsyncadd [#allocation6], %s46
      %s48 = sshll.u32 [#allocation7], 4
      %s49 = int_to_ptr.vmem [resolvable:$true] %s48
      %54 = dma.hbm_to_vmem [thread:$0]  %s2, 256, %s49, [#allocation6], 128, 128, 8
    $region13: #{tpu_custom_call.1} parent=1 // pred_fallthru
      _
    // Predicated region
    $region14: #{tpu_custom_call.1} parent=1 // pred_check
      _
    $region15: #{tpu_custom_call.1} parent=1 // pred_check_branch
      %56 = sbr.rel (0) target = $region17
    $region16: #{tpu_custom_call.1} parent=1 // pred_region
      %s58 = ssub.s32 512, 512
      %59 = vsyncadd [#allocation9], %s58
      %s60 = sshll.u32 [#allocation8], 4
      %s61 = int_to_ptr.vmem [resolvable:$true] %s60
      %66 = dma.hbm_to_vmem [thread:$0]  %s3, 512, %s61, [#allocation9], 128, 128, 8
    $region17: #{tpu_custom_call.1} parent=1 // pred_fallthru
      _
    // Predicated region
    $region18: #{tpu_custom_call.1} parent=1 // pred_check
      _
    $region19: #{tpu_custom_call.1} parent=1 // pred_check_branch
      %68 = sbr.rel (0) target = $region21
    $region20: #{tpu_custom_call.1} parent=1 // pred_region
      %s70 = ssub.s32 32, 32
      %71 = vsyncadd [#allocation9], %s70
      %s73 = sshll.u32 [#allocation10], 4
      %s74 = int_to_ptr.vmem [resolvable:$true] %s73
      %76 = dma.hbm_to_vmem [thread:$0]  %s4, 32, %s74, [#allocation9]
    $region21: #{tpu_custom_call.1} parent=1 // pred_fallthru
      _
    // Predicated region
    $region22: #{tpu_custom_call.1} parent=1 // pred_check
      _
    $region23: #{tpu_custom_call.1} parent=1 // pred_check_branch
      %78 = sbr.rel (0) target = $region25
    $region24: #{tpu_custom_call.1} parent=1 // pred_region
      %s80 = ssub.s32 2048, 2048
      %81 = vsyncadd [#allocation12], %s80
      %s82 = sshll.u32 [#allocation11], 4
      %s83 = int_to_ptr.vmem [resolvable:$true] %s82
      %88 = dma.hbm_to_vmem [thread:$0]  %s5, 2048, %s83, [#allocation12], 64, 64, 4
    $region25: #{tpu_custom_call.1} parent=1 // pred_fallthru
      _
    // Predicated region
    $region26: #{tpu_custom_call.1} parent=1 // pred_check
      _
    $region27: #{tpu_custom_call.1} parent=1 // pred_check_branch
      %90 = sbr.rel (0) target = $region29
    $region28: #{tpu_custom_call.1} parent=1 // pred_region
      %s92 = ssub.s32 16, 16
      %93 = vsyncadd [#allocation12], %s92
      %s95 = sshll.u32 [#allocation13], 4
      %s96 = int_to_ptr.vmem [resolvable:$true] %s95
      %98 = dma.hbm_to_vmem [thread:$0]  %s6, 16, %s96, [#allocation12]
    $region29: #{tpu_custom_call.1} parent=1 // pred_fallthru
      _
    // Predicated region
    $region30: #{tpu_custom_call.1} parent=1 // pred_check
      _
    $region31: #{tpu_custom_call.1} parent=1 // pred_check_branch
      %100 = sbr.rel (0) target = $region33
    $region32: #{tpu_custom_call.1} parent=1 // pred_region
      %s102 = ssub.s32 16, 16
      %103 = vsyncadd [#allocation15], %s102
      %s105 = sshll.u32 [#allocation14], 4
      %s106 = int_to_ptr.vmem [resolvable:$true] %s105
      %108 = dma.hbm_to_vmem [thread:$0]  %s7, 16, %s106, [#allocation15]
    $region33: #{tpu_custom_call.1} parent=1 // pred_fallthru
      _
    // Predicated region
    $region34: #{tpu_custom_call.1} parent=1 // pred_check
      _
    $region35: #{tpu_custom_call.1} parent=1 // pred_check_branch
      %110 = sbr.rel (0) target = $region37
    $region36: #{tpu_custom_call.1} parent=1 // pred_region
      %111 = dma.done [#allocation3], 2048
    $region37: #{tpu_custom_call.1} parent=1 // pred_fallthru
      _
    // Predicated region
    $region38: #{tpu_custom_call.1} parent=1 // pred_check
      _
    $region39: #{tpu_custom_call.1} parent=1 // pred_check_branch
      %113 = sbr.rel (0) target = $region41
    $region40: #{tpu_custom_call.1} parent=1 // pred_region
      %114 = dma.done [#allocation6], 256
    $region41: #{tpu_custom_call.1} parent=1 // pred_fallthru
      _
    // Predicated region
    $region42: #{tpu_custom_call.1} parent=1 // pred_check
      _
    $region43: #{tpu_custom_call.1} parent=1 // pred_check_branch
      %116 = sbr.rel (0) target = $region45
    $region44: #{tpu_custom_call.1} parent=1 // pred_region
      %117 = dma.done [#allocation6], 256
    $region45: #{tpu_custom_call.1} parent=1 // pred_fallthru
      _
    // Predicated region
    $region46: #{tpu_custom_call.1} parent=1 // pred_check
      _
    $region47: #{tpu_custom_call.1} parent=1 // pred_check_branch
      %119 = sbr.rel (0) target = $region49
    $region48: #{tpu_custom_call.1} parent=1 // pred_region
      %120 = dma.done [#allocation9], 512
    $region49: #{tpu_custom_call.1} parent=1 // pred_fallthru
      _
    // Predicated region
    $region50: #{tpu_custom_call.1} parent=1 // pred_check
      _
    $region51: #{tpu_custom_call.1} parent=1 // pred_check_branch
      %122 = sbr.rel (0) target = $region53
    $region52: #{tpu_custom_call.1} parent=1 // pred_region
      %123 = dma.done [#allocation9], 32
    $region53: #{tpu_custom_call.1} parent=1 // pred_fallthru
      _
    // Predicated region
    $region54: #{tpu_custom_call.1} parent=1 // pred_check
      _
    $region55: #{tpu_custom_call.1} parent=1 // pred_check_branch
      %125 = sbr.rel (0) target = $region57
    $region56: #{tpu_custom_call.1} parent=1 // pred_region
      %126 = dma.done [#allocation12], 2048
    $region57: #{tpu_custom_call.1} parent=1 // pred_fallthru
      _
    // Predicated region
    $region58: #{tpu_custom_call.1} parent=1 // pred_check
      _
    $region59: #{tpu_custom_call.1} parent=1 // pred_check_branch
      %128 = sbr.rel (0) target = $region61
    $region60: #{tpu_custom_call.1} parent=1 // pred_region
      %129 = dma.done [#allocation12], 16
    $region61: #{tpu_custom_call.1} parent=1 // pred_fallthru
      _
    // Predicated region
    $region62: #{tpu_custom_call.1} parent=1 // pred_check
      _
    $region63: #{tpu_custom_call.1} parent=1 // pred_check_branch
      %131 = sbr.rel (0) target = $region65
    $region64: #{tpu_custom_call.1} parent=1 // pred_region
      %132 = dma.done [#allocation15], 16
    $region65: #{tpu_custom_call.1} parent=1 // pred_fallthru
      _
    %v134 = vld [vmem:[#allocation2] sm:$0xff]
    %v135 = vld [vmem:[#allocation2 + $0x8] sm:$0xff]
    %v136 = vld [vmem:[#allocation2 + $0x10] sm:$0xff]
    %v137 = vld [vmem:[#allocation2 + $0x18] sm:$0xff]
    %v138 = vld [vmem:[#allocation2 + $0x20] sm:$0xff]
    %v139 = vld [vmem:[#allocation2 + $0x28] sm:$0xff]
    %v140 = vld [vmem:[#allocation2 + $0x30] sm:$0xff]
    %v141 = vld [vmem:[#allocation2 + $0x38] sm:$0xff]
    %v142 = vld [vmem:[#allocation2 + $0x40] sm:$0xff]
    %v143 = vld [vmem:[#allocation2 + $0x48] sm:$0xff]
    %v144 = vld [vmem:[#allocation2 + $0x50] sm:$0xff]
    %v145 = vld [vmem:[#allocation2 + $0x58] sm:$0xff]
    %v146 = vld [vmem:[#allocation2 + $0x60] sm:$0xff]
    %v147 = vld [vmem:[#allocation2 + $0x68] sm:$0xff]
    %v148 = vld [vmem:[#allocation2 + $0x70] sm:$0xff]
    %v149 = vld [vmem:[#allocation2 + $0x78] sm:$0xff]
    %v150 = vld [vmem:[#allocation5] sm:$0xff]
    %v151 = vld [vmem:[#allocation5 + $0x8] sm:$0xff]
    %v152 = vld [vmem:[#allocation7] sm:$0xff]
    %v153 = vld [vmem:[#allocation7 + $0x8] sm:$0xff]
    %v156 = vcombine.high %v150, %v150
    %v158 = vunpack.c.l.s4 1966171168
    %v159 = vunpack.c.0.s8 %v158
    %v160 = vlaneseq
    %v161 = vshrl.u32 %v160, 7
    %v162 = vsub.s32 %v159, %v161
    %v163 = vrot.slane %v150, %v162
    %v165 = vunpack.c.l.s4 1966171168
    %v166 = vunpack.c.0.s8 %v165
    %v167 = vlaneseq
    %v168 = vshrl.u32 %v167, 7
    %v169 = vsub.s32 %v166, %v168
    %v170 = vrot.slane %v156, %v169
    %v171 = vcombine.high %v163, %v163
    %v172 = vcombine.high %v170, %v170
    %v174 = vunpack.c.l.s4 1966171168
    %v175 = vunpack.c.0.s8 %v174
    %v176 = vlaneseq
    %v177 = vshrl.u32 %v176, 7
    %v178 = vsub.s32 %v175, %v177
    %v179 = vrot.slane %v163, %v178
    %v181 = vunpack.c.l.s4 1966171168
    %v182 = vunpack.c.0.s8 %v181
    %v183 = vlaneseq
    %v184 = vshrl.u32 %v183, 7
    %v185 = vsub.s32 %v182, %v184
    %v186 = vrot.slane %v170, %v185
    %v188 = vunpack.c.l.s4 1966171168
    %v189 = vunpack.c.0.s8 %v188
    %v190 = vlaneseq
    %v191 = vshrl.u32 %v190, 7
    %v192 = vsub.s32 %v189, %v191
    %v193 = vrot.slane %v171, %v192
    %v195 = vunpack.c.l.s4 1966171168
    %v196 = vunpack.c.0.s8 %v195
    %v197 = vlaneseq
    %v198 = vshrl.u32 %v197, 7
    %v199 = vsub.s32 %v196, %v198
    %v200 = vrot.slane %v172, %v199
    %v201 = vcombine.high %v179, %v179
    %v202 = vcombine.high %v186, %v186
    %v203 = vcombine.high %v193, %v193
    %v204 = vcombine.high %v200, %v200
    %v205 = vcombine.high %v151, %v151
    %v207 = vunpack.c.l.s4 1966171168
    %v208 = vunpack.c.0.s8 %v207
    %v209 = vlaneseq
    %v210 = vshrl.u32 %v209, 7
    %v211 = vsub.s32 %v208, %v210
    %v212 = vrot.slane %v151, %v211
    %v214 = vunpack.c.l.s4 1966171168
    %v215 = vunpack.c.0.s8 %v214
    %v216 = vlaneseq
    %v217 = vshrl.u32 %v216, 7
    %v218 = vsub.s32 %v215, %v217
    %v219 = vrot.slane %v205, %v218
    %v220 = vcombine.high %v212, %v212
    %v221 = vcombine.high %v219, %v219
    %v223 = vunpack.c.l.s4 1966171168
    %v224 = vunpack.c.0.s8 %v223
    %v225 = vlaneseq
    %v226 = vshrl.u32 %v225, 7
    %v227 = vsub.s32 %v224, %v226
    %v228 = vrot.slane %v212, %v227
    %v230 = vunpack.c.l.s4 1966171168
    %v231 = vunpack.c.0.s8 %v230
    %v232 = vlaneseq
    %v233 = vshrl.u32 %v232, 7
    %v234 = vsub.s32 %v231, %v233
    %v235 = vrot.slane %v219, %v234
    %v237 = vunpack.c.l.s4 1966171168
    %v238 = vunpack.c.0.s8 %v237
    %v239 = vlaneseq
    %v240 = vshrl.u32 %v239, 7
    %v241 = vsub.s32 %v238, %v240
    %v242 = vrot.slane %v220, %v241
    %v244 = vunpack.c.l.s4 1966171168
    %v245 = vunpack.c.0.s8 %v244
    %v246 = vlaneseq
    %v247 = vshrl.u32 %v246, 7
    %v248 = vsub.s32 %v245, %v247
    %v249 = vrot.slane %v221, %v248
    %v250 = vcombine.high %v228, %v228
    %v251 = vcombine.high %v235, %v235
    %v252 = vcombine.high %v242, %v242
    %v253 = vcombine.high %v249, %v249
    %v254 = vlaneseq
    %v255 = vshrl.u32 %v254, 7
    %v256 = vsub.s32 0, %v255
    %v257 = vrot.slane %v179, %v256
    %v258 = vlaneseq
    %v259 = vshrl.u32 %v258, 7
    %v260 = vsub.s32 0, %v259
    %v261 = vrot.slane %v193, %v260
    %v262 = vlaneseq
    %v263 = vshrl.u32 %v262, 7
    %v264 = vsub.s32 0, %v263
    %v265 = vrot.slane %v201, %v264
    %v266 = vlaneseq
    %v267 = vshrl.u32 %v266, 7
    %v268 = vsub.s32 0, %v267
    %v269 = vrot.slane %v203, %v268
    %v270 = vlaneseq
    %v271 = vshrl.u32 %v270, 7
    %v272 = vsub.s32 0, %v271
    %v273 = vrot.slane %v186, %v272
    %v274 = vlaneseq
    %v275 = vshrl.u32 %v274, 7
    %v276 = vsub.s32 0, %v275
    %v277 = vrot.slane %v200, %v276
    %v278 = vlaneseq
    %v279 = vshrl.u32 %v278, 7
    %v280 = vsub.s32 0, %v279
    %v281 = vrot.slane %v202, %v280
    %v282 = vlaneseq
    %v283 = vshrl.u32 %v282, 7
    %v284 = vsub.s32 0, %v283
    %v285 = vrot.slane %v204, %v284
    %v286 = vlaneseq
    %v287 = vshrl.u32 %v286, 7
    %v288 = vsub.s32 0, %v287
    %v289 = vrot.slane %v228, %v288
    %v290 = vlaneseq
    %v291 = vshrl.u32 %v290, 7
    %v292 = vsub.s32 0, %v291
    %v293 = vrot.slane %v242, %v292
    %v294 = vlaneseq
    %v295 = vshrl.u32 %v294, 7
    %v296 = vsub.s32 0, %v295
    %v297 = vrot.slane %v250, %v296
    %v298 = vlaneseq
    %v299 = vshrl.u32 %v298, 7
    %v300 = vsub.s32 0, %v299
    %v301 = vrot.slane %v252, %v300
    %v302 = vlaneseq
    %v303 = vshrl.u32 %v302, 7
    %v304 = vsub.s32 0, %v303
    %v305 = vrot.slane %v235, %v304
    %v306 = vlaneseq
    %v307 = vshrl.u32 %v306, 7
    %v308 = vsub.s32 0, %v307
    %v309 = vrot.slane %v249, %v308
    %v310 = vlaneseq
    %v311 = vshrl.u32 %v310, 7
    %v312 = vsub.s32 0, %v311
    %v313 = vrot.slane %v251, %v312
    %v314 = vlaneseq
    %v315 = vshrl.u32 %v314, 7
    %v316 = vsub.s32 0, %v315
    %v317 = vrot.slane %v253, %v316
    %v334 = vmul.f32 %v134, %v257
    %v335 = vmul.f32 %v135, %v261
    %v336 = vmul.f32 %v136, %v265
    %v337 = vmul.f32 %v137, %v269
    %v338 = vmul.f32 %v138, %v273
    %v339 = vmul.f32 %v139, %v277
    %v340 = vmul.f32 %v140, %v281
    %v341 = vmul.f32 %v141, %v285
    %v342 = vmul.f32 %v142, %v289
    %v343 = vmul.f32 %v143, %v293
    %v344 = vmul.f32 %v144, %v297
    %v345 = vmul.f32 %v145, %v301
    %v346 = vmul.f32 %v146, %v305
    %v347 = vmul.f32 %v147, %v309
    %v348 = vmul.f32 %v148, %v313
    %v349 = vmul.f32 %v149, %v317
    %vm350 = vcmask 261120
    %v351 = vsel %vm350, %v334, 0.0
    %352 = vadd.xlane.f32.xlu0 %v351
    %v353 = vpop.xlane.xlu0 %352
    %v354 = vsel %vm350, %v335, 0.0
    %355 = vadd.xlane.f32.xlu0 %v354
    %v356 = vpop.xlane.xlu0 %355
    %v357 = vsel %vm350, %v336, 0.0
    %358 = vadd.xlane.f32.xlu0 %v357
    %v359 = vpop.xlane.xlu0 %358
    %v360 = vsel %vm350, %v337, 0.0
    %361 = vadd.xlane.f32.xlu0 %v360
    %v362 = vpop.xlane.xlu0 %361
    %v363 = vsel %vm350, %v338, 0.0
    %364 = vadd.xlane.f32.xlu0 %v363
    %v365 = vpop.xlane.xlu0 %364
    %v366 = vsel %vm350, %v339, 0.0
    %367 = vadd.xlane.f32.xlu0 %v366
    %v368 = vpop.xlane.xlu0 %367
    %v369 = vsel %vm350, %v340, 0.0
    %370 = vadd.xlane.f32.xlu0 %v369
    %v371 = vpop.xlane.xlu0 %370
    %v372 = vsel %vm350, %v341, 0.0
    %373 = vadd.xlane.f32.xlu0 %v372
    %v374 = vpop.xlane.xlu0 %373
    %v375 = vsel %vm350, %v342, 0.0
    %376 = vadd.xlane.f32.xlu0 %v375
    %v377 = vpop.xlane.xlu0 %376
    %v378 = vsel %vm350, %v343, 0.0
    %379 = vadd.xlane.f32.xlu0 %v378
    %v380 = vpop.xlane.xlu0 %379
    %v381 = vsel %vm350, %v344, 0.0
    %382 = vadd.xlane.f32.xlu0 %v381
    %v383 = vpop.xlane.xlu0 %382
    %v384 = vsel %vm350, %v345, 0.0
    %385 = vadd.xlane.f32.xlu0 %v384
    %v386 = vpop.xlane.xlu0 %385
    %v387 = vsel %vm350, %v346, 0.0
    %388 = vadd.xlane.f32.xlu0 %v387
    %v389 = vpop.xlane.xlu0 %388
    %v390 = vsel %vm350, %v347, 0.0
    %391 = vadd.xlane.f32.xlu0 %v390
    %v392 = vpop.xlane.xlu0 %391
    %v393 = vsel %vm350, %v348, 0.0
    %394 = vadd.xlane.f32.xlu0 %v393
    %v395 = vpop.xlane.xlu0 %394
    %v396 = vsel %vm350, %v349, 0.0
    %397 = vadd.xlane.f32.xlu0 %v396
    %v398 = vpop.xlane.xlu0 %397
    %v399 = vmul.f32 %v353, 4.0
    %v400 = vmul.f32 %v356, 4.0
    %v401 = vmul.f32 %v359, 4.0
    %v402 = vmul.f32 %v362, 4.0
    %v403 = vmul.f32 %v365, 4.0
    %v404 = vmul.f32 %v368, 4.0
    %v405 = vmul.f32 %v371, 4.0
    %v406 = vmul.f32 %v374, 4.0
    %v407 = vmul.f32 %v377, 4.0
    %v408 = vmul.f32 %v380, 4.0
    %v409 = vmul.f32 %v383, 4.0
    %v410 = vmul.f32 %v386, 4.0
    %v411 = vmul.f32 %v389, 4.0
    %v412 = vmul.f32 %v392, 4.0
    %v413 = vmul.f32 %v395, 4.0
    %v414 = vmul.f32 %v398, 4.0
    %v431 = vlaneseq
    %v432 = vand.u32 %v431, 127
    %v433 = vlaneseq
    %v434 = vshrl.u32 %v433, 7
    %v435 = vsub.s32 %v432, %v434
    %v436 = vrot.slane %v399, %v435
    %v437 = vlaneseq
    %v438 = vshrl.u32 %v437, 7
    %v439 = vsub.s32 %v432, %v438
    %v440 = vrot.slane %v400, %v439
    %v441 = vlaneseq
    %v442 = vshrl.u32 %v441, 7
    %v443 = vsub.s32 %v432, %v442
    %v444 = vrot.slane %v401, %v443
    %v445 = vlaneseq
    %v446 = vshrl.u32 %v445, 7
    %v447 = vsub.s32 %v432, %v446
    %v448 = vrot.slane %v402, %v447
    %v449 = vlaneseq
    %v450 = vshrl.u32 %v449, 7
    %v451 = vsub.s32 %v432, %v450
    %v452 = vrot.slane %v403, %v451
    %v453 = vlaneseq
    %v454 = vshrl.u32 %v453, 7
    %v455 = vsub.s32 %v432, %v454
    %v456 = vrot.slane %v404, %v455
    %v457 = vlaneseq
    %v458 = vshrl.u32 %v457, 7
    %v459 = vsub.s32 %v432, %v458
    %v460 = vrot.slane %v405, %v459
    %v461 = vlaneseq
    %v462 = vshrl.u32 %v461, 7
    %v463 = vsub.s32 %v432, %v462
    %v464 = vrot.slane %v406, %v463
    %v465 = vlaneseq
    %v466 = vshrl.u32 %v465, 7
    %v467 = vsub.s32 %v432, %v466
    %v468 = vrot.slane %v407, %v467
    %v469 = vlaneseq
    %v470 = vshrl.u32 %v469, 7
    %v471 = vsub.s32 %v432, %v470
    %v472 = vrot.slane %v408, %v471
    %v473 = vlaneseq
    %v474 = vshrl.u32 %v473, 7
    %v475 = vsub.s32 %v432, %v474
    %v476 = vrot.slane %v409, %v475
    %v477 = vlaneseq
    %v478 = vshrl.u32 %v477, 7
    %v479 = vsub.s32 %v432, %v478
    %v480 = vrot.slane %v410, %v479
    %v481 = vlaneseq
    %v482 = vshrl.u32 %v481, 7
    %v483 = vsub.s32 %v432, %v482
    %v484 = vrot.slane %v411, %v483
    %v485 = vlaneseq
    %v486 = vshrl.u32 %v485, 7
    %v487 = vsub.s32 %v432, %v486
    %v488 = vrot.slane %v412, %v487
    %v489 = vlaneseq
    %v490 = vshrl.u32 %v489, 7
    %v491 = vsub.s32 %v432, %v490
    %v492 = vrot.slane %v413, %v491
    %v493 = vlaneseq
    %v494 = vshrl.u32 %v493, 7
    %v495 = vsub.s32 %v432, %v494
    %v496 = vrot.slane %v414, %v495
    %vm497 = vcmask 1041409
    %v498 = vsel %vm497, %v440, %v436
    %vm499 = vcmask 1042434
    %v500 = vsel %vm499, %v444, %v498
    %vm501 = vcmask 1043459
    %v502 = vsel %vm501, %v448, %v500
    %vm503 = vcmask 1044484
    %v504 = vsel %vm503, %v452, %v502
    %vm505 = vcmask 1045509
    %v506 = vsel %vm505, %v456, %v504
    %vm507 = vcmask 1046534
    %v508 = vsel %vm507, %v460, %v506
    %vm509 = vcmask 1047559
    %v510 = vsel %vm509, %v464, %v508
    %v511 = vsel %vm497, %v472, %v468
    %v512 = vsel %vm499, %v476, %v511
    %v513 = vsel %vm501, %v480, %v512
    %v514 = vsel %vm503, %v484, %v513
    %v515 = vsel %vm505, %v488, %v514
    %v516 = vsel %vm507, %v492, %v515
    %v517 = vsel %vm509, %v496, %v516
    %vm520 = vcmask 64512
    %v521 = vsel %vm520, %v510, -inf
    %522 = vmax.xlane.f32.xlu0 %v521
    %v523 = vpop.xlane.xlu0 %522
    %v524 = vsel %vm520, %v517, -inf
    %525 = vmax.xlane.f32.xlu0 %v524
    %v526 = vpop.xlane.xlu0 %525
    %v529 = vlaneseq
    %v530 = vshrl.u32 %v529, 7
    %v531 = vsub.s32 0, %v530
    %v532 = vrot.slane %v523, %v531
    %v533 = vlaneseq
    %v534 = vshrl.u32 %v533, 7
    %v535 = vsub.s32 1, %v534
    %v536 = vrot.slane %v523, %v535
    %v537 = vlaneseq
    %v538 = vshrl.u32 %v537, 7
    %v539 = vsub.s32 2, %v538
    %v540 = vrot.slane %v523, %v539
    %v541 = vlaneseq
    %v542 = vshrl.u32 %v541, 7
    %v543 = vsub.s32 3, %v542
    %v544 = vrot.slane %v523, %v543
    %v545 = vlaneseq
    %v546 = vshrl.u32 %v545, 7
    %v547 = vsub.s32 4, %v546
    %v548 = vrot.slane %v523, %v547
    %v549 = vlaneseq
    %v550 = vshrl.u32 %v549, 7
    %v551 = vsub.s32 5, %v550
    %v552 = vrot.slane %v523, %v551
    %v553 = vlaneseq
    %v554 = vshrl.u32 %v553, 7
    %v555 = vsub.s32 6, %v554
    %v556 = vrot.slane %v523, %v555
    %v557 = vlaneseq
    %v558 = vshrl.u32 %v557, 7
    %v559 = vsub.s32 7, %v558
    %v560 = vrot.slane %v523, %v559
    %v561 = vlaneseq
    %v562 = vshrl.u32 %v561, 7
    %v563 = vsub.s32 0, %v562
    %v564 = vrot.slane %v526, %v563
    %v565 = vlaneseq
    %v566 = vshrl.u32 %v565, 7
    %v567 = vsub.s32 1, %v566
    %v568 = vrot.slane %v526, %v567
    %v569 = vlaneseq
    %v570 = vshrl.u32 %v569, 7
    %v571 = vsub.s32 2, %v570
    %v572 = vrot.slane %v526, %v571
    %v573 = vlaneseq
    %v574 = vshrl.u32 %v573, 7
    %v575 = vsub.s32 3, %v574
    %v576 = vrot.slane %v526, %v575
    %v577 = vlaneseq
    %v578 = vshrl.u32 %v577, 7
    %v579 = vsub.s32 4, %v578
    %v580 = vrot.slane %v526, %v579
    %v581 = vlaneseq
    %v582 = vshrl.u32 %v581, 7
    %v583 = vsub.s32 5, %v582
    %v584 = vrot.slane %v526, %v583
    %v585 = vlaneseq
    %v586 = vshrl.u32 %v585, 7
    %v587 = vsub.s32 6, %v586
    %v588 = vrot.slane %v526, %v587
    %v589 = vlaneseq
    %v590 = vshrl.u32 %v589, 7
    %v591 = vsub.s32 7, %v590
    %v592 = vrot.slane %v526, %v591
    %v609 = vsub.f32 %v399, %v532
    %v610 = vsub.f32 %v400, %v536
    %v611 = vsub.f32 %v401, %v540
    %v612 = vsub.f32 %v402, %v544
    %v613 = vsub.f32 %v403, %v548
    %v614 = vsub.f32 %v404, %v552
    %v615 = vsub.f32 %v405, %v556
    %v616 = vsub.f32 %v406, %v560
    %v617 = vsub.f32 %v407, %v564
    %v618 = vsub.f32 %v408, %v568
    %v619 = vsub.f32 %v409, %v572
    %v620 = vsub.f32 %v410, %v576
    %v621 = vsub.f32 %v411, %v580
    %v622 = vsub.f32 %v412, %v584
    %v623 = vsub.f32 %v413, %v588
    %v624 = vsub.f32 %v414, %v592
    %v625 = vmul.f32 %v609, 1.442695
    %v626 = vpow.pop %v625
    %v627 = vmul.f32 %v610, 1.442695
    %v628 = vpow.pop %v627
    %v629 = vmul.f32 %v611, 1.442695
    %v630 = vpow.pop %v629
    %v631 = vmul.f32 %v612, 1.442695
    %v632 = vpow.pop %v631
    %v633 = vmul.f32 %v613, 1.442695
    %v634 = vpow.pop %v633
    %v635 = vmul.f32 %v614, 1.442695
    %v636 = vpow.pop %v635
    %v637 = vmul.f32 %v615, 1.442695
    %v638 = vpow.pop %v637
    %v639 = vmul.f32 %v616, 1.442695
    %v640 = vpow.pop %v639
    %v641 = vmul.f32 %v617, 1.442695
    %v642 = vpow.pop %v641
    %v643 = vmul.f32 %v618, 1.442695
    %v644 = vpow.pop %v643
    %v645 = vmul.f32 %v619, 1.442695
    %v646 = vpow.pop %v645
    %v647 = vmul.f32 %v620, 1.442695
    %v648 = vpow.pop %v647
    %v649 = vmul.f32 %v621, 1.442695
    %v650 = vpow.pop %v649
    %v651 = vmul.f32 %v622, 1.442695
    %v652 = vpow.pop %v651
    %v653 = vmul.f32 %v623, 1.442695
    %v654 = vpow.pop %v653
    %v655 = vmul.f32 %v624, 1.442695
    %v656 = vpow.pop %v655
    %673 = vset.pattern.permute.xlu0 0
    %674 = vperm.xlu0 %673, %v626
    %v675 = vpop.permute.xlu0 %674
    %676 = vset.pattern.permute.xlu0 0
    %677 = vperm.xlu0 %676, %v628
    %v678 = vpop.permute.xlu0 %677
    %679 = vset.pattern.permute.xlu0 0
    %680 = vperm.xlu0 %679, %v630
    %v681 = vpop.permute.xlu0 %680
    %682 = vset.pattern.permute.xlu0 0
    %683 = vperm.xlu0 %682, %v632
    %v684 = vpop.permute.xlu0 %683
    %685 = vset.pattern.permute.xlu0 0
    %686 = vperm.xlu0 %685, %v634
    %v687 = vpop.permute.xlu0 %686
    %688 = vset.pattern.permute.xlu0 0
    %689 = vperm.xlu0 %688, %v636
    %v690 = vpop.permute.xlu0 %689
    %691 = vset.pattern.permute.xlu0 0
    %692 = vperm.xlu0 %691, %v638
    %v693 = vpop.permute.xlu0 %692
    %694 = vset.pattern.permute.xlu0 0
    %695 = vperm.xlu0 %694, %v640
    %v696 = vpop.permute.xlu0 %695
    %697 = vset.pattern.permute.xlu0 0
    %698 = vperm.xlu0 %697, %v642
    %v699 = vpop.permute.xlu0 %698
    %700 = vset.pattern.permute.xlu0 0
    %701 = vperm.xlu0 %700, %v644
    %v702 = vpop.permute.xlu0 %701
    %703 = vset.pattern.permute.xlu0 0
    %704 = vperm.xlu0 %703, %v646
    %v705 = vpop.permute.xlu0 %704
    %706 = vset.pattern.permute.xlu0 0
    %707 = vperm.xlu0 %706, %v648
    %v708 = vpop.permute.xlu0 %707
    %709 = vset.pattern.permute.xlu0 0
    %710 = vperm.xlu0 %709, %v650
    %v711 = vpop.permute.xlu0 %710
    %712 = vset.pattern.permute.xlu0 0
    %713 = vperm.xlu0 %712, %v652
    %v714 = vpop.permute.xlu0 %713
    %715 = vset.pattern.permute.xlu0 0
    %716 = vperm.xlu0 %715, %v654
    %v717 = vpop.permute.xlu0 %716
    %718 = vset.pattern.permute.xlu0 0
    %719 = vperm.xlu0 %718, %v656
    %v720 = vpop.permute.xlu0 %719
    %v721 = vlaneseq
    %v722 = vshrl.u32 %v721, 7
    %v723 = vsub.s32 %v432, %v722
    %v724 = vrot.slane %v675, %v723
    %v725 = vlaneseq
    %v726 = vshrl.u32 %v725, 7
    %v727 = vsub.s32 %v432, %v726
    %v728 = vrot.slane %v678, %v727
    %v729 = vlaneseq
    %v730 = vshrl.u32 %v729, 7
    %v731 = vsub.s32 %v432, %v730
    %v732 = vrot.slane %v681, %v731
    %v733 = vlaneseq
    %v734 = vshrl.u32 %v733, 7
    %v735 = vsub.s32 %v432, %v734
    %v736 = vrot.slane %v684, %v735
    %v737 = vlaneseq
    %v738 = vshrl.u32 %v737, 7
    %v739 = vsub.s32 %v432, %v738
    %v740 = vrot.slane %v687, %v739
    %v741 = vlaneseq
    %v742 = vshrl.u32 %v741, 7
    %v743 = vsub.s32 %v432, %v742
    %v744 = vrot.slane %v690, %v743
    %v745 = vlaneseq
    %v746 = vshrl.u32 %v745, 7
    %v747 = vsub.s32 %v432, %v746
    %v748 = vrot.slane %v693, %v747
    %v749 = vlaneseq
    %v750 = vshrl.u32 %v749, 7
    %v751 = vsub.s32 %v432, %v750
    %v752 = vrot.slane %v696, %v751
    %v753 = vlaneseq
    %v754 = vshrl.u32 %v753, 7
    %v755 = vsub.s32 %v432, %v754
    %v756 = vrot.slane %v699, %v755
    %v757 = vlaneseq
    %v758 = vshrl.u32 %v757, 7
    %v759 = vsub.s32 %v432, %v758
    %v760 = vrot.slane %v702, %v759
    %v761 = vlaneseq
    %v762 = vshrl.u32 %v761, 7
    %v763 = vsub.s32 %v432, %v762
    %v764 = vrot.slane %v705, %v763
    %v765 = vlaneseq
    %v766 = vshrl.u32 %v765, 7
    %v767 = vsub.s32 %v432, %v766
    %v768 = vrot.slane %v708, %v767
    %v769 = vlaneseq
    %v770 = vshrl.u32 %v769, 7
    %v771 = vsub.s32 %v432, %v770
    %v772 = vrot.slane %v711, %v771
    %v773 = vlaneseq
    %v774 = vshrl.u32 %v773, 7
    %v775 = vsub.s32 %v432, %v774
    %v776 = vrot.slane %v714, %v775
    %v777 = vlaneseq
    %v778 = vshrl.u32 %v777, 7
    %v779 = vsub.s32 %v432, %v778
    %v780 = vrot.slane %v717, %v779
    %v781 = vlaneseq
    %v782 = vshrl.u32 %v781, 7
    %v783 = vsub.s32 %v432, %v782
    %v784 = vrot.slane %v720, %v783
    %v785 = vsel %vm497, %v728, %v724
    %v786 = vsel %vm499, %v732, %v785
    %v787 = vsel %vm501, %v736, %v786
    %v788 = vsel %vm503, %v740, %v787
    %v789 = vsel %vm505, %v744, %v788
    %v790 = vsel %vm507, %v748, %v789
    %v791 = vsel %vm509, %v752, %v790
    %v792 = vsel %vm497, %v760, %v756
    %v793 = vsel %vm499, %v764, %v792
    %v794 = vsel %vm501, %v768, %v793
    %v795 = vsel %vm503, %v772, %v794
    %v796 = vsel %vm505, %v776, %v795
    %v797 = vsel %vm507, %v780, %v796
    %v798 = vsel %vm509, %v784, %v797
    %v801 = vsel %vm520, %v791, 0.0
    %802 = vadd.xlane.f32.xlu0 %v801
    %v803 = vpop.xlane.xlu0 %802
    %v804 = vsel %vm520, %v798, 0.0
    %805 = vadd.xlane.f32.xlu0 %v804
    %v806 = vpop.xlane.xlu0 %805
    %v807 = vrcp.pop %v803
    %v808 = vrcp.pop %v806
    %v811 = vlaneseq
    %v812 = vshrl.u32 %v811, 7
    %v813 = vsub.s32 0, %v812
    %v814 = vrot.slane %v807, %v813
    %v815 = vlaneseq
    %v816 = vshrl.u32 %v815, 7
    %v817 = vsub.s32 1, %v816
    %v818 = vrot.slane %v807, %v817
    %v819 = vlaneseq
    %v820 = vshrl.u32 %v819, 7
    %v821 = vsub.s32 2, %v820
    %v822 = vrot.slane %v807, %v821
    %v823 = vlaneseq
    %v824 = vshrl.u32 %v823, 7
    %v825 = vsub.s32 3, %v824
    %v826 = vrot.slane %v807, %v825
    %v827 = vlaneseq
    %v828 = vshrl.u32 %v827, 7
    %v829 = vsub.s32 4, %v828
    %v830 = vrot.slane %v807, %v829
    %v831 = vlaneseq
    %v832 = vshrl.u32 %v831, 7
    %v833 = vsub.s32 5, %v832
    %v834 = vrot.slane %v807, %v833
    %v835 = vlaneseq
    %v836 = vshrl.u32 %v835, 7
    %v837 = vsub.s32 6, %v836
    %v838 = vrot.slane %v807, %v837
    %v839 = vlaneseq
    %v840 = vshrl.u32 %v839, 7
    %v841 = vsub.s32 7, %v840
    %v842 = vrot.slane %v807, %v841
    %v843 = vlaneseq
    %v844 = vshrl.u32 %v843, 7
    %v845 = vsub.s32 0, %v844
    %v846 = vrot.slane %v808, %v845
    %v847 = vlaneseq
    %v848 = vshrl.u32 %v847, 7
    %v849 = vsub.s32 1, %v848
    %v850 = vrot.slane %v808, %v849
    %v851 = vlaneseq
    %v852 = vshrl.u32 %v851, 7
    %v853 = vsub.s32 2, %v852
    %v854 = vrot.slane %v808, %v853
    %v855 = vlaneseq
    %v856 = vshrl.u32 %v855, 7
    %v857 = vsub.s32 3, %v856
    %v858 = vrot.slane %v808, %v857
    %v859 = vlaneseq
    %v860 = vshrl.u32 %v859, 7
    %v861 = vsub.s32 4, %v860
    %v862 = vrot.slane %v808, %v861
    %v863 = vlaneseq
    %v864 = vshrl.u32 %v863, 7
    %v865 = vsub.s32 5, %v864
    %v866 = vrot.slane %v808, %v865
    %v867 = vlaneseq
    %v868 = vshrl.u32 %v867, 7
    %v869 = vsub.s32 6, %v868
    %v870 = vrot.slane %v808, %v869
    %v871 = vlaneseq
    %v872 = vshrl.u32 %v871, 7
    %v873 = vsub.s32 7, %v872
    %v874 = vrot.slane %v808, %v873
    %v891 = vmul.f32 %v626, %v814
    %v892 = vmul.f32 %v628, %v818
    %v893 = vmul.f32 %v630, %v822
    %v894 = vmul.f32 %v632, %v826
    %v895 = vmul.f32 %v634, %v830
    %v896 = vmul.f32 %v636, %v834
    %v897 = vmul.f32 %v638, %v838
    %v898 = vmul.f32 %v640, %v842
    %v899 = vmul.f32 %v642, %v846
    %v900 = vmul.f32 %v644, %v850
    %v901 = vmul.f32 %v646, %v854
    %v902 = vmul.f32 %v648, %v858
    %v903 = vmul.f32 %v650, %v862
    %v904 = vmul.f32 %v652, %v866
    %v905 = vmul.f32 %v654, %v870
    %v906 = vmul.f32 %v656, %v874
    %v907 = vadd.f32 %v891, 0.0
    %v908 = vadd.f32 %v892, 0.0
    %v909 = vadd.f32 %v893, 0.0
    %v910 = vadd.f32 %v894, 0.0
    %v911 = vadd.f32 %v895, 0.0
    %v912 = vadd.f32 %v896, 0.0
    %v913 = vadd.f32 %v897, 0.0
    %v914 = vadd.f32 %v898, 0.0
    %v915 = vadd.f32 %v899, 0.0
    %v916 = vadd.f32 %v900, 0.0
    %v917 = vadd.f32 %v901, 0.0
    %v918 = vadd.f32 %v902, 0.0
    %v919 = vadd.f32 %v903, 0.0
    %v920 = vadd.f32 %v904, 0.0
    %v921 = vadd.f32 %v905, 0.0
    %v922 = vadd.f32 %v906, 0.0
    %v925 = vcombine.high %v152, %v152
    %v927 = vunpack.c.l.s4 1966171168
    %v928 = vunpack.c.0.s8 %v927
    %v929 = vlaneseq
    %v930 = vshrl.u32 %v929, 7
    %v931 = vsub.s32 %v928, %v930
    %v932 = vrot.slane %v152, %v931
    %v934 = vunpack.c.l.s4 1966171168
    %v935 = vunpack.c.0.s8 %v934
    %v936 = vlaneseq
    %v937 = vshrl.u32 %v936, 7
    %v938 = vsub.s32 %v935, %v937
    %v939 = vrot.slane %v925, %v938
    %v940 = vcombine.high %v932, %v932
    %v941 = vcombine.high %v939, %v939
    %v943 = vunpack.c.l.s4 1966171168
    %v944 = vunpack.c.0.s8 %v943
    %v945 = vlaneseq
    %v946 = vshrl.u32 %v945, 7
    %v947 = vsub.s32 %v944, %v946
    %v948 = vrot.slane %v932, %v947
    %v950 = vunpack.c.l.s4 1966171168
    %v951 = vunpack.c.0.s8 %v950
    %v952 = vlaneseq
    %v953 = vshrl.u32 %v952, 7
    %v954 = vsub.s32 %v951, %v953
    %v955 = vrot.slane %v939, %v954
    %v957 = vunpack.c.l.s4 1966171168
    %v958 = vunpack.c.0.s8 %v957
    %v959 = vlaneseq
    %v960 = vshrl.u32 %v959, 7
    %v961 = vsub.s32 %v958, %v960
    %v962 = vrot.slane %v940, %v961
    %v964 = vunpack.c.l.s4 1966171168
    %v965 = vunpack.c.0.s8 %v964
    %v966 = vlaneseq
    %v967 = vshrl.u32 %v966, 7
    %v968 = vsub.s32 %v965, %v967
    %v969 = vrot.slane %v941, %v968
    %v970 = vcombine.high %v948, %v948
    %v971 = vcombine.high %v955, %v955
    %v972 = vcombine.high %v962, %v962
    %v973 = vcombine.high %v969, %v969
    %v974 = vcombine.high %v153, %v153
    %v976 = vunpack.c.l.s4 1966171168
    %v977 = vunpack.c.0.s8 %v976
    %v978 = vlaneseq
    %v979 = vshrl.u32 %v978, 7
    %v980 = vsub.s32 %v977, %v979
    %v981 = vrot.slane %v153, %v980
    %v983 = vunpack.c.l.s4 1966171168
    %v984 = vunpack.c.0.s8 %v983
    %v985 = vlaneseq
    %v986 = vshrl.u32 %v985, 7
    %v987 = vsub.s32 %v984, %v986
    %v988 = vrot.slane %v974, %v987
    %v989 = vcombine.high %v981, %v981
    %v990 = vcombine.high %v988, %v988
    %v992 = vunpack.c.l.s4 1966171168
    %v993 = vunpack.c.0.s8 %v992
    %v994 = vlaneseq
    %v995 = vshrl.u32 %v994, 7
    %v996 = vsub.s32 %v993, %v995
    %v997 = vrot.slane %v981, %v996
    %v999 = vunpack.c.l.s4 1966171168
    %v1000 = vunpack.c.0.s8 %v999
    %v1001 = vlaneseq
    %v1002 = vshrl.u32 %v1001, 7
    %v1003 = vsub.s32 %v1000, %v1002
    %v1004 = vrot.slane %v988, %v1003
    %v1006 = vunpack.c.l.s4 1966171168
    %v1007 = vunpack.c.0.s8 %v1006
    %v1008 = vlaneseq
    %v1009 = vshrl.u32 %v1008, 7
    %v1010 = vsub.s32 %v1007, %v1009
    %v1011 = vrot.slane %v989, %v1010
    %v1013 = vunpack.c.l.s4 1966171168
    %v1014 = vunpack.c.0.s8 %v1013
    %v1015 = vlaneseq
    %v1016 = vshrl.u32 %v1015, 7
    %v1017 = vsub.s32 %v1014, %v1016
    %v1018 = vrot.slane %v990, %v1017
    %v1019 = vcombine.high %v997, %v997
    %v1020 = vcombine.high %v1004, %v1004
    %v1021 = vcombine.high %v1011, %v1011
    %v1022 = vcombine.high %v1018, %v1018
    %1024 = vset.pattern.permute.xlu0 0
    %1025 = vperm.xlu0 %1024, %v907
    %v1026 = vpop.permute.xlu0 %1025
    %1029 = vset.pattern.permute.xlu0 0
    %1030 = vperm.xlu0 %1029, %v908
    %v1031 = vpop.permute.xlu0 %1030
    %1034 = vset.pattern.permute.xlu0 0
    %1035 = vperm.xlu0 %1034, %v909
    %v1036 = vpop.permute.xlu0 %1035
    %1039 = vset.pattern.permute.xlu0 0
    %1040 = vperm.xlu0 %1039, %v910
    %v1041 = vpop.permute.xlu0 %1040
    %1044 = vset.pattern.permute.xlu0 0
    %1045 = vperm.xlu0 %1044, %v911
    %v1046 = vpop.permute.xlu0 %1045
    %1049 = vset.pattern.permute.xlu0 0
    %1050 = vperm.xlu0 %1049, %v912
    %v1051 = vpop.permute.xlu0 %1050
    %1054 = vset.pattern.permute.xlu0 0
    %1055 = vperm.xlu0 %1054, %v913
    %v1056 = vpop.permute.xlu0 %1055
    %1059 = vset.pattern.permute.xlu0 0
    %1060 = vperm.xlu0 %1059, %v914
    %v1061 = vpop.permute.xlu0 %1060
    %1064 = vset.pattern.permute.xlu0 0
    %1065 = vperm.xlu0 %1064, %v915
    %v1066 = vpop.permute.xlu0 %1065
    %1069 = vset.pattern.permute.xlu0 0
    %1070 = vperm.xlu0 %1069, %v916
    %v1071 = vpop.permute.xlu0 %1070
    %1074 = vset.pattern.permute.xlu0 0
    %1075 = vperm.xlu0 %1074, %v917
    %v1076 = vpop.permute.xlu0 %1075
    %1079 = vset.pattern.permute.xlu0 0
    %1080 = vperm.xlu0 %1079, %v918
    %v1081 = vpop.permute.xlu0 %1080
    %1084 = vset.pattern.permute.xlu0 0
    %1085 = vperm.xlu0 %1084, %v919
    %v1086 = vpop.permute.xlu0 %1085
    %1089 = vset.pattern.permute.xlu0 0
    %1090 = vperm.xlu0 %1089, %v920
    %v1091 = vpop.permute.xlu0 %1090
    %1094 = vset.pattern.permute.xlu0 0
    %1095 = vperm.xlu0 %1094, %v921
    %v1096 = vpop.permute.xlu0 %1095
    %1099 = vset.pattern.permute.xlu0 0
    %1100 = vperm.xlu0 %1099, %v922
    %v1101 = vpop.permute.xlu0 %1100
    %v1103 = vlaneseq
    %v1104 = vshrl.u32 %v1103, 7
    %v1105 = vsub.s32 0, %v1104
    %v1106 = vrot.slane %v948, %v1105
    %v1107 = vlaneseq
    %v1108 = vshrl.u32 %v1107, 7
    %v1109 = vsub.s32 0, %v1108
    %v1110 = vrot.slane %v962, %v1109
    %v1111 = vlaneseq
    %v1112 = vshrl.u32 %v1111, 7
    %v1113 = vsub.s32 0, %v1112
    %v1114 = vrot.slane %v970, %v1113
    %v1115 = vlaneseq
    %v1116 = vshrl.u32 %v1115, 7
    %v1117 = vsub.s32 0, %v1116
    %v1118 = vrot.slane %v972, %v1117
    %v1119 = vlaneseq
    %v1120 = vshrl.u32 %v1119, 7
    %v1121 = vsub.s32 0, %v1120
    %v1122 = vrot.slane %v955, %v1121
    %v1123 = vlaneseq
    %v1124 = vshrl.u32 %v1123, 7
    %v1125 = vsub.s32 0, %v1124
    %v1126 = vrot.slane %v969, %v1125
    %v1127 = vlaneseq
    %v1128 = vshrl.u32 %v1127, 7
    %v1129 = vsub.s32 0, %v1128
    %v1130 = vrot.slane %v971, %v1129
    %v1131 = vlaneseq
    %v1132 = vshrl.u32 %v1131, 7
    %v1133 = vsub.s32 0, %v1132
    %v1134 = vrot.slane %v973, %v1133
    %v1135 = vlaneseq
    %v1136 = vshrl.u32 %v1135, 7
    %v1137 = vsub.s32 0, %v1136
    %v1138 = vrot.slane %v997, %v1137
    %v1139 = vlaneseq
    %v1140 = vshrl.u32 %v1139, 7
    %v1141 = vsub.s32 0, %v1140
    %v1142 = vrot.slane %v1011, %v1141
    %v1143 = vlaneseq
    %v1144 = vshrl.u32 %v1143, 7
    %v1145 = vsub.s32 0, %v1144
    %v1146 = vrot.slane %v1019, %v1145
    %v1147 = vlaneseq
    %v1148 = vshrl.u32 %v1147, 7
    %v1149 = vsub.s32 0, %v1148
    %v1150 = vrot.slane %v1021, %v1149
    %v1151 = vlaneseq
    %v1152 = vshrl.u32 %v1151, 7
    %v1153 = vsub.s32 0, %v1152
    %v1154 = vrot.slane %v1004, %v1153
    %v1155 = vlaneseq
    %v1156 = vshrl.u32 %v1155, 7
    %v1157 = vsub.s32 0, %v1156
    %v1158 = vrot.slane %v1018, %v1157
    %v1159 = vlaneseq
    %v1160 = vshrl.u32 %v1159, 7
    %v1161 = vsub.s32 0, %v1160
    %v1162 = vrot.slane %v1020, %v1161
    %v1163 = vlaneseq
    %v1164 = vshrl.u32 %v1163, 7
    %v1165 = vsub.s32 0, %v1164
    %v1166 = vrot.slane %v1022, %v1165
    %v1183 = vmul.f32 %v1026, %v1106
    %v1184 = vmul.f32 %v1031, %v1110
    %v1185 = vmul.f32 %v1036, %v1114
    %v1186 = vmul.f32 %v1041, %v1118
    %v1187 = vmul.f32 %v1046, %v1122
    %v1188 = vmul.f32 %v1051, %v1126
    %v1189 = vmul.f32 %v1056, %v1130
    %v1190 = vmul.f32 %v1061, %v1134
    %v1191 = vmul.f32 %v1066, %v1138
    %v1192 = vmul.f32 %v1071, %v1142
    %v1193 = vmul.f32 %v1076, %v1146
    %v1194 = vmul.f32 %v1081, %v1150
    %v1195 = vmul.f32 %v1086, %v1154
    %v1196 = vmul.f32 %v1091, %v1158
    %v1197 = vmul.f32 %v1096, %v1162
    %v1198 = vmul.f32 %v1101, %v1166
    %v1199 = vadd.f32 %v134, %v1183
    %v1200 = vadd.f32 %v135, %v1184
    %v1201 = vadd.f32 %v136, %v1185
    %v1202 = vadd.f32 %v137, %v1186
    %v1203 = vadd.f32 %v138, %v1187
    %v1204 = vadd.f32 %v139, %v1188
    %v1205 = vadd.f32 %v140, %v1189
    %v1206 = vadd.f32 %v141, %v1190
    %v1207 = vadd.f32 %v142, %v1191
    %v1208 = vadd.f32 %v143, %v1192
    %v1209 = vadd.f32 %v144, %v1193
    %v1210 = vadd.f32 %v145, %v1194
    %v1211 = vadd.f32 %v146, %v1195
    %v1212 = vadd.f32 %v147, %v1196
    %v1213 = vadd.f32 %v148, %v1197
    %v1214 = vadd.f32 %v149, %v1198
    %v1215 = vpack.c.bf16 %v1200, %v1199
    %v1216 = vpack.c.bf16 %v1202, %v1201
    %v1217 = vpack.c.bf16 %v1204, %v1203
    %v1218 = vpack.c.bf16 %v1206, %v1205
    %v1219 = vpack.c.bf16 %v1208, %v1207
    %v1220 = vpack.c.bf16 %v1210, %v1209
    %v1221 = vpack.c.bf16 %v1212, %v1211
    %v1222 = vpack.c.bf16 %v1214, %v1213
    %v1223 = vld [vmem:[#allocation8] sm:$0xff]
    %v1224 = vld [vmem:[#allocation8 + $0x8] sm:$0xff]
    %v1225 = vld [vmem:[#allocation8 + $0x10] sm:$0xff]
    %v1226 = vld [vmem:[#allocation8 + $0x18] sm:$0xff]
    %v1227 = vld [vmem:[#allocation10] sm:$0x3]
    %v1229 = vlaneseq
    %v1230 = vshrl.u32 %v1229, 7
    %v1231 = vsub.s32 0, %v1230
    %v1232 = vrot.slane %v1227, %v1231
    %v1233 = vlaneseq
    %v1234 = vshrl.u32 %v1233, 7
    %v1235 = vsub.s32 1, %v1234
    %v1236 = vrot.slane %v1227, %v1235
    %v1243 = vunpack.c.l.b16 %v1223
    %v1244 = vunpack.c.h.b16 %v1223
    %v1245 = vunpack.c.l.b16 %v1224
    %v1246 = vunpack.c.h.b16 %v1224
    %v1247 = vunpack.c.l.b16 %v1225
    %v1248 = vunpack.c.h.b16 %v1225
    %v1249 = vunpack.c.l.b16 %v1226
    %v1250 = vunpack.c.h.b16 %v1226
    %v1251 = vpack.c.b16 %v1245, %v1243
    %v1252 = vpack.c.b16 %v1246, %v1244
    %v1253 = vpack.c.b16 %v1249, %v1247
    %v1254 = vpack.c.b16 %v1250, %v1248
    %v1260 = vsel %vm350, %v1215, 0
    %v1263 = vsel %vm350, %v1216, 0
    %v1266 = vsel %vm350, %v1217, 0
    %v1269 = vsel %vm350, %v1218, 0
    %v1272 = vsel %vm350, %v1219, 0
    %v1275 = vsel %vm350, %v1220, 0
    %v1278 = vsel %vm350, %v1221, 0
    %v1281 = vsel %vm350, %v1222, 0
    %1283 = vmatprep.subr.bf16.mxu0 %v1252
    %1284 = vmatpush1.bf16.msra.mxu0 %v1251
    %1285 = vmatprep.subr.bf16.mxu0 %v1254
    %1286 = vmatpush1.bf16.msra.mxu0 %v1253
    %1287 = vmatprep.subr.bf16.mxu0 0
    %1288 = vmatpush1.bf16.msra.mxu0 0
    %1289 = vmatprep.subr.bf16.mxu0 0
    %1290 = vmatpush1.bf16.msra.mxu0 0
    %1291 = vmatprep.subr.bf16.mxu0 0
    %1292 = vmatpush1.bf16.msra.mxu0 0
    %1293 = vmatprep.subr.bf16.mxu0 0
    %1294 = vmatpush1.bf16.msra.mxu0 0
    %1295 = vmatprep.subr.bf16.mxu0 0
    %1296 = vmatpush1.bf16.msra.mxu0 0
    %1297 = vmatprep.subr.bf16.mxu0 0
    %1298 = vmatpush1.bf16.msra.mxu0 0
    %1299 = vmatprep.subr.bf16.mxu0 0
    %1300 = vmatpush1.bf16.msra.mxu0 0
    %1301 = vmatprep.subr.bf16.mxu0 0
    %1302 = vmatpush1.bf16.msra.mxu0 0
    %1303 = vmatprep.subr.bf16.mxu0 0
    %1304 = vmatpush1.bf16.msra.mxu0 0
    %1305 = vmatprep.subr.bf16.mxu0 0
    %1306 = vmatpush1.bf16.msra.mxu0 0
    %1307 = vmatprep.subr.bf16.mxu0 0
    %1308 = vmatpush1.bf16.msra.mxu0 0
    %1309 = vmatprep.subr.bf16.mxu0 0
    %1310 = vmatpush1.bf16.msra.mxu0 0
    %1311 = vmatprep.subr.bf16.mxu0 0
    %1312 = vmatpush1.bf16.msra.mxu0 0
    %1313 = vmatprep.subr.bf16.mxu0 0
    %1314 = vmatpush1.bf16.msra.mxu0 0
    %1315 = vmatprep.mubr.bf16.mxu0 0
    %1316 = vmatmul.mubr.bf16.gmra.mrb[0].mxu0 %v1260
    %v1317 = vpop.f32.mrb[0].mxu0
    %v1318 = vadd.f32 %v1232, %v1317
    %v1319 = vpop.f32.mrb[0].mxu0
    %v1320 = vadd.f32 %v1236, %v1319
    %v1321 = vpop.f32.mrb[0].mxu0
    %v1322 = vadd.f32 %v1232, %v1321
    %v1323 = vpop.f32.mrb[0].mxu0
    %v1324 = vadd.f32 %v1236, %v1323
    %1325 = vmatprep.mubr.bf16.mxu0 0
    %1326 = vmatmul.mubr.bf16.gmra.mrb[0].mxu0 %v1263
    %v1327 = vpop.f32.mrb[0].mxu0
    %v1328 = vadd.f32 %v1232, %v1327
    %v1329 = vpop.f32.mrb[0].mxu0
    %v1330 = vadd.f32 %v1236, %v1329
    %v1331 = vpop.f32.mrb[0].mxu0
    %v1332 = vadd.f32 %v1232, %v1331
    %v1333 = vpop.f32.mrb[0].mxu0
    %v1334 = vadd.f32 %v1236, %v1333
    %1335 = vmatprep.mubr.bf16.mxu0 0
    %1336 = vmatmul.mubr.bf16.gmra.mrb[0].mxu0 %v1266
    %v1337 = vpop.f32.mrb[0].mxu0
    %v1338 = vadd.f32 %v1232, %v1337
    %v1339 = vpop.f32.mrb[0].mxu0
    %v1340 = vadd.f32 %v1236, %v1339
    %v1341 = vpop.f32.mrb[0].mxu0
    %v1342 = vadd.f32 %v1232, %v1341
    %v1343 = vpop.f32.mrb[0].mxu0
    %v1344 = vadd.f32 %v1236, %v1343
    %1345 = vmatprep.mubr.bf16.mxu0 0
    %1346 = vmatmul.mubr.bf16.gmra.mrb[0].mxu0 %v1269
    %v1347 = vpop.f32.mrb[0].mxu0
    %v1348 = vadd.f32 %v1232, %v1347
    %v1349 = vpop.f32.mrb[0].mxu0
    %v1350 = vadd.f32 %v1236, %v1349
    %v1351 = vpop.f32.mrb[0].mxu0
    %v1352 = vadd.f32 %v1232, %v1351
    %v1353 = vpop.f32.mrb[0].mxu0
    %v1354 = vadd.f32 %v1236, %v1353
    %1355 = vmatprep.mubr.bf16.mxu0 0
    %1356 = vmatmul.mubr.bf16.gmra.mrb[0].mxu0 %v1272
    %v1357 = vpop.f32.mrb[0].mxu0
    %v1358 = vadd.f32 %v1232, %v1357
    %v1359 = vpop.f32.mrb[0].mxu0
    %v1360 = vadd.f32 %v1236, %v1359
    %v1361 = vpop.f32.mrb[0].mxu0
    %v1362 = vadd.f32 %v1232, %v1361
    %v1363 = vpop.f32.mrb[0].mxu0
    %v1364 = vadd.f32 %v1236, %v1363
    %1365 = vmatprep.mubr.bf16.mxu0 0
    %1366 = vmatmul.mubr.bf16.gmra.mrb[0].mxu0 %v1275
    %v1367 = vpop.f32.mrb[0].mxu0
    %v1368 = vadd.f32 %v1232, %v1367
    %v1369 = vpop.f32.mrb[0].mxu0
    %v1370 = vadd.f32 %v1236, %v1369
    %v1371 = vpop.f32.mrb[0].mxu0
    %v1372 = vadd.f32 %v1232, %v1371
    %v1373 = vpop.f32.mrb[0].mxu0
    %v1374 = vadd.f32 %v1236, %v1373
    %1375 = vmatprep.mubr.bf16.mxu0 0
    %1376 = vmatmul.mubr.bf16.gmra.mrb[0].mxu0 %v1278
    %v1377 = vpop.f32.mrb[0].mxu0
    %v1378 = vadd.f32 %v1232, %v1377
    %v1379 = vpop.f32.mrb[0].mxu0
    %v1380 = vadd.f32 %v1236, %v1379
    %v1381 = vpop.f32.mrb[0].mxu0
    %v1382 = vadd.f32 %v1232, %v1381
    %v1383 = vpop.f32.mrb[0].mxu0
    %v1384 = vadd.f32 %v1236, %v1383
    %1385 = vmatprep.mubr.bf16.mxu0 0
    %1386 = vmatmul.mubr.bf16.gmra.mrb[0].mxu0 %v1281
    %v1387 = vpop.f32.mrb[0].mxu0
    %v1388 = vadd.f32 %v1232, %v1387
    %v1389 = vpop.f32.mrb[0].mxu0
    %v1390 = vadd.f32 %v1236, %v1389
    %v1391 = vpop.f32.mrb[0].mxu0
    %v1392 = vadd.f32 %v1232, %v1391
    %v1393 = vpop.f32.mrb[0].mxu0
    %v1394 = vadd.f32 %v1236, %v1393
    %1395 = vdwg.mxu0
    %v1396 = vmax.f32 %v1318, 0.0
    %v1397 = vmax.f32 %v1320, 0.0
    %v1398 = vmax.f32 %v1322, 0.0
    %v1399 = vmax.f32 %v1324, 0.0
    %v1400 = vmax.f32 %v1328, 0.0
    %v1401 = vmax.f32 %v1330, 0.0
    %v1402 = vmax.f32 %v1332, 0.0
    %v1403 = vmax.f32 %v1334, 0.0
    %v1404 = vmax.f32 %v1338, 0.0
    %v1405 = vmax.f32 %v1340, 0.0
    %v1406 = vmax.f32 %v1342, 0.0
    %v1407 = vmax.f32 %v1344, 0.0
    %v1408 = vmax.f32 %v1348, 0.0
    %v1409 = vmax.f32 %v1350, 0.0
    %v1410 = vmax.f32 %v1352, 0.0
    %v1411 = vmax.f32 %v1354, 0.0
    %v1412 = vmax.f32 %v1358, 0.0
    %v1413 = vmax.f32 %v1360, 0.0
    %v1414 = vmax.f32 %v1362, 0.0
    %v1415 = vmax.f32 %v1364, 0.0
    %v1416 = vmax.f32 %v1368, 0.0
    %v1417 = vmax.f32 %v1370, 0.0
    %v1418 = vmax.f32 %v1372, 0.0
    %v1419 = vmax.f32 %v1374, 0.0
    %v1420 = vmax.f32 %v1378, 0.0
    %v1421 = vmax.f32 %v1380, 0.0
    %v1422 = vmax.f32 %v1382, 0.0
    %v1423 = vmax.f32 %v1384, 0.0
    %v1424 = vmax.f32 %v1388, 0.0
    %v1425 = vmax.f32 %v1390, 0.0
    %v1426 = vmax.f32 %v1392, 0.0
    %v1427 = vmax.f32 %v1394, 0.0
    %v1428 = vpack.c.bf16 %v1398, %v1396
    %v1429 = vpack.c.bf16 %v1399, %v1397
    %v1430 = vpack.c.bf16 %v1402, %v1400
    %v1431 = vpack.c.bf16 %v1403, %v1401
    %v1432 = vpack.c.bf16 %v1406, %v1404
    %v1433 = vpack.c.bf16 %v1407, %v1405
    %v1434 = vpack.c.bf16 %v1410, %v1408
    %v1435 = vpack.c.bf16 %v1411, %v1409
    %v1436 = vpack.c.bf16 %v1414, %v1412
    %v1437 = vpack.c.bf16 %v1415, %v1413
    %v1438 = vpack.c.bf16 %v1418, %v1416
    %v1439 = vpack.c.bf16 %v1419, %v1417
    %v1440 = vpack.c.bf16 %v1422, %v1420
    %v1441 = vpack.c.bf16 %v1423, %v1421
    %v1442 = vpack.c.bf16 %v1426, %v1424
    %v1443 = vpack.c.bf16 %v1427, %v1425
    %v1444 = vld [vmem:[#allocation11] sm:$0xf]
    %v1445 = vld [vmem:[#allocation11 + $0x4] sm:$0xf]
    %v1446 = vld [vmem:[#allocation11 + $0x8] sm:$0xf]
    %v1447 = vld [vmem:[#allocation11 + $0xc] sm:$0xf]
    %v1448 = vld [vmem:[#allocation11 + $0x10] sm:$0xf]
    %v1449 = vld [vmem:[#allocation11 + $0x14] sm:$0xf]
    %v1450 = vld [vmem:[#allocation11 + $0x18] sm:$0xf]
    %v1451 = vld [vmem:[#allocation11 + $0x1c] sm:$0xf]
    %v1452 = vld [vmem:[#allocation11 + $0x20] sm:$0xf]
    %v1453 = vld [vmem:[#allocation11 + $0x24] sm:$0xf]
    %v1454 = vld [vmem:[#allocation11 + $0x28] sm:$0xf]
    %v1455 = vld [vmem:[#allocation11 + $0x2c] sm:$0xf]
    %v1456 = vld [vmem:[#allocation11 + $0x30] sm:$0xf]
    %v1457 = vld [vmem:[#allocation11 + $0x34] sm:$0xf]
    %v1458 = vld [vmem:[#allocation11 + $0x38] sm:$0xf]
    %v1459 = vld [vmem:[#allocation11 + $0x3c] sm:$0xf]
    %v1460 = vld [vmem:[#allocation11 + $0x40] sm:$0xf]
    %v1461 = vld [vmem:[#allocation11 + $0x44] sm:$0xf]
    %v1462 = vld [vmem:[#allocation11 + $0x48] sm:$0xf]
    %v1463 = vld [vmem:[#allocation11 + $0x4c] sm:$0xf]
    %v1464 = vld [vmem:[#allocation11 + $0x50] sm:$0xf]
    %v1465 = vld [vmem:[#allocation11 + $0x54] sm:$0xf]
    %v1466 = vld [vmem:[#allocation11 + $0x58] sm:$0xf]
    %v1467 = vld [vmem:[#allocation11 + $0x5c] sm:$0xf]
    %v1468 = vld [vmem:[#allocation11 + $0x60] sm:$0xf]
    %v1469 = vld [vmem:[#allocation11 + $0x64] sm:$0xf]
    %v1470 = vld [vmem:[#allocation11 + $0x68] sm:$0xf]
    %v1471 = vld [vmem:[#allocation11 + $0x6c] sm:$0xf]
    %v1472 = vld [vmem:[#allocation11 + $0x70] sm:$0xf]
    %v1473 = vld [vmem:[#allocation11 + $0x74] sm:$0xf]
    %v1474 = vld [vmem:[#allocation11 + $0x78] sm:$0xf]
    %v1475 = vld [vmem:[#allocation11 + $0x7c] sm:$0xf]
    %v1476 = vld [vmem:[#allocation13] sm:$0x1]
    %v1478 = vlaneseq
    %v1479 = vshrl.u32 %v1478, 7
    %v1480 = vsub.s32 0, %v1479
    %v1481 = vrot.slane %v1476, %v1480
    %v1515 = vunpack.c.l.b16 %v1444
    %v1516 = vunpack.c.l.b16 %v1445
    %v1517 = vunpack.c.l.b16 %v1446
    %v1518 = vunpack.c.l.b16 %v1447
    %v1519 = vunpack.c.l.b16 %v1448
    %v1520 = vunpack.c.l.b16 %v1449
    %v1521 = vunpack.c.l.b16 %v1450
    %v1522 = vunpack.c.l.b16 %v1451
    %v1523 = vunpack.c.l.b16 %v1452
    %v1524 = vunpack.c.l.b16 %v1453
    %v1525 = vunpack.c.l.b16 %v1454
    %v1526 = vunpack.c.l.b16 %v1455
    %v1527 = vunpack.c.l.b16 %v1456
    %v1528 = vunpack.c.l.b16 %v1457
    %v1529 = vunpack.c.l.b16 %v1458
    %v1530 = vunpack.c.l.b16 %v1459
    %v1531 = vunpack.c.l.b16 %v1460
    %v1532 = vunpack.c.l.b16 %v1461
    %v1533 = vunpack.c.l.b16 %v1462
    %v1534 = vunpack.c.l.b16 %v1463
    %v1535 = vunpack.c.l.b16 %v1464
    %v1536 = vunpack.c.l.b16 %v1465
    %v1537 = vunpack.c.l.b16 %v1466
    %v1538 = vunpack.c.l.b16 %v1467
    %v1539 = vunpack.c.l.b16 %v1468
    %v1540 = vunpack.c.l.b16 %v1469
    %v1541 = vunpack.c.l.b16 %v1470
    %v1542 = vunpack.c.l.b16 %v1471
    %v1543 = vunpack.c.l.b16 %v1472
    %v1544 = vunpack.c.l.b16 %v1473
    %v1545 = vunpack.c.l.b16 %v1474
    %v1546 = vunpack.c.l.b16 %v1475
    %v1547 = vpack.c.b16 %v1516, %v1515
    %v1548 = vpack.c.b16 %v1518, %v1517
    %v1549 = vpack.c.b16 %v1520, %v1519
    %v1550 = vpack.c.b16 %v1522, %v1521
    %v1551 = vpack.c.b16 %v1524, %v1523
    %v1552 = vpack.c.b16 %v1526, %v1525
    %v1553 = vpack.c.b16 %v1528, %v1527
    %v1554 = vpack.c.b16 %v1530, %v1529
    %v1555 = vpack.c.b16 %v1532, %v1531
    %v1556 = vpack.c.b16 %v1534, %v1533
    %v1557 = vpack.c.b16 %v1536, %v1535
    %v1558 = vpack.c.b16 %v1538, %v1537
    %v1559 = vpack.c.b16 %v1540, %v1539
    %v1560 = vpack.c.b16 %v1542, %v1541
    %v1561 = vpack.c.b16 %v1544, %v1543
    %v1562 = vpack.c.b16 %v1546, %v1545
    %1579 = vmatprep.subr.bf16.mxu0 0
    %1580 = vmatpush1.bf16.msra.mxu0 %v1547
    %1581 = vmatprep.subr.bf16.mxu0 0
    %1582 = vmatpush1.bf16.msra.mxu0 %v1548
    %1583 = vmatprep.subr.bf16.mxu0 0
    %1584 = vmatpush1.bf16.msra.mxu0 %v1549
    %1585 = vmatprep.subr.bf16.mxu0 0
    %1586 = vmatpush1.bf16.msra.mxu0 %v1550
    %1587 = vmatprep.subr.bf16.mxu0 0
    %1588 = vmatpush1.bf16.msra.mxu0 %v1551
    %1589 = vmatprep.subr.bf16.mxu0 0
    %1590 = vmatpush1.bf16.msra.mxu0 %v1552
    %1591 = vmatprep.subr.bf16.mxu0 0
    %1592 = vmatpush1.bf16.msra.mxu0 %v1553
    %1593 = vmatprep.subr.bf16.mxu0 0
    %1594 = vmatpush1.bf16.msra.mxu0 %v1554
    %1595 = vmatprep.subr.bf16.mxu0 0
    %1596 = vmatpush1.bf16.msra.mxu0 %v1555
    %1597 = vmatprep.subr.bf16.mxu0 0
    %1598 = vmatpush1.bf16.msra.mxu0 %v1556
    %1599 = vmatprep.subr.bf16.mxu0 0
    %1600 = vmatpush1.bf16.msra.mxu0 %v1557
    %1601 = vmatprep.subr.bf16.mxu0 0
    %1602 = vmatpush1.bf16.msra.mxu0 %v1558
    %1603 = vmatprep.subr.bf16.mxu0 0
    %1604 = vmatpush1.bf16.msra.mxu0 %v1559
    %1605 = vmatprep.subr.bf16.mxu0 0
    %1606 = vmatpush1.bf16.msra.mxu0 %v1560
    %1607 = vmatprep.subr.bf16.mxu0 0
    %1608 = vmatpush1.bf16.msra.mxu0 %v1561
    %1609 = vmatprep.subr.bf16.mxu0 0
    %1610 = vmatpush1.bf16.msra.mxu0 %v1562
    %1611 = vmatprep.mubr.bf16.mxu0 %v1429
    %1612 = vmatmul.mubr.bf16.gmra.mrb[0].mxu0 %v1428
    %v1613 = vpop.f32.mrb[0].mxu0
    %v1614 = vadd.f32 %v1481, %v1613
    %v1615 = vpop.f32.mrb[0].mxu0
    %v1616 = vpop.f32.mrb[0].mxu0
    %v1617 = vadd.f32 %v1481, %v1616
    %v1618 = vpop.f32.mrb[0].mxu0
    %1619 = vmatprep.mubr.bf16.mxu0 %v1431
    %1620 = vmatmul.mubr.bf16.gmra.mrb[0].mxu0 %v1430
    %v1621 = vpop.f32.mrb[0].mxu0
    %v1622 = vadd.f32 %v1481, %v1621
    %v1623 = vpop.f32.mrb[0].mxu0
    %v1624 = vpop.f32.mrb[0].mxu0
    %v1625 = vadd.f32 %v1481, %v1624
    %v1626 = vpop.f32.mrb[0].mxu0
    %1627 = vmatprep.mubr.bf16.mxu0 %v1433
    %1628 = vmatmul.mubr.bf16.gmra.mrb[0].mxu0 %v1432
    %v1629 = vpop.f32.mrb[0].mxu0
    %v1630 = vadd.f32 %v1481, %v1629
    %v1631 = vpop.f32.mrb[0].mxu0
    %v1632 = vpop.f32.mrb[0].mxu0
    %v1633 = vadd.f32 %v1481, %v1632
    %v1634 = vpop.f32.mrb[0].mxu0
    %1635 = vmatprep.mubr.bf16.mxu0 %v1435
    %1636 = vmatmul.mubr.bf16.gmra.mrb[0].mxu0 %v1434
    %v1637 = vpop.f32.mrb[0].mxu0
    %v1638 = vadd.f32 %v1481, %v1637
    %v1639 = vpop.f32.mrb[0].mxu0
    %v1640 = vpop.f32.mrb[0].mxu0
    %v1641 = vadd.f32 %v1481, %v1640
    %v1642 = vpop.f32.mrb[0].mxu0
    %1643 = vmatprep.mubr.bf16.mxu0 %v1437
    %1644 = vmatmul.mubr.bf16.gmra.mrb[0].mxu0 %v1436
    %v1645 = vpop.f32.mrb[0].mxu0
    %v1646 = vadd.f32 %v1481, %v1645
    %v1647 = vpop.f32.mrb[0].mxu0
    %v1648 = vpop.f32.mrb[0].mxu0
    %v1649 = vadd.f32 %v1481, %v1648
    %v1650 = vpop.f32.mrb[0].mxu0
    %1651 = vmatprep.mubr.bf16.mxu0 %v1439
    %1652 = vmatmul.mubr.bf16.gmra.mrb[0].mxu0 %v1438
    %v1653 = vpop.f32.mrb[0].mxu0
    %v1654 = vadd.f32 %v1481, %v1653
    %v1655 = vpop.f32.mrb[0].mxu0
    %v1656 = vpop.f32.mrb[0].mxu0
    %v1657 = vadd.f32 %v1481, %v1656
    %v1658 = vpop.f32.mrb[0].mxu0
    %1659 = vmatprep.mubr.bf16.mxu0 %v1441
    %1660 = vmatmul.mubr.bf16.gmra.mrb[0].mxu0 %v1440
    %v1661 = vpop.f32.mrb[0].mxu0
    %v1662 = vadd.f32 %v1481, %v1661
    %v1663 = vpop.f32.mrb[0].mxu0
    %v1664 = vpop.f32.mrb[0].mxu0
    %v1665 = vadd.f32 %v1481, %v1664
    %v1666 = vpop.f32.mrb[0].mxu0
    %1667 = vmatprep.mubr.bf16.mxu0 %v1443
    %1668 = vmatmul.mubr.bf16.gmra.mrb[0].mxu0 %v1442
    %v1669 = vpop.f32.mrb[0].mxu0
    %v1670 = vadd.f32 %v1481, %v1669
    %v1671 = vpop.f32.mrb[0].mxu0
    %v1672 = vpop.f32.mrb[0].mxu0
    %v1673 = vadd.f32 %v1481, %v1672
    %v1674 = vpop.f32.mrb[0].mxu0
    %1675 = vdwg.mxu0
    %v1676 = vmax.f32 %v1614, 0.0
    %v1677 = vmax.f32 %v1617, 0.0
    %v1678 = vmax.f32 %v1622, 0.0
    %v1679 = vmax.f32 %v1625, 0.0
    %v1680 = vmax.f32 %v1630, 0.0
    %v1681 = vmax.f32 %v1633, 0.0
    %v1682 = vmax.f32 %v1638, 0.0
    %v1683 = vmax.f32 %v1641, 0.0
    %v1684 = vmax.f32 %v1646, 0.0
    %v1685 = vmax.f32 %v1649, 0.0
    %v1686 = vmax.f32 %v1654, 0.0
    %v1687 = vmax.f32 %v1657, 0.0
    %v1688 = vmax.f32 %v1662, 0.0
    %v1689 = vmax.f32 %v1665, 0.0
    %v1690 = vmax.f32 %v1670, 0.0
    %v1691 = vmax.f32 %v1673, 0.0
    %v1692 = vld [vmem:[#allocation14] sm:$0x1]
    %v1694 = vlaneseq
    %v1695 = vshrl.u32 %v1694, 7
    %v1696 = vsub.s32 0, %v1695
    %v1697 = vrot.slane %v1692, %v1696
    %v1699 = vmul.f32 %v1676, %v1697
    %v1700 = vmul.f32 %v1677, %v1697
    %v1701 = vmul.f32 %v1678, %v1697
    %v1702 = vmul.f32 %v1679, %v1697
    %v1703 = vmul.f32 %v1680, %v1697
    %v1704 = vmul.f32 %v1681, %v1697
    %v1705 = vmul.f32 %v1682, %v1697
    %v1706 = vmul.f32 %v1683, %v1697
    %v1707 = vmul.f32 %v1684, %v1697
    %v1708 = vmul.f32 %v1685, %v1697
    %v1709 = vmul.f32 %v1686, %v1697
    %v1710 = vmul.f32 %v1687, %v1697
    %v1711 = vmul.f32 %v1688, %v1697
    %v1712 = vmul.f32 %v1689, %v1697
    %v1713 = vmul.f32 %v1690, %v1697
    %v1714 = vmul.f32 %v1691, %v1697
    %1715 = vadd.xlane.f32.xlu0 %v1699
    %v1716 = vpop.xlane.xlu0 %1715
    %1717 = vadd.xlane.f32.xlu0 %v1700
    %v1718 = vpop.xlane.xlu0 %1717
    %1719 = vadd.xlane.f32.xlu0 %v1701
    %v1720 = vpop.xlane.xlu0 %1719
    %1721 = vadd.xlane.f32.xlu0 %v1702
    %v1722 = vpop.xlane.xlu0 %1721
    %1723 = vadd.xlane.f32.xlu0 %v1703
    %v1724 = vpop.xlane.xlu0 %1723
    %1725 = vadd.xlane.f32.xlu0 %v1704
    %v1726 = vpop.xlane.xlu0 %1725
    %1727 = vadd.xlane.f32.xlu0 %v1705
    %v1728 = vpop.xlane.xlu0 %1727
    %1729 = vadd.xlane.f32.xlu0 %v1706
    %v1730 = vpop.xlane.xlu0 %1729
    %1731 = vadd.xlane.f32.xlu0 %v1707
    %v1732 = vpop.xlane.xlu0 %1731
    %1733 = vadd.xlane.f32.xlu0 %v1708
    %v1734 = vpop.xlane.xlu0 %1733
    %1735 = vadd.xlane.f32.xlu0 %v1709
    %v1736 = vpop.xlane.xlu0 %1735
    %1737 = vadd.xlane.f32.xlu0 %v1710
    %v1738 = vpop.xlane.xlu0 %1737
    %1739 = vadd.xlane.f32.xlu0 %v1711
    %v1740 = vpop.xlane.xlu0 %1739
    %1741 = vadd.xlane.f32.xlu0 %v1712
    %v1742 = vpop.xlane.xlu0 %1741
    %1743 = vadd.xlane.f32.xlu0 %v1713
    %v1744 = vpop.xlane.xlu0 %1743
    %1745 = vadd.xlane.f32.xlu0 %v1714
    %v1746 = vpop.xlane.xlu0 %1745
    %v1747 = vadd.f32 %v1716, -0.09806679
    %v1748 = vadd.f32 %v1718, -0.09806679
    %v1749 = vadd.f32 %v1720, -0.09806679
    %v1750 = vadd.f32 %v1722, -0.09806679
    %v1751 = vadd.f32 %v1724, -0.09806679
    %v1752 = vadd.f32 %v1726, -0.09806679
    %v1753 = vadd.f32 %v1728, -0.09806679
    %v1754 = vadd.f32 %v1730, -0.09806679
    %v1755 = vadd.f32 %v1732, -0.09806679
    %v1756 = vadd.f32 %v1734, -0.09806679
    %v1757 = vadd.f32 %v1736, -0.09806679
    %v1758 = vadd.f32 %v1738, -0.09806679
    %v1759 = vadd.f32 %v1740, -0.09806679
    %v1760 = vadd.f32 %v1742, -0.09806679
    %v1761 = vadd.f32 %v1744, -0.09806679
    %v1762 = vadd.f32 %v1746, -0.09806679
    %v1779 = vlaneseq
    %v1780 = vshrl.u32 %v1779, 7
    %v1781 = vsub.s32 %v432, %v1780
    %v1782 = vrot.slane %v1747, %v1781
    %v1783 = vlaneseq
    %v1784 = vshrl.u32 %v1783, 7
    %v1785 = vsub.s32 %v432, %v1784
    %v1786 = vrot.slane %v1748, %v1785
    %v1787 = vlaneseq
    %v1788 = vshrl.u32 %v1787, 7
    %v1789 = vsub.s32 %v432, %v1788
    %v1790 = vrot.slane %v1749, %v1789
    %v1791 = vlaneseq
    %v1792 = vshrl.u32 %v1791, 7
    %v1793 = vsub.s32 %v432, %v1792
    %v1794 = vrot.slane %v1750, %v1793
    %v1795 = vlaneseq
    %v1796 = vshrl.u32 %v1795, 7
    %v1797 = vsub.s32 %v432, %v1796
    %v1798 = vrot.slane %v1751, %v1797
    %v1799 = vlaneseq
    %v1800 = vshrl.u32 %v1799, 7
    %v1801 = vsub.s32 %v432, %v1800
    %v1802 = vrot.slane %v1752, %v1801
    %v1803 = vlaneseq
    %v1804 = vshrl.u32 %v1803, 7
    %v1805 = vsub.s32 %v432, %v1804
    %v1806 = vrot.slane %v1753, %v1805
    %v1807 = vlaneseq
    %v1808 = vshrl.u32 %v1807, 7
    %v1809 = vsub.s32 %v432, %v1808
    %v1810 = vrot.slane %v1754, %v1809
    %v1811 = vlaneseq
    %v1812 = vshrl.u32 %v1811, 7
    %v1813 = vsub.s32 %v432, %v1812
    %v1814 = vrot.slane %v1755, %v1813
    %v1815 = vlaneseq
    %v1816 = vshrl.u32 %v1815, 7
    %v1817 = vsub.s32 %v432, %v1816
    %v1818 = vrot.slane %v1756, %v1817
    %v1819 = vlaneseq
    %v1820 = vshrl.u32 %v1819, 7
    %v1821 = vsub.s32 %v432, %v1820
    %v1822 = vrot.slane %v1757, %v1821
    %v1823 = vlaneseq
    %v1824 = vshrl.u32 %v1823, 7
    %v1825 = vsub.s32 %v432, %v1824
    %v1826 = vrot.slane %v1758, %v1825
    %v1827 = vlaneseq
    %v1828 = vshrl.u32 %v1827, 7
    %v1829 = vsub.s32 %v432, %v1828
    %v1830 = vrot.slane %v1759, %v1829
    %v1831 = vlaneseq
    %v1832 = vshrl.u32 %v1831, 7
    %v1833 = vsub.s32 %v432, %v1832
    %v1834 = vrot.slane %v1760, %v1833
    %v1835 = vlaneseq
    %v1836 = vshrl.u32 %v1835, 7
    %v1837 = vsub.s32 %v432, %v1836
    %v1838 = vrot.slane %v1761, %v1837
    %v1839 = vlaneseq
    %v1840 = vshrl.u32 %v1839, 7
    %v1841 = vsub.s32 %v432, %v1840
    %v1842 = vrot.slane %v1762, %v1841
    %v1843 = vsel %vm497, %v1786, %v1782
    %v1844 = vsel %vm499, %v1790, %v1843
    %v1845 = vsel %vm501, %v1794, %v1844
    %v1846 = vsel %vm503, %v1798, %v1845
    %v1847 = vsel %vm505, %v1802, %v1846
    %v1848 = vsel %vm507, %v1806, %v1847
    %v1849 = vsel %vm509, %v1810, %v1848
    %v1850 = vsel %vm497, %v1818, %v1814
    %v1851 = vsel %vm499, %v1822, %v1850
    %v1852 = vsel %vm501, %v1826, %v1851
    %v1853 = vsel %vm503, %v1830, %v1852
    %v1854 = vsel %vm505, %v1834, %v1853
    %v1855 = vsel %vm507, %v1838, %v1854
    %v1856 = vsel %vm509, %v1842, %v1855
    %1859 = vst.msk [vmem:[#allocation16] sm:$0xff] %vm520, %v1849
    %1860 = vst.msk [vmem:[#allocation16 + $0x8] sm:$0xff] %vm520, %v1856
    // Predicated region
    $region66: #{tpu_custom_call.1} parent=1 // pred_check
      _
    $region67: #{tpu_custom_call.1} parent=1 // pred_check_branch
      %1862 = sbr.rel (0) target = $region69
    $region68: #{tpu_custom_call.1} parent=1 // pred_region
      %s1864 = ssub.s32 256, 256
      %1865 = vsyncadd [#allocation4], %s1864
      %s1866 = sshll.u32 [#allocation16], 4
      %s1867 = int_to_ptr.vmem [resolvable:$true] %s1866
      %1872 = dma.vmem_to_hbm [thread:$0]  %s1867, 256, %s8, [#allocation4], 128, 128, 8
    $region69: #{tpu_custom_call.1} parent=1 // pred_fallthru
      _
    // Predicated region
    $region70: #{tpu_custom_call.1} parent=1 // pred_check
      _
    $region71: #{tpu_custom_call.1} parent=1 // pred_check_branch
      %1874 = sbr.rel (0) target = $region73
    $region72: #{tpu_custom_call.1} parent=1 // pred_region
      %1875 = dma.done [#allocation4], 256
    $region73: #{tpu_custom_call.1} parent=1 // pred_fallthru
      _
    %1876 = vsyncpa [#allocation3], 1
    %1877 = vsyncpa [#allocation6], 1
    %1878 = vsyncpa [#allocation9], 1
    %1879 = vsyncpa [#allocation12], 1
    %1880 = vsyncpa [#allocation15], 1
    %1881 = vsyncpa [#allocation4], 1

// kernel: tpu_custom_call.1
$region0: #{tpu_custom_call.1}
  #allocation0 [shape = 'u32[]', space=smem, size = 0x4, offset = 0x4, fixed_abs, tag = 'smem constant byte address 0x4 - core index']
  #allocation1 [shape = 'u32[144,128]{1,0:T(1,128)}', space=vmem, size = 0x12000, scoped, tag = 'internal scratch']
  %s0 = inlined_call_operand.hbm [shape: f32[16,8,32], index: 0, kind: input, shape index: {}]
  %s1 = inlined_call_operand.hbm [shape: f32[16,32], index: 1, kind: input, shape index: {}]
  %s2 = inlined_call_operand.hbm [shape: f32[16,32], index: 2, kind: input, shape index: {}]
  %s3 = inlined_call_operand.hbm [shape: bf16[32,256], index: 3, kind: input, shape index: {}]
  %s4 = inlined_call_operand.hbm [shape: f32[1,256], index: 4, kind: input, shape index: {}]
  %s5 = inlined_call_operand.hbm [shape: bf16[256,128], index: 5, kind: input, shape index: {}]
  %s6 = inlined_call_operand.hbm [shape: f32[1,128], index: 6, kind: input, shape index: {}]
  %s7 = inlined_call_operand.hbm [shape: f32[1,128], index: 7, kind: input, shape index: {}]
  %s8 = inlined_call_operand.hbm [shape: f32[16,8], index: 8, kind: output, shape index: {}]
  %s9 = sld [smem:[#allocation0]]
  $region74: #{tpu_custom_call.1} parent=0
    _
  %s11 = ssub.s32 1, %s9
  %s12 = scalar_select 0, %s11, %s9
  $region1: #{tpu_custom_call.1} parent=0
    #allocation2 [shape = 'u8[65536]{0}', space=vmem, size = 0x10000, scoped, tag = 'input window, operand 0, single buffered']
    #allocation3 [shape = 's32[1]{0}', space=sflag, size = 0x4, scoped, tag = 'scoped memory for tpu_custom_call.1']
    #allocation4 [shape = 's32[1]{0}', space=sflag, size = 0x4, scoped, tag = 'scoped memory for tpu_custom_call.1']
    #allocation5 [shape = 'u8[8192]{0}', space=vmem, size = 0x2000, scoped, tag = 'input window, operand 1, single buffered']
    #allocation6 [shape = 's32[1]{0}', space=sflag, size = 0x4, scoped, tag = 'scoped memory for tpu_custom_call.1']
    #allocation7 [shape = 'u8[8192]{0}', space=vmem, size = 0x2000, scoped, tag = 'input window, operand 2, single buffered']
    #allocation8 [shape = 'u8[16384]{0}', space=vmem, size = 0x4000, scoped, tag = 'input window, operand 3, single buffered']
    #allocation9 [shape = 's32[1]{0}', space=sflag, size = 0x4, scoped, tag = 'scoped memory for tpu_custom_call.1']
    #allocation10 [shape = 'u8[1024]{0}', space=vmem, size = 0x400, scoped, tag = 'input window, operand 4, single buffered']
    #allocation11 [shape = 'u8[65536]{0}', space=vmem, size = 0x10000, scoped, tag = 'input window, operand 5, single buffered']
    #allocation12 [shape = 's32[1]{0}', space=sflag, size = 0x4, scoped, tag = 'scoped memory for tpu_custom_call.1']
    #allocation13 [shape = 'u8[512]{0}', space=vmem, size = 0x400, scoped, tag = 'input window, operand 6, single buffered']
    #allocation14 [shape = 'u8[512]{0}', space=vmem, size = 0x400, scoped, tag = 'input window, operand 7, single buffered']
    #allocation15 [shape = 's32[1]{0}', space=sflag, size = 0x4, scoped, tag = 'scoped memory for tpu_custom_call.1']
    #allocation16 [shape = 'u8[8192]{0}', space=vmem, size = 0x2000, scoped, tag = 'output window, operand 0, single buffered']
    %13 = vsyncpa [#allocation3], 0
    %14 = vsyncpa [#allocation6], 0
    %15 = vsyncpa [#allocation9], 0
    %16 = vsyncpa [#allocation12], 0
    %17 = vsyncpa [#allocation15], 0
    %18 = vsyncpa [#allocation4], 0
    // Predicated region
    $region2: #{tpu_custom_call.1} parent=1 // pred_check
      _
    $region3: #{tpu_custom_call.1} parent=1 // pred_check_branch
      %20 = sbr.rel (0) target = $region5
    $region4: #{tpu_custom_call.1} parent=1 // pred_region
      %s22 = ssub.s32 2048, 2048
      %23 = vsyncadd [#allocation3], %s22
      %s24 = sshll.u32 [#allocation2], 4
      %s25 = int_to_ptr.vmem [resolvable:$true] %s24
      %30 = dma.hbm_to_vmem [thread:$0]  %s0, 2048, %s25, [#allocation3], 128, 128, 8
    $region5: #{tpu_custom_call.1} parent=1 // pred_fallthru
      _
    // Predicated region
    $region6: #{tpu_custom_call.1} parent=1 // pred_check
      _
    $region7: #{tpu_custom_call.1} parent=1 // pred_check_branch
      %32 = sbr.rel (0) target = $region9
    $region8: #{tpu_custom_call.1} parent=1 // pred_region
      %s34 = ssub.s32 256, 256
      %35 = vsyncadd [#allocation6], %s34
      %s36 = sshll.u32 [#allocation5], 4
      %s37 = int_to_ptr.vmem [resolvable:$true] %s36
      %42 = dma.hbm_to_vmem [thread:$0]  %s1, 256, %s37, [#allocation6], 128, 128, 8
    $region9: #{tpu_custom_call.1} parent=1 // pred_fallthru
      _
    // Predicated region
    $region10: #{tpu_custom_call.1} parent=1 // pred_check
      _
    $region11: #{tpu_custom_call.1} parent=1 // pred_check_branch
      %44 = sbr.rel (0) target = $region13
    $region12: #{tpu_custom_call.1} parent=1 // pred_region
      %s46 = ssub.s32 256, 256
      %47 = vsyncadd [#allocation6], %s46
      %s48 = sshll.u32 [#allocation7], 4
      %s49 = int_to_ptr.vmem [resolvable:$true] %s48
      %54 = dma.hbm_to_vmem [thread:$0]  %s2, 256, %s49, [#allocation6], 128, 128, 8
    $region13: #{tpu_custom_call.1} parent=1 // pred_fallthru
      _
    // Predicated region
    $region14: #{tpu_custom_call.1} parent=1 // pred_check
      _
    $region15: #{tpu_custom_call.1} parent=1 // pred_check_branch
      %56 = sbr.rel (0) target = $region17
    $region16: #{tpu_custom_call.1} parent=1 // pred_region
      %s58 = ssub.s32 512, 512
      %59 = vsyncadd [#allocation9], %s58
      %s60 = sshll.u32 [#allocation8], 4
      %s61 = int_to_ptr.vmem [resolvable:$true] %s60
      %66 = dma.hbm_to_vmem [thread:$0]  %s3, 512, %s61, [#allocation9], 128, 128, 8
    $region17: #{tpu_custom_call.1} parent=1 // pred_fallthru
      _
    // Predicated region
    $region18: #{tpu_custom_call.1} parent=1 // pred_check
      _
    $region19: #{tpu_custom_call.1} parent=1 // pred_check_branch
      %68 = sbr.rel (0) target = $region21
    $region20: #{tpu_custom_call.1} parent=1 // pred_region
      %s70 = ssub.s32 32, 32
      %71 = vsyncadd [#allocation9], %s70
      %s73 = sshll.u32 [#allocation10], 4
      %s74 = int_to_ptr.vmem [resolvable:$true] %s73
      %76 = dma.hbm_to_vmem [thread:$0]  %s4, 32, %s74, [#allocation9]
    $region21: #{tpu_custom_call.1} parent=1 // pred_fallthru
      _
    // Predicated region
    $region22: #{tpu_custom_call.1} parent=1 // pred_check
      _
    $region23: #{tpu_custom_call.1} parent=1 // pred_check_branch
      %78 = sbr.rel (0) target = $region25
    $region24: #{tpu_custom_call.1} parent=1 // pred_region
      %s80 = ssub.s32 2048, 2048
      %81 = vsyncadd [#allocation12], %s80
      %s82 = sshll.u32 [#allocation11], 4
      %s83 = int_to_ptr.vmem [resolvable:$true] %s82
      %88 = dma.hbm_to_vmem [thread:$0]  %s5, 2048, %s83, [#allocation12], 64, 64, 4
    $region25: #{tpu_custom_call.1} parent=1 // pred_fallthru
      _
    // Predicated region
    $region26: #{tpu_custom_call.1} parent=1 // pred_check
      _
    $region27: #{tpu_custom_call.1} parent=1 // pred_check_branch
      %90 = sbr.rel (0) target = $region29
    $region28: #{tpu_custom_call.1} parent=1 // pred_region
      %s92 = ssub.s32 16, 16
      %93 = vsyncadd [#allocation12], %s92
      %s95 = sshll.u32 [#allocation13], 4
      %s96 = int_to_ptr.vmem [resolvable:$true] %s95
      %98 = dma.hbm_to_vmem [thread:$0]  %s6, 16, %s96, [#allocation12]
    $region29: #{tpu_custom_call.1} parent=1 // pred_fallthru
      _
    // Predicated region
    $region30: #{tpu_custom_call.1} parent=1 // pred_check
      _
    $region31: #{tpu_custom_call.1} parent=1 // pred_check_branch
      %100 = sbr.rel (0) target = $region33
    $region32: #{tpu_custom_call.1} parent=1 // pred_region
      %s102 = ssub.s32 16, 16
      %103 = vsyncadd [#allocation15], %s102
      %s105 = sshll.u32 [#allocation14], 4
      %s106 = int_to_ptr.vmem [resolvable:$true] %s105
      %108 = dma.hbm_to_vmem [thread:$0]  %s7, 16, %s106, [#allocation15]
    $region33: #{tpu_custom_call.1} parent=1 // pred_fallthru
      _
    // Predicated region
    $region34: #{tpu_custom_call.1} parent=1 // pred_check
      _
    $region35: #{tpu_custom_call.1} parent=1 // pred_check_branch
      %110 = sbr.rel (0) target = $region37
    $region36: #{tpu_custom_call.1} parent=1 // pred_region
      %111 = dma.done [#allocation3], 2048
    $region37: #{tpu_custom_call.1} parent=1 // pred_fallthru
      _
    // Predicated region
    $region38: #{tpu_custom_call.1} parent=1 // pred_check
      _
    $region39: #{tpu_custom_call.1} parent=1 // pred_check_branch
      %113 = sbr.rel (0) target = $region41
    $region40: #{tpu_custom_call.1} parent=1 // pred_region
      %114 = dma.done [#allocation6], 256
    $region41: #{tpu_custom_call.1} parent=1 // pred_fallthru
      _
    // Predicated region
    $region42: #{tpu_custom_call.1} parent=1 // pred_check
      _
    $region43: #{tpu_custom_call.1} parent=1 // pred_check_branch
      %116 = sbr.rel (0) target = $region45
    $region44: #{tpu_custom_call.1} parent=1 // pred_region
      %117 = dma.done [#allocation6], 256
    $region45: #{tpu_custom_call.1} parent=1 // pred_fallthru
      _
    // Predicated region
    $region46: #{tpu_custom_call.1} parent=1 // pred_check
      _
    $region47: #{tpu_custom_call.1} parent=1 // pred_check_branch
      %119 = sbr.rel (0) target = $region49
    $region48: #{tpu_custom_call.1} parent=1 // pred_region
      %120 = dma.done [#allocation9], 512
    $region49: #{tpu_custom_call.1} parent=1 // pred_fallthru
      _
    // Predicated region
    $region50: #{tpu_custom_call.1} parent=1 // pred_check
      _
    $region51: #{tpu_custom_call.1} parent=1 // pred_check_branch
      %122 = sbr.rel (0) target = $region53
    $region52: #{tpu_custom_call.1} parent=1 // pred_region
      %123 = dma.done [#allocation9], 32
    $region53: #{tpu_custom_call.1} parent=1 // pred_fallthru
      _
    // Predicated region
    $region54: #{tpu_custom_call.1} parent=1 // pred_check
      _
    $region55: #{tpu_custom_call.1} parent=1 // pred_check_branch
      %125 = sbr.rel (0) target = $region57
    $region56: #{tpu_custom_call.1} parent=1 // pred_region
      %126 = dma.done [#allocation12], 2048
    $region57: #{tpu_custom_call.1} parent=1 // pred_fallthru
      _
    // Predicated region
    $region58: #{tpu_custom_call.1} parent=1 // pred_check
      _
    $region59: #{tpu_custom_call.1} parent=1 // pred_check_branch
      %128 = sbr.rel (0) target = $region61
    $region60: #{tpu_custom_call.1} parent=1 // pred_region
      %129 = dma.done [#allocation12], 16
    $region61: #{tpu_custom_call.1} parent=1 // pred_fallthru
      _
    // Predicated region
    $region62: #{tpu_custom_call.1} parent=1 // pred_check
      _
    $region63: #{tpu_custom_call.1} parent=1 // pred_check_branch
      %131 = sbr.rel (0) target = $region65
    $region64: #{tpu_custom_call.1} parent=1 // pred_region
      %132 = dma.done [#allocation15], 16
    $region65: #{tpu_custom_call.1} parent=1 // pred_fallthru
      _
    %v134 = vld [vmem:[#allocation2] sm:$0xff]
    %v135 = vld [vmem:[#allocation2 + $0x8] sm:$0xff]
    %v136 = vld [vmem:[#allocation2 + $0x10] sm:$0xff]
    %v137 = vld [vmem:[#allocation2 + $0x18] sm:$0xff]
    %v138 = vld [vmem:[#allocation2 + $0x20] sm:$0xff]
    %v139 = vld [vmem:[#allocation2 + $0x28] sm:$0xff]
    %v140 = vld [vmem:[#allocation2 + $0x30] sm:$0xff]
    %v141 = vld [vmem:[#allocation2 + $0x38] sm:$0xff]
    %v142 = vld [vmem:[#allocation2 + $0x40] sm:$0xff]
    %v143 = vld [vmem:[#allocation2 + $0x48] sm:$0xff]
    %v144 = vld [vmem:[#allocation2 + $0x50] sm:$0xff]
    %v145 = vld [vmem:[#allocation2 + $0x58] sm:$0xff]
    %v146 = vld [vmem:[#allocation2 + $0x60] sm:$0xff]
    %v147 = vld [vmem:[#allocation2 + $0x68] sm:$0xff]
    %v148 = vld [vmem:[#allocation2 + $0x70] sm:$0xff]
    %v149 = vld [vmem:[#allocation2 + $0x78] sm:$0xff]
    %v150 = vld [vmem:[#allocation5] sm:$0xff]
    %v151 = vld [vmem:[#allocation5 + $0x8] sm:$0xff]
    %v152 = vld [vmem:[#allocation7] sm:$0xff]
    %v153 = vld [vmem:[#allocation7 + $0x8] sm:$0xff]
    %v156 = vcombine.high %v150, %v150
    %v158 = vunpack.c.l.s4 1966171168
    %v159 = vunpack.c.0.s8 %v158
    %v160 = vlaneseq
    %v161 = vshrl.u32 %v160, 7
    %v162 = vsub.s32 %v159, %v161
    %v163 = vrot.slane %v150, %v162
    %v165 = vunpack.c.l.s4 1966171168
    %v166 = vunpack.c.0.s8 %v165
    %v167 = vlaneseq
    %v168 = vshrl.u32 %v167, 7
    %v169 = vsub.s32 %v166, %v168
    %v170 = vrot.slane %v156, %v169
    %v171 = vcombine.high %v163, %v163
    %v172 = vcombine.high %v170, %v170
    %v174 = vunpack.c.l.s4 1966171168
    %v175 = vunpack.c.0.s8 %v174
    %v176 = vlaneseq
    %v177 = vshrl.u32 %v176, 7
    %v178 = vsub.s32 %v175, %v177
    %v179 = vrot.slane %v163, %v178
    %v181 = vunpack.c.l.s4 1966171168
    %v182 = vunpack.c.0.s8 %v181
    %v183 = vlaneseq
    %v184 = vshrl.u32 %v183, 7
    %v185 = vsub.s32 %v182, %v184
    %v186 = vrot.slane %v170, %v185
    %v188 = vunpack.c.l.s4 1966171168
    %v189 = vunpack.c.0.s8 %v188
    %v190 = vlaneseq
    %v191 = vshrl.u32 %v190, 7
    %v192 = vsub.s32 %v189, %v191
    %v193 = vrot.slane %v171, %v192
    %v195 = vunpack.c.l.s4 1966171168
    %v196 = vunpack.c.0.s8 %v195
    %v197 = vlaneseq
    %v198 = vshrl.u32 %v197, 7
    %v199 = vsub.s32 %v196, %v198
    %v200 = vrot.slane %v172, %v199
    %v201 = vcombine.high %v179, %v179
    %v202 = vcombine.high %v186, %v186
    %v203 = vcombine.high %v193, %v193
    %v204 = vcombine.high %v200, %v200
    %v205 = vcombine.high %v151, %v151
    %v207 = vunpack.c.l.s4 1966171168
    %v208 = vunpack.c.0.s8 %v207
    %v209 = vlaneseq
    %v210 = vshrl.u32 %v209, 7
    %v211 = vsub.s32 %v208, %v210
    %v212 = vrot.slane %v151, %v211
    %v214 = vunpack.c.l.s4 1966171168
    %v215 = vunpack.c.0.s8 %v214
    %v216 = vlaneseq
    %v217 = vshrl.u32 %v216, 7
    %v218 = vsub.s32 %v215, %v217
    %v219 = vrot.slane %v205, %v218
    %v220 = vcombine.high %v212, %v212
    %v221 = vcombine.high %v219, %v219
    %v223 = vunpack.c.l.s4 1966171168
    %v224 = vunpack.c.0.s8 %v223
    %v225 = vlaneseq
    %v226 = vshrl.u32 %v225, 7
    %v227 = vsub.s32 %v224, %v226
    %v228 = vrot.slane %v212, %v227
    %v230 = vunpack.c.l.s4 1966171168
    %v231 = vunpack.c.0.s8 %v230
    %v232 = vlaneseq
    %v233 = vshrl.u32 %v232, 7
    %v234 = vsub.s32 %v231, %v233
    %v235 = vrot.slane %v219, %v234
    %v237 = vunpack.c.l.s4 1966171168
    %v238 = vunpack.c.0.s8 %v237
    %v239 = vlaneseq
    %v240 = vshrl.u32 %v239, 7
    %v241 = vsub.s32 %v238, %v240
    %v242 = vrot.slane %v220, %v241
    %v244 = vunpack.c.l.s4 1966171168
    %v245 = vunpack.c.0.s8 %v244
    %v246 = vlaneseq
    %v247 = vshrl.u32 %v246, 7
    %v248 = vsub.s32 %v245, %v247
    %v249 = vrot.slane %v221, %v248
    %v250 = vcombine.high %v228, %v228
    %v251 = vcombine.high %v235, %v235
    %v252 = vcombine.high %v242, %v242
    %v253 = vcombine.high %v249, %v249
    %v254 = vlaneseq
    %v255 = vshrl.u32 %v254, 7
    %v256 = vsub.s32 0, %v255
    %v257 = vrot.slane %v179, %v256
    %v258 = vlaneseq
    %v259 = vshrl.u32 %v258, 7
    %v260 = vsub.s32 0, %v259
    %v261 = vrot.slane %v193, %v260
    %v262 = vlaneseq
    %v263 = vshrl.u32 %v262, 7
    %v264 = vsub.s32 0, %v263
    %v265 = vrot.slane %v201, %v264
    %v266 = vlaneseq
    %v267 = vshrl.u32 %v266, 7
    %v268 = vsub.s32 0, %v267
    %v269 = vrot.slane %v203, %v268
    %v270 = vlaneseq
    %v271 = vshrl.u32 %v270, 7
    %v272 = vsub.s32 0, %v271
    %v273 = vrot.slane %v186, %v272
    %v274 = vlaneseq
    %v275 = vshrl.u32 %v274, 7
    %v276 = vsub.s32 0, %v275
    %v277 = vrot.slane %v200, %v276
    %v278 = vlaneseq
    %v279 = vshrl.u32 %v278, 7
    %v280 = vsub.s32 0, %v279
    %v281 = vrot.slane %v202, %v280
    %v282 = vlaneseq
    %v283 = vshrl.u32 %v282, 7
    %v284 = vsub.s32 0, %v283
    %v285 = vrot.slane %v204, %v284
    %v286 = vlaneseq
    %v287 = vshrl.u32 %v286, 7
    %v288 = vsub.s32 0, %v287
    %v289 = vrot.slane %v228, %v288
    %v290 = vlaneseq
    %v291 = vshrl.u32 %v290, 7
    %v292 = vsub.s32 0, %v291
    %v293 = vrot.slane %v242, %v292
    %v294 = vlaneseq
    %v295 = vshrl.u32 %v294, 7
    %v296 = vsub.s32 0, %v295
    %v297 = vrot.slane %v250, %v296
    %v298 = vlaneseq
    %v299 = vshrl.u32 %v298, 7
    %v300 = vsub.s32 0, %v299
    %v301 = vrot.slane %v252, %v300
    %v302 = vlaneseq
    %v303 = vshrl.u32 %v302, 7
    %v304 = vsub.s32 0, %v303
    %v305 = vrot.slane %v235, %v304
    %v306 = vlaneseq
    %v307 = vshrl.u32 %v306, 7
    %v308 = vsub.s32 0, %v307
    %v309 = vrot.slane %v249, %v308
    %v310 = vlaneseq
    %v311 = vshrl.u32 %v310, 7
    %v312 = vsub.s32 0, %v311
    %v313 = vrot.slane %v251, %v312
    %v314 = vlaneseq
    %v315 = vshrl.u32 %v314, 7
    %v316 = vsub.s32 0, %v315
    %v317 = vrot.slane %v253, %v316
    %v334 = vmul.f32 %v134, %v257
    %v335 = vmul.f32 %v135, %v261
    %v336 = vmul.f32 %v136, %v265
    %v337 = vmul.f32 %v137, %v269
    %v338 = vmul.f32 %v138, %v273
    %v339 = vmul.f32 %v139, %v277
    %v340 = vmul.f32 %v140, %v281
    %v341 = vmul.f32 %v141, %v285
    %v342 = vmul.f32 %v142, %v289
    %v343 = vmul.f32 %v143, %v293
    %v344 = vmul.f32 %v144, %v297
    %v345 = vmul.f32 %v145, %v301
    %v346 = vmul.f32 %v146, %v305
    %v347 = vmul.f32 %v147, %v309
    %v348 = vmul.f32 %v148, %v313
    %v349 = vmul.f32 %v149, %v317
    %vm350 = vcmask 261120
    %v351 = vsel %vm350, %v334, 0.0
    %352 = vadd.xlane.f32.xlu0 %v351
    %v353 = vpop.xlane.xlu0 %352
    %v354 = vsel %vm350, %v335, 0.0
    %355 = vadd.xlane.f32.xlu0 %v354
    %v356 = vpop.xlane.xlu0 %355
    %v357 = vsel %vm350, %v336, 0.0
    %358 = vadd.xlane.f32.xlu0 %v357
    %v359 = vpop.xlane.xlu0 %358
    %v360 = vsel %vm350, %v337, 0.0
    %361 = vadd.xlane.f32.xlu0 %v360
    %v362 = vpop.xlane.xlu0 %361
    %v363 = vsel %vm350, %v338, 0.0
    %364 = vadd.xlane.f32.xlu0 %v363
    %v365 = vpop.xlane.xlu0 %364
    %v366 = vsel %vm350, %v339, 0.0
    %367 = vadd.xlane.f32.xlu0 %v366
    %v368 = vpop.xlane.xlu0 %367
    %v369 = vsel %vm350, %v340, 0.0
    %370 = vadd.xlane.f32.xlu0 %v369
    %v371 = vpop.xlane.xlu0 %370
    %v372 = vsel %vm350, %v341, 0.0
    %373 = vadd.xlane.f32.xlu0 %v372
    %v374 = vpop.xlane.xlu0 %373
    %v375 = vsel %vm350, %v342, 0.0
    %376 = vadd.xlane.f32.xlu0 %v375
    %v377 = vpop.xlane.xlu0 %376
    %v378 = vsel %vm350, %v343, 0.0
    %379 = vadd.xlane.f32.xlu0 %v378
    %v380 = vpop.xlane.xlu0 %379
    %v381 = vsel %vm350, %v344, 0.0
    %382 = vadd.xlane.f32.xlu0 %v381
    %v383 = vpop.xlane.xlu0 %382
    %v384 = vsel %vm350, %v345, 0.0
    %385 = vadd.xlane.f32.xlu0 %v384
    %v386 = vpop.xlane.xlu0 %385
    %v387 = vsel %vm350, %v346, 0.0
    %388 = vadd.xlane.f32.xlu0 %v387
    %v389 = vpop.xlane.xlu0 %388
    %v390 = vsel %vm350, %v347, 0.0
    %391 = vadd.xlane.f32.xlu0 %v390
    %v392 = vpop.xlane.xlu0 %391
    %v393 = vsel %vm350, %v348, 0.0
    %394 = vadd.xlane.f32.xlu0 %v393
    %v395 = vpop.xlane.xlu0 %394
    %v396 = vsel %vm350, %v349, 0.0
    %397 = vadd.xlane.f32.xlu0 %v396
    %v398 = vpop.xlane.xlu0 %397
    %v399 = vmul.f32 %v353, 4.0
    %v400 = vmul.f32 %v356, 4.0
    %v401 = vmul.f32 %v359, 4.0
    %v402 = vmul.f32 %v362, 4.0
    %v403 = vmul.f32 %v365, 4.0
    %v404 = vmul.f32 %v368, 4.0
    %v405 = vmul.f32 %v371, 4.0
    %v406 = vmul.f32 %v374, 4.0
    %v407 = vmul.f32 %v377, 4.0
    %v408 = vmul.f32 %v380, 4.0
    %v409 = vmul.f32 %v383, 4.0
    %v410 = vmul.f32 %v386, 4.0
    %v411 = vmul.f32 %v389, 4.0
    %v412 = vmul.f32 %v392, 4.0
    %v413 = vmul.f32 %v395, 4.0
    %v414 = vmul.f32 %v398, 4.0
    %v431 = vlaneseq
    %v432 = vand.u32 %v431, 127
    %v433 = vlaneseq
    %v434 = vshrl.u32 %v433, 7
    %v435 = vsub.s32 %v432, %v434
    %v436 = vrot.slane %v399, %v435
    %v437 = vlaneseq
    %v438 = vshrl.u32 %v437, 7
    %v439 = vsub.s32 %v432, %v438
    %v440 = vrot.slane %v400, %v439
    %v441 = vlaneseq
    %v442 = vshrl.u32 %v441, 7
    %v443 = vsub.s32 %v432, %v442
    %v444 = vrot.slane %v401, %v443
    %v445 = vlaneseq
    %v446 = vshrl.u32 %v445, 7
    %v447 = vsub.s32 %v432, %v446
    %v448 = vrot.slane %v402, %v447
    %v449 = vlaneseq
    %v450 = vshrl.u32 %v449, 7
    %v451 = vsub.s32 %v432, %v450
    %v452 = vrot.slane %v403, %v451
    %v453 = vlaneseq
    %v454 = vshrl.u32 %v453, 7
    %v455 = vsub.s32 %v432, %v454
    %v456 = vrot.slane %v404, %v455
    %v457 = vlaneseq
    %v458 = vshrl.u32 %v457, 7
    %v459 = vsub.s32 %v432, %v458
    %v460 = vrot.slane %v405, %v459
    %v461 = vlaneseq
    %v462 = vshrl.u32 %v461, 7
    %v463 = vsub.s32 %v432, %v462
    %v464 = vrot.slane %v406, %v463
    %v465 = vlaneseq
    %v466 = vshrl.u32 %v465, 7
    %v467 = vsub.s32 %v432, %v466
    %v468 = vrot.slane %v407, %v467
    %v469 = vlaneseq
    %v470 = vshrl.u32 %v469, 7
    %v471 = vsub.s32 %v432, %v470
    %v472 = vrot.slane %v408, %v471
    %v473 = vlaneseq
    %v474 = vshrl.u32 %v473, 7
    %v475 = vsub.s32 %v432, %v474
    %v476 = vrot.slane %v409, %v475
    %v477 = vlaneseq
    %v478 = vshrl.u32 %v477, 7
    %v479 = vsub.s32 %v432, %v478
    %v480 = vrot.slane %v410, %v479
    %v481 = vlaneseq
    %v482 = vshrl.u32 %v481, 7
    %v483 = vsub.s32 %v432, %v482
    %v484 = vrot.slane %v411, %v483
    %v485 = vlaneseq
    %v486 = vshrl.u32 %v485, 7
    %v487 = vsub.s32 %v432, %v486
    %v488 = vrot.slane %v412, %v487
    %v489 = vlaneseq
    %v490 = vshrl.u32 %v489, 7
    %v491 = vsub.s32 %v432, %v490
    %v492 = vrot.slane %v413, %v491
    %v493 = vlaneseq
    %v494 = vshrl.u32 %v493, 7
    %v495 = vsub.s32 %v432, %v494
    %v496 = vrot.slane %v414, %v495
    %vm497 = vcmask 1041409
    %v498 = vsel %vm497, %v440, %v436
    %vm499 = vcmask 1042434
    %v500 = vsel %vm499, %v444, %v498
    %vm501 = vcmask 1043459
    %v502 = vsel %vm501, %v448, %v500
    %vm503 = vcmask 1044484
    %v504 = vsel %vm503, %v452, %v502
    %vm505 = vcmask 1045509
    %v506 = vsel %vm505, %v456, %v504
    %vm507 = vcmask 1046534
    %v508 = vsel %vm507, %v460, %v506
    %vm509 = vcmask 1047559
    %v510 = vsel %vm509, %v464, %v508
    %v511 = vsel %vm497, %v472, %v468
    %v512 = vsel %vm499, %v476, %v511
    %v513 = vsel %vm501, %v480, %v512
    %v514 = vsel %vm503, %v484, %v513
    %v515 = vsel %vm505, %v488, %v514
    %v516 = vsel %vm507, %v492, %v515
    %v517 = vsel %vm509, %v496, %v516
    %vm520 = vcmask 64512
    %v521 = vsel %vm520, %v510, -inf
    %522 = vmax.xlane.f32.xlu0 %v521
    %v523 = vpop.xlane.xlu0 %522
    %v524 = vsel %vm520, %v517, -inf
    %525 = vmax.xlane.f32.xlu0 %v524
    %v526 = vpop.xlane.xlu0 %525
    %v529 = vlaneseq
    %v530 = vshrl.u32 %v529, 7
    %v531 = vsub.s32 0, %v530
    %v532 = vrot.slane %v523, %v531
    %v533 = vlaneseq
    %v534 = vshrl.u32 %v533, 7
    %v535 = vsub.s32 1, %v534
    %v536 = vrot.slane %v523, %v535
    %v537 = vlaneseq
    %v538 = vshrl.u32 %v537, 7
    %v539 = vsub.s32 2, %v538
    %v540 = vrot.slane %v523, %v539
    %v541 = vlaneseq
    %v542 = vshrl.u32 %v541, 7
    %v543 = vsub.s32 3, %v542
    %v544 = vrot.slane %v523, %v543
    %v545 = vlaneseq
    %v546 = vshrl.u32 %v545, 7
    %v547 = vsub.s32 4, %v546
    %v548 = vrot.slane %v523, %v547
    %v549 = vlaneseq
    %v550 = vshrl.u32 %v549, 7
    %v551 = vsub.s32 5, %v550
    %v552 = vrot.slane %v523, %v551
    %v553 = vlaneseq
    %v554 = vshrl.u32 %v553, 7
    %v555 = vsub.s32 6, %v554
    %v556 = vrot.slane %v523, %v555
    %v557 = vlaneseq
    %v558 = vshrl.u32 %v557, 7
    %v559 = vsub.s32 7, %v558
    %v560 = vrot.slane %v523, %v559
    %v561 = vlaneseq
    %v562 = vshrl.u32 %v561, 7
    %v563 = vsub.s32 0, %v562
    %v564 = vrot.slane %v526, %v563
    %v565 = vlaneseq
    %v566 = vshrl.u32 %v565, 7
    %v567 = vsub.s32 1, %v566
    %v568 = vrot.slane %v526, %v567
    %v569 = vlaneseq
    %v570 = vshrl.u32 %v569, 7
    %v571 = vsub.s32 2, %v570
    %v572 = vrot.slane %v526, %v571
    %v573 = vlaneseq
    %v574 = vshrl.u32 %v573, 7
    %v575 = vsub.s32 3, %v574
    %v576 = vrot.slane %v526, %v575
    %v577 = vlaneseq
    %v578 = vshrl.u32 %v577, 7
    %v579 = vsub.s32 4, %v578
    %v580 = vrot.slane %v526, %v579
    %v581 = vlaneseq
    %v582 = vshrl.u32 %v581, 7
    %v583 = vsub.s32 5, %v582
    %v584 = vrot.slane %v526, %v583
    %v585 = vlaneseq
    %v586 = vshrl.u32 %v585, 7
    %v587 = vsub.s32 6, %v586
    %v588 = vrot.slane %v526, %v587
    %v589 = vlaneseq
    %v590 = vshrl.u32 %v589, 7
    %v591 = vsub.s32 7, %v590
    %v592 = vrot.slane %v526, %v591
    %v609 = vsub.f32 %v399, %v532
    %v610 = vsub.f32 %v400, %v536
    %v611 = vsub.f32 %v401, %v540
    %v612 = vsub.f32 %v402, %v544
    %v613 = vsub.f32 %v403, %v548
    %v614 = vsub.f32 %v404, %v552
    %v615 = vsub.f32 %v405, %v556
    %v616 = vsub.f32 %v406, %v560
    %v617 = vsub.f32 %v407, %v564
    %v618 = vsub.f32 %v408, %v568
    %v619 = vsub.f32 %v409, %v572
    %v620 = vsub.f32 %v410, %v576
    %v621 = vsub.f32 %v411, %v580
    %v622 = vsub.f32 %v412, %v584
    %v623 = vsub.f32 %v413, %v588
    %v624 = vsub.f32 %v414, %v592
    %v625 = vmul.f32 %v609, 1.442695
    %v626 = vpow.pop %v625
    %v627 = vmul.f32 %v610, 1.442695
    %v628 = vpow.pop %v627
    %v629 = vmul.f32 %v611, 1.442695
    %v630 = vpow.pop %v629
    %v631 = vmul.f32 %v612, 1.442695
    %v632 = vpow.pop %v631
    %v633 = vmul.f32 %v613, 1.442695
    %v634 = vpow.pop %v633
    %v635 = vmul.f32 %v614, 1.442695
    %v636 = vpow.pop %v635
    %v637 = vmul.f32 %v615, 1.442695
    %v638 = vpow.pop %v637
    %v639 = vmul.f32 %v616, 1.442695
    %v640 = vpow.pop %v639
    %v641 = vmul.f32 %v617, 1.442695
    %v642 = vpow.pop %v641
    %v643 = vmul.f32 %v618, 1.442695
    %v644 = vpow.pop %v643
    %v645 = vmul.f32 %v619, 1.442695
    %v646 = vpow.pop %v645
    %v647 = vmul.f32 %v620, 1.442695
    %v648 = vpow.pop %v647
    %v649 = vmul.f32 %v621, 1.442695
    %v650 = vpow.pop %v649
    %v651 = vmul.f32 %v622, 1.442695
    %v652 = vpow.pop %v651
    %v653 = vmul.f32 %v623, 1.442695
    %v654 = vpow.pop %v653
    %v655 = vmul.f32 %v624, 1.442695
    %v656 = vpow.pop %v655
    %673 = vset.pattern.permute.xlu0 0
    %674 = vperm.xlu0 %673, %v626
    %v675 = vpop.permute.xlu0 %674
    %676 = vset.pattern.permute.xlu0 0
    %677 = vperm.xlu0 %676, %v628
    %v678 = vpop.permute.xlu0 %677
    %679 = vset.pattern.permute.xlu0 0
    %680 = vperm.xlu0 %679, %v630
    %v681 = vpop.permute.xlu0 %680
    %682 = vset.pattern.permute.xlu0 0
    %683 = vperm.xlu0 %682, %v632
    %v684 = vpop.permute.xlu0 %683
    %685 = vset.pattern.permute.xlu0 0
    %686 = vperm.xlu0 %685, %v634
    %v687 = vpop.permute.xlu0 %686
    %688 = vset.pattern.permute.xlu0 0
    %689 = vperm.xlu0 %688, %v636
    %v690 = vpop.permute.xlu0 %689
    %691 = vset.pattern.permute.xlu0 0
    %692 = vperm.xlu0 %691, %v638
    %v693 = vpop.permute.xlu0 %692
    %694 = vset.pattern.permute.xlu0 0
    %695 = vperm.xlu0 %694, %v640
    %v696 = vpop.permute.xlu0 %695
    %697 = vset.pattern.permute.xlu0 0
    %698 = vperm.xlu0 %697, %v642
    %v699 = vpop.permute.xlu0 %698
    %700 = vset.pattern.permute.xlu0 0
    %701 = vperm.xlu0 %700, %v644
    %v702 = vpop.permute.xlu0 %701
    %703 = vset.pattern.permute.xlu0 0
    %704 = vperm.xlu0 %703, %v646
    %v705 = vpop.permute.xlu0 %704
    %706 = vset.pattern.permute.xlu0 0
    %707 = vperm.xlu0 %706, %v648
    %v708 = vpop.permute.xlu0 %707
    %709 = vset.pattern.permute.xlu0 0
    %710 = vperm.xlu0 %709, %v650
    %v711 = vpop.permute.xlu0 %710
    %712 = vset.pattern.permute.xlu0 0
    %713 = vperm.xlu0 %712, %v652
    %v714 = vpop.permute.xlu0 %713
    %715 = vset.pattern.permute.xlu0 0
    %716 = vperm.xlu0 %715, %v654
    %v717 = vpop.permute.xlu0 %716
    %718 = vset.pattern.permute.xlu0 0
    %719 = vperm.xlu0 %718, %v656
    %v720 = vpop.permute.xlu0 %719
    %v721 = vlaneseq
    %v722 = vshrl.u32 %v721, 7
    %v723 = vsub.s32 %v432, %v722
    %v724 = vrot.slane %v675, %v723
    %v725 = vlaneseq
    %v726 = vshrl.u32 %v725, 7
    %v727 = vsub.s32 %v432, %v726
    %v728 = vrot.slane %v678, %v727
    %v729 = vlaneseq
    %v730 = vshrl.u32 %v729, 7
    %v731 = vsub.s32 %v432, %v730
    %v732 = vrot.slane %v681, %v731
    %v733 = vlaneseq
    %v734 = vshrl.u32 %v733, 7
    %v735 = vsub.s32 %v432, %v734
    %v736 = vrot.slane %v684, %v735
    %v737 = vlaneseq
    %v738 = vshrl.u32 %v737, 7
    %v739 = vsub.s32 %v432, %v738
    %v740 = vrot.slane %v687, %v739
    %v741 = vlaneseq
    %v742 = vshrl.u32 %v741, 7
    %v743 = vsub.s32 %v432, %v742
    %v744 = vrot.slane %v690, %v743
    %v745 = vlaneseq
    %v746 = vshrl.u32 %v745, 7
    %v747 = vsub.s32 %v432, %v746
    %v748 = vrot.slane %v693, %v747
    %v749 = vlaneseq
    %v750 = vshrl.u32 %v749, 7
    %v751 = vsub.s32 %v432, %v750
    %v752 = vrot.slane %v696, %v751
    %v753 = vlaneseq
    %v754 = vshrl.u32 %v753, 7
    %v755 = vsub.s32 %v432, %v754
    %v756 = vrot.slane %v699, %v755
    %v757 = vlaneseq
    %v758 = vshrl.u32 %v757, 7
    %v759 = vsub.s32 %v432, %v758
    %v760 = vrot.slane %v702, %v759
    %v761 = vlaneseq
    %v762 = vshrl.u32 %v761, 7
    %v763 = vsub.s32 %v432, %v762
    %v764 = vrot.slane %v705, %v763
    %v765 = vlaneseq
    %v766 = vshrl.u32 %v765, 7
    %v767 = vsub.s32 %v432, %v766
    %v768 = vrot.slane %v708, %v767
    %v769 = vlaneseq
    %v770 = vshrl.u32 %v769, 7
    %v771 = vsub.s32 %v432, %v770
    %v772 = vrot.slane %v711, %v771
    %v773 = vlaneseq
    %v774 = vshrl.u32 %v773, 7
    %v775 = vsub.s32 %v432, %v774
    %v776 = vrot.slane %v714, %v775
    %v777 = vlaneseq
    %v778 = vshrl.u32 %v777, 7
    %v779 = vsub.s32 %v432, %v778
    %v780 = vrot.slane %v717, %v779
    %v781 = vlaneseq
    %v782 = vshrl.u32 %v781, 7
    %v783 = vsub.s32 %v432, %v782
    %v784 = vrot.slane %v720, %v783
    %v785 = vsel %vm497, %v728, %v724
    %v786 = vsel %vm499, %v732, %v785
    %v787 = vsel %vm501, %v736, %v786
    %v788 = vsel %vm503, %v740, %v787
    %v789 = vsel %vm505, %v744, %v788
    %v790 = vsel %vm507, %v748, %v789
    %v791 = vsel %vm509, %v752, %v790
    %v792 = vsel %vm497, %v760, %v756
    %v793 = vsel %vm499, %v764, %v792
    %v794 = vsel %vm501, %v768, %v793
    %v795 = vsel %vm503, %v772, %v794
    %v796 = vsel %vm505, %v776, %v795
    %v797 = vsel %vm507, %v780, %v796
    %v798 = vsel %vm509, %v784, %v797
    %v801 = vsel %vm520, %v791, 0.0
    %802 = vadd.xlane.f32.xlu0 %v801
    %v803 = vpop.xlane.xlu0 %802
    %v804 = vsel %vm520, %v798, 0.0
    %805 = vadd.xlane.f32.xlu0 %v804
    %v806 = vpop.xlane.xlu0 %805
    %v807 = vrcp.pop %v803
    %v808 = vrcp.pop %v806
    %v811 = vlaneseq
    %v812 = vshrl.u32 %v811, 7
    %v813 = vsub.s32 0, %v812
    %v814 = vrot.slane %v807, %v813
    %v815 = vlaneseq
    %v816 = vshrl.u32 %v815, 7
    %v817 = vsub.s32 1, %v816
    %v818 = vrot.slane %v807, %v817
    %v819 = vlaneseq
    %v820 = vshrl.u32 %v819, 7
    %v821 = vsub.s32 2, %v820
    %v822 = vrot.slane %v807, %v821
    %v823 = vlaneseq
    %v824 = vshrl.u32 %v823, 7
    %v825 = vsub.s32 3, %v824
    %v826 = vrot.slane %v807, %v825
    %v827 = vlaneseq
    %v828 = vshrl.u32 %v827, 7
    %v829 = vsub.s32 4, %v828
    %v830 = vrot.slane %v807, %v829
    %v831 = vlaneseq
    %v832 = vshrl.u32 %v831, 7
    %v833 = vsub.s32 5, %v832
    %v834 = vrot.slane %v807, %v833
    %v835 = vlaneseq
    %v836 = vshrl.u32 %v835, 7
    %v837 = vsub.s32 6, %v836
    %v838 = vrot.slane %v807, %v837
    %v839 = vlaneseq
    %v840 = vshrl.u32 %v839, 7
    %v841 = vsub.s32 7, %v840
    %v842 = vrot.slane %v807, %v841
    %v843 = vlaneseq
    %v844 = vshrl.u32 %v843, 7
    %v845 = vsub.s32 0, %v844
    %v846 = vrot.slane %v808, %v845
    %v847 = vlaneseq
    %v848 = vshrl.u32 %v847, 7
    %v849 = vsub.s32 1, %v848
    %v850 = vrot.slane %v808, %v849
    %v851 = vlaneseq
    %v852 = vshrl.u32 %v851, 7
    %v853 = vsub.s32 2, %v852
    %v854 = vrot.slane %v808, %v853
    %v855 = vlaneseq
    %v856 = vshrl.u32 %v855, 7
    %v857 = vsub.s32 3, %v856
    %v858 = vrot.slane %v808, %v857
    %v859 = vlaneseq
    %v860 = vshrl.u32 %v859, 7
    %v861 = vsub.s32 4, %v860
    %v862 = vrot.slane %v808, %v861
    %v863 = vlaneseq
    %v864 = vshrl.u32 %v863, 7
    %v865 = vsub.s32 5, %v864
    %v866 = vrot.slane %v808, %v865
    %v867 = vlaneseq
    %v868 = vshrl.u32 %v867, 7
    %v869 = vsub.s32 6, %v868
    %v870 = vrot.slane %v808, %v869
    %v871 = vlaneseq
    %v872 = vshrl.u32 %v871, 7
    %v873 = vsub.s32 7, %v872
    %v874 = vrot.slane %v808, %v873
    %v891 = vmul.f32 %v626, %v814
    %v892 = vmul.f32 %v628, %v818
    %v893 = vmul.f32 %v630, %v822
    %v894 = vmul.f32 %v632, %v826
    %v895 = vmul.f32 %v634, %v830
    %v896 = vmul.f32 %v636, %v834
    %v897 = vmul.f32 %v638, %v838
    %v898 = vmul.f32 %v640, %v842
    %v899 = vmul.f32 %v642, %v846
    %v900 = vmul.f32 %v644, %v850
    %v901 = vmul.f32 %v646, %v854
    %v902 = vmul.f32 %v648, %v858
    %v903 = vmul.f32 %v650, %v862
    %v904 = vmul.f32 %v652, %v866
    %v905 = vmul.f32 %v654, %v870
    %v906 = vmul.f32 %v656, %v874
    %v907 = vadd.f32 %v891, 0.0
    %v908 = vadd.f32 %v892, 0.0
    %v909 = vadd.f32 %v893, 0.0
    %v910 = vadd.f32 %v894, 0.0
    %v911 = vadd.f32 %v895, 0.0
    %v912 = vadd.f32 %v896, 0.0
    %v913 = vadd.f32 %v897, 0.0
    %v914 = vadd.f32 %v898, 0.0
    %v915 = vadd.f32 %v899, 0.0
    %v916 = vadd.f32 %v900, 0.0
    %v917 = vadd.f32 %v901, 0.0
    %v918 = vadd.f32 %v902, 0.0
    %v919 = vadd.f32 %v903, 0.0
    %v920 = vadd.f32 %v904, 0.0
    %v921 = vadd.f32 %v905, 0.0
    %v922 = vadd.f32 %v906, 0.0
    %v925 = vcombine.high %v152, %v152
    %v927 = vunpack.c.l.s4 1966171168
    %v928 = vunpack.c.0.s8 %v927
    %v929 = vlaneseq
    %v930 = vshrl.u32 %v929, 7
    %v931 = vsub.s32 %v928, %v930
    %v932 = vrot.slane %v152, %v931
    %v934 = vunpack.c.l.s4 1966171168
    %v935 = vunpack.c.0.s8 %v934
    %v936 = vlaneseq
    %v937 = vshrl.u32 %v936, 7
    %v938 = vsub.s32 %v935, %v937
    %v939 = vrot.slane %v925, %v938
    %v940 = vcombine.high %v932, %v932
    %v941 = vcombine.high %v939, %v939
    %v943 = vunpack.c.l.s4 1966171168
    %v944 = vunpack.c.0.s8 %v943
    %v945 = vlaneseq
    %v946 = vshrl.u32 %v945, 7
    %v947 = vsub.s32 %v944, %v946
    %v948 = vrot.slane %v932, %v947
    %v950 = vunpack.c.l.s4 1966171168
    %v951 = vunpack.c.0.s8 %v950
    %v952 = vlaneseq
    %v953 = vshrl.u32 %v952, 7
    %v954 = vsub.s32 %v951, %v953
    %v955 = vrot.slane %v939, %v954
    %v957 = vunpack.c.l.s4 1966171168
    %v958 = vunpack.c.0.s8 %v957
    %v959 = vlaneseq
    %v960 = vshrl.u32 %v959, 7
    %v961 = vsub.s32 %v958, %v960
    %v962 = vrot.slane %v940, %v961
    %v964 = vunpack.c.l.s4 1966171168
    %v965 = vunpack.c.0.s8 %v964
    %v966 = vlaneseq
    %v967 = vshrl.u32 %v966, 7
    %v968 = vsub.s32 %v965, %v967
    %v969 = vrot.slane %v941, %v968
    %v970 = vcombine.high %v948, %v948
    %v971 = vcombine.high %v955, %v955
    %v972 = vcombine.high %v962, %v962
    %v973 = vcombine.high %v969, %v969
    %v974 = vcombine.high %v153, %v153
    %v976 = vunpack.c.l.s4 1966171168
    %v977 = vunpack.c.0.s8 %v976
    %v978 = vlaneseq
    %v979 = vshrl.u32 %v978, 7
    %v980 = vsub.s32 %v977, %v979
    %v981 = vrot.slane %v153, %v980
    %v983 = vunpack.c.l.s4 1966171168
    %v984 = vunpack.c.0.s8 %v983
    %v985 = vlaneseq
    %v986 = vshrl.u32 %v985, 7
    %v987 = vsub.s32 %v984, %v986
    %v988 = vrot.slane %v974, %v987
    %v989 = vcombine.high %v981, %v981
    %v990 = vcombine.high %v988, %v988
    %v992 = vunpack.c.l.s4 1966171168
    %v993 = vunpack.c.0.s8 %v992
    %v994 = vlaneseq
    %v995 = vshrl.u32 %v994, 7
    %v996 = vsub.s32 %v993, %v995
    %v997 = vrot.slane %v981, %v996
    %v999 = vunpack.c.l.s4 1966171168
    %v1000 = vunpack.c.0.s8 %v999
    %v1001 = vlaneseq
    %v1002 = vshrl.u32 %v1001, 7
    %v1003 = vsub.s32 %v1000, %v1002
    %v1004 = vrot.slane %v988, %v1003
    %v1006 = vunpack.c.l.s4 1966171168
    %v1007 = vunpack.c.0.s8 %v1006
    %v1008 = vlaneseq
    %v1009 = vshrl.u32 %v1008, 7
    %v1010 = vsub.s32 %v1007, %v1009
    %v1011 = vrot.slane %v989, %v1010
    %v1013 = vunpack.c.l.s4 1966171168
    %v1014 = vunpack.c.0.s8 %v1013
    %v1015 = vlaneseq
    %v1016 = vshrl.u32 %v1015, 7
    %v1017 = vsub.s32 %v1014, %v1016
    %v1018 = vrot.slane %v990, %v1017
    %v1019 = vcombine.high %v997, %v997
    %v1020 = vcombine.high %v1004, %v1004
    %v1021 = vcombine.high %v1011, %v1011
    %v1022 = vcombine.high %v1018, %v1018
    %1024 = vset.pattern.permute.xlu0 0
    %1025 = vperm.xlu0 %1024, %v907
    %v1026 = vpop.permute.xlu0 %1025
    %1029 = vset.pattern.permute.xlu0 0
    %1030 = vperm.xlu0 %1029, %v908
    %v1031 = vpop.permute.xlu0 %1030
    %1034 = vset.pattern.permute.xlu0 0
    %1035 = vperm.xlu0 %1034, %v909
    %v1036 = vpop.permute.xlu0 %1035
    %1039 = vset.pattern.permute.xlu0 0
    %1040 = vperm.xlu0 %1039, %v910
    %v1041 = vpop.permute.xlu0 %1040
    %1044 = vset.pattern.permute.xlu0 0
    %1045 = vperm.xlu0 %1044, %v911
    %v1046 = vpop.permute.xlu0 %1045
    %1049 = vset.pattern.permute.xlu0 0
    %1050 = vperm.xlu0 %1049, %v912
    %v1051 = vpop.permute.xlu0 %1050
    %1054 = vset.pattern.permute.xlu0 0
    %1055 = vperm.xlu0 %1054, %v913
    %v1056 = vpop.permute.xlu0 %1055
    %1059 = vset.pattern.permute.xlu0 0
    %1060 = vperm.xlu0 %1059, %v914
    %v1061 = vpop.permute.xlu0 %1060
    %1064 = vset.pattern.permute.xlu0 0
    %1065 = vperm.xlu0 %1064, %v915
    %v1066 = vpop.permute.xlu0 %1065
    %1069 = vset.pattern.permute.xlu0 0
    %1070 = vperm.xlu0 %1069, %v916
    %v1071 = vpop.permute.xlu0 %1070
    %1074 = vset.pattern.permute.xlu0 0
    %1075 = vperm.xlu0 %1074, %v917
    %v1076 = vpop.permute.xlu0 %1075
    %1079 = vset.pattern.permute.xlu0 0
    %1080 = vperm.xlu0 %1079, %v918
    %v1081 = vpop.permute.xlu0 %1080
    %1084 = vset.pattern.permute.xlu0 0
    %1085 = vperm.xlu0 %1084, %v919
    %v1086 = vpop.permute.xlu0 %1085
    %1089 = vset.pattern.permute.xlu0 0
    %1090 = vperm.xlu0 %1089, %v920
    %v1091 = vpop.permute.xlu0 %1090
    %1094 = vset.pattern.permute.xlu0 0
    %1095 = vperm.xlu0 %1094, %v921
    %v1096 = vpop.permute.xlu0 %1095
    %1099 = vset.pattern.permute.xlu0 0
    %1100 = vperm.xlu0 %1099, %v922
    %v1101 = vpop.permute.xlu0 %1100
    %v1103 = vlaneseq
    %v1104 = vshrl.u32 %v1103, 7
    %v1105 = vsub.s32 0, %v1104
    %v1106 = vrot.slane %v948, %v1105
    %v1107 = vlaneseq
    %v1108 = vshrl.u32 %v1107, 7
    %v1109 = vsub.s32 0, %v1108
    %v1110 = vrot.slane %v962, %v1109
    %v1111 = vlaneseq
    %v1112 = vshrl.u32 %v1111, 7
    %v1113 = vsub.s32 0, %v1112
    %v1114 = vrot.slane %v970, %v1113
    %v1115 = vlaneseq
    %v1116 = vshrl.u32 %v1115, 7
    %v1117 = vsub.s32 0, %v1116
    %v1118 = vrot.slane %v972, %v1117
    %v1119 = vlaneseq
    %v1120 = vshrl.u32 %v1119, 7
    %v1121 = vsub.s32 0, %v1120
    %v1122 = vrot.slane %v955, %v1121
    %v1123 = vlaneseq
    %v1124 = vshrl.u32 %v1123, 7
    %v1125 = vsub.s32 0, %v1124
    %v1126 = vrot.slane %v969, %v1125
    %v1127 = vlaneseq
    %v1128 = vshrl.u32 %v1127, 7
    %v1129 = vsub.s32 0, %v1128
    %v1130 = vrot.slane %v971, %v1129
    %v1131 = vlaneseq
    %v1132 = vshrl.u32 %v1131, 7
    %v1133 = vsub.s32 0, %v1132
    %v1134 = vrot.slane %v973, %v1133
    %v1135 = vlaneseq
    %v1136 = vshrl.u32 %v1135, 7
    %v1137 = vsub.s32 0, %v1136
    %v1138 = vrot.slane %v997, %v1137
    %v1139 = vlaneseq
    %v1140 = vshrl.u32 %v1139, 7
    %v1141 = vsub.s32 0, %v1140
    %v1142 = vrot.slane %v1011, %v1141
    %v1143 = vlaneseq
    %v1144 = vshrl.u32 %v1143, 7
    %v1145 = vsub.s32 0, %v1144
    %v1146 = vrot.slane %v1019, %v1145
    %v1147 = vlaneseq
    %v1148 = vshrl.u32 %v1147, 7
    %v1149 = vsub.s32 0, %v1148
    %v1150 = vrot.slane %v1021, %v1149
    %v1151 = vlaneseq
    %v1152 = vshrl.u32 %v1151, 7
    %v1153 = vsub.s32 0, %v1152
    %v1154 = vrot.slane %v1004, %v1153
    %v1155 = vlaneseq
    %v1156 = vshrl.u32 %v1155, 7
    %v1157 = vsub.s32 0, %v1156
    %v1158 = vrot.slane %v1018, %v1157
    %v1159 = vlaneseq
    %v1160 = vshrl.u32 %v1159, 7
    %v1161 = vsub.s32 0, %v1160
    %v1162 = vrot.slane %v1020, %v1161
    %v1163 = vlaneseq
    %v1164 = vshrl.u32 %v1163, 7
    %v1165 = vsub.s32 0, %v1164
    %v1166 = vrot.slane %v1022, %v1165
    %v1183 = vmul.f32 %v1026, %v1106
    %v1184 = vmul.f32 %v1031, %v1110
    %v1185 = vmul.f32 %v1036, %v1114
    %v1186 = vmul.f32 %v1041, %v1118
    %v1187 = vmul.f32 %v1046, %v1122
    %v1188 = vmul.f32 %v1051, %v1126
    %v1189 = vmul.f32 %v1056, %v1130
    %v1190 = vmul.f32 %v1061, %v1134
    %v1191 = vmul.f32 %v1066, %v1138
    %v1192 = vmul.f32 %v1071, %v1142
    %v1193 = vmul.f32 %v1076, %v1146
    %v1194 = vmul.f32 %v1081, %v1150
    %v1195 = vmul.f32 %v1086, %v1154
    %v1196 = vmul.f32 %v1091, %v1158
    %v1197 = vmul.f32 %v1096, %v1162
    %v1198 = vmul.f32 %v1101, %v1166
    %v1199 = vadd.f32 %v134, %v1183
    %v1200 = vadd.f32 %v135, %v1184
    %v1201 = vadd.f32 %v136, %v1185
    %v1202 = vadd.f32 %v137, %v1186
    %v1203 = vadd.f32 %v138, %v1187
    %v1204 = vadd.f32 %v139, %v1188
    %v1205 = vadd.f32 %v140, %v1189
    %v1206 = vadd.f32 %v141, %v1190
    %v1207 = vadd.f32 %v142, %v1191
    %v1208 = vadd.f32 %v143, %v1192
    %v1209 = vadd.f32 %v144, %v1193
    %v1210 = vadd.f32 %v145, %v1194
    %v1211 = vadd.f32 %v146, %v1195
    %v1212 = vadd.f32 %v147, %v1196
    %v1213 = vadd.f32 %v148, %v1197
    %v1214 = vadd.f32 %v149, %v1198
    %v1215 = vpack.c.bf16 %v1200, %v1199
    %v1216 = vpack.c.bf16 %v1202, %v1201
    %v1217 = vpack.c.bf16 %v1204, %v1203
    %v1218 = vpack.c.bf16 %v1206, %v1205
    %v1219 = vpack.c.bf16 %v1208, %v1207
    %v1220 = vpack.c.bf16 %v1210, %v1209
    %v1221 = vpack.c.bf16 %v1212, %v1211
    %v1222 = vpack.c.bf16 %v1214, %v1213
    %v1223 = vld [vmem:[#allocation8] sm:$0xff]
    %v1224 = vld [vmem:[#allocation8 + $0x8] sm:$0xff]
    %v1225 = vld [vmem:[#allocation8 + $0x10] sm:$0xff]
    %v1226 = vld [vmem:[#allocation8 + $0x18] sm:$0xff]
    %v1227 = vld [vmem:[#allocation10] sm:$0x3]
    %v1229 = vlaneseq
    %v1230 = vshrl.u32 %v1229, 7
    %v1231 = vsub.s32 0, %v1230
    %v1232 = vrot.slane %v1227, %v1231
    %v1233 = vlaneseq
    %v1234 = vshrl.u32 %v1233, 7
    %v1235 = vsub.s32 1, %v1234
    %v1236 = vrot.slane %v1227, %v1235
    %v1243 = vunpack.c.l.b16 %v1223
    %v1244 = vunpack.c.h.b16 %v1223
    %v1245 = vunpack.c.l.b16 %v1224
    %v1246 = vunpack.c.h.b16 %v1224
    %v1247 = vunpack.c.l.b16 %v1225
    %v1248 = vunpack.c.h.b16 %v1225
    %v1249 = vunpack.c.l.b16 %v1226
    %v1250 = vunpack.c.h.b16 %v1226
    %v1251 = vpack.c.b16 %v1245, %v1243
    %v1252 = vpack.c.b16 %v1246, %v1244
    %v1253 = vpack.c.b16 %v1249, %v1247
    %v1254 = vpack.c.b16 %v1250, %v1248
    %v1260 = vsel %vm350, %v1215, 0
    %v1263 = vsel %vm350, %v1216, 0
    %v1266 = vsel %vm350, %v1217, 0
    %v1269 = vsel %vm350, %v1218, 0
    %v1272 = vsel %vm350, %v1219, 0
    %v1275 = vsel %vm350, %v1220, 0
    %v1278 = vsel %vm350, %v1221, 0
    %v1281 = vsel %vm350, %v1222, 0
    %1283 = vmatprep.subr.bf16.mxu0 %v1252
    %1284 = vmatpush1.bf16.msra.mxu0 %v1251
    %1285 = vmatprep.subr.bf16.mxu0 %v1254
    %1286 = vmatpush1.bf16.msra.mxu0 %v1253
    %1287 = vmatprep.subr.bf16.mxu0 0
    %1288 = vmatpush1.bf16.msra.mxu0 0
    %1289 = vmatprep.subr.bf16.mxu0 0
    %1290 = vmatpush1.bf16.msra.mxu0 0
    %1291 = vmatprep.subr.bf16.mxu0 0
    %1292 = vmatpush1.bf16.msra.mxu0 0
    %1293 = vmatprep.subr.bf16.mxu0 0
    %1294 = vmatpush1.bf16.msra.mxu0 0
    %1295 = vmatprep.subr.bf16.mxu0 0
    %1296 = vmatpush1.bf16.msra.mxu0 0
    %1297 = vmatprep.subr.bf16.mxu0 0
    %1298 = vmatpush1.bf16.msra.mxu0 0
    %1299 = vmatprep.subr.bf16.mxu0 0
    %1300 = vmatpush1.bf16.msra.mxu0 0
    %1301 = vmatprep.subr.bf16.mxu0 0
    %1302 = vmatpush1.bf16.msra.mxu0 0
    %1303 = vmatprep.subr.bf16.mxu0 0
    %1304 = vmatpush1.bf16.msra.mxu0 0
    %1305 = vmatprep.subr.bf16.mxu0 0
    %1306 = vmatpush1.bf16.msra.mxu0 0
    %1307 = vmatprep.subr.bf16.mxu0 0
    %1308 = vmatpush1.bf16.msra.mxu0 0
    %1309 = vmatprep.subr.bf16.mxu0 0
    %1310 = vmatpush1.bf16.msra.mxu0 0
    %1311 = vmatprep.subr.bf16.mxu0 0
    %1312 = vmatpush1.bf16.msra.mxu0 0
    %1313 = vmatprep.subr.bf16.mxu0 0
    %1314 = vmatpush1.bf16.msra.mxu0 0
    %1315 = vmatprep.mubr.bf16.mxu0 0
    %1316 = vmatmul.mubr.bf16.gmra.mrb[0].mxu0 %v1260
    %v1317 = vpop.f32.mrb[0].mxu0
    %v1318 = vadd.f32 %v1232, %v1317
    %v1319 = vpop.f32.mrb[0].mxu0
    %v1320 = vadd.f32 %v1236, %v1319
    %v1321 = vpop.f32.mrb[0].mxu0
    %v1322 = vadd.f32 %v1232, %v1321
    %v1323 = vpop.f32.mrb[0].mxu0
    %v1324 = vadd.f32 %v1236, %v1323
    %1325 = vmatprep.mubr.bf16.mxu0 0
    %1326 = vmatmul.mubr.bf16.gmra.mrb[0].mxu0 %v1263
    %v1327 = vpop.f32.mrb[0].mxu0
    %v1328 = vadd.f32 %v1232, %v1327
    %v1329 = vpop.f32.mrb[0].mxu0
    %v1330 = vadd.f32 %v1236, %v1329
    %v1331 = vpop.f32.mrb[0].mxu0
    %v1332 = vadd.f32 %v1232, %v1331
    %v1333 = vpop.f32.mrb[0].mxu0
    %v1334 = vadd.f32 %v1236, %v1333
    %1335 = vmatprep.mubr.bf16.mxu0 0
    %1336 = vmatmul.mubr.bf16.gmra.mrb[0].mxu0 %v1266
    %v1337 = vpop.f32.mrb[0].mxu0
    %v1338 = vadd.f32 %v1232, %v1337
    %v1339 = vpop.f32.mrb[0].mxu0
    %v1340 = vadd.f32 %v1236, %v1339
    %v1341 = vpop.f32.mrb[0].mxu0
    %v1342 = vadd.f32 %v1232, %v1341
    %v1343 = vpop.f32.mrb[0].mxu0
    %v1344 = vadd.f32 %v1236, %v1343
    %1345 = vmatprep.mubr.bf16.mxu0 0
    %1346 = vmatmul.mubr.bf16.gmra.mrb[0].mxu0 %v1269
    %v1347 = vpop.f32.mrb[0].mxu0
    %v1348 = vadd.f32 %v1232, %v1347
    %v1349 = vpop.f32.mrb[0].mxu0
    %v1350 = vadd.f32 %v1236, %v1349
    %v1351 = vpop.f32.mrb[0].mxu0
    %v1352 = vadd.f32 %v1232, %v1351
    %v1353 = vpop.f32.mrb[0].mxu0
    %v1354 = vadd.f32 %v1236, %v1353
    %1355 = vmatprep.mubr.bf16.mxu0 0
    %1356 = vmatmul.mubr.bf16.gmra.mrb[0].mxu0 %v1272
    %v1357 = vpop.f32.mrb[0].mxu0
    %v1358 = vadd.f32 %v1232, %v1357
    %v1359 = vpop.f32.mrb[0].mxu0
    %v1360 = vadd.f32 %v1236, %v1359
    %v1361 = vpop.f32.mrb[0].mxu0
    %v1362 = vadd.f32 %v1232, %v1361
    %v1363 = vpop.f32.mrb[0].mxu0
    %v1364 = vadd.f32 %v1236, %v1363
    %1365 = vmatprep.mubr.bf16.mxu0 0
    %1366 = vmatmul.mubr.bf16.gmra.mrb[0].mxu0 %v1275
    %v1367 = vpop.f32.mrb[0].mxu0
    %v1368 = vadd.f32 %v1232, %v1367
    %v1369 = vpop.f32.mrb[0].mxu0
    %v1370 = vadd.f32 %v1236, %v1369
    %v1371 = vpop.f32.mrb[0].mxu0
    %v1372 = vadd.f32 %v1232, %v1371
    %v1373 = vpop.f32.mrb[0].mxu0
    %v1374 = vadd.f32 %v1236, %v1373
    %1375 = vmatprep.mubr.bf16.mxu0 0
    %1376 = vmatmul.mubr.bf16.gmra.mrb[0].mxu0 %v1278
    %v1377 = vpop.f32.mrb[0].mxu0
    %v1378 = vadd.f32 %v1232, %v1377
    %v1379 = vpop.f32.mrb[0].mxu0
    %v1380 = vadd.f32 %v1236, %v1379
    %v1381 = vpop.f32.mrb[0].mxu0
    %v1382 = vadd.f32 %v1232, %v1381
    %v1383 = vpop.f32.mrb[0].mxu0
    %v1384 = vadd.f32 %v1236, %v1383
    %1385 = vmatprep.mubr.bf16.mxu0 0
    %1386 = vmatmul.mubr.bf16.gmra.mrb[0].mxu0 %v1281
    %v1387 = vpop.f32.mrb[0].mxu0
    %v1388 = vadd.f32 %v1232, %v1387
    %v1389 = vpop.f32.mrb[0].mxu0
    %v1390 = vadd.f32 %v1236, %v1389
    %v1391 = vpop.f32.mrb[0].mxu0
    %v1392 = vadd.f32 %v1232, %v1391
    %v1393 = vpop.f32.mrb[0].mxu0
    %v1394 = vadd.f32 %v1236, %v1393
    %1395 = vdwg.mxu0
    %v1396 = vmax.f32 %v1318, 0.0
    %v1397 = vmax.f32 %v1320, 0.0
    %v1398 = vmax.f32 %v1322, 0.0
    %v1399 = vmax.f32 %v1324, 0.0
    %v1400 = vmax.f32 %v1328, 0.0
    %v1401 = vmax.f32 %v1330, 0.0
    %v1402 = vmax.f32 %v1332, 0.0
    %v1403 = vmax.f32 %v1334, 0.0
    %v1404 = vmax.f32 %v1338, 0.0
    %v1405 = vmax.f32 %v1340, 0.0
    %v1406 = vmax.f32 %v1342, 0.0
    %v1407 = vmax.f32 %v1344, 0.0
    %v1408 = vmax.f32 %v1348, 0.0
    %v1409 = vmax.f32 %v1350, 0.0
    %v1410 = vmax.f32 %v1352, 0.0
    %v1411 = vmax.f32 %v1354, 0.0
    %v1412 = vmax.f32 %v1358, 0.0
    %v1413 = vmax.f32 %v1360, 0.0
    %v1414 = vmax.f32 %v1362, 0.0
    %v1415 = vmax.f32 %v1364, 0.0
    %v1416 = vmax.f32 %v1368, 0.0
    %v1417 = vmax.f32 %v1370, 0.0
    %v1418 = vmax.f32 %v1372, 0.0
    %v1419 = vmax.f32 %v1374, 0.0
    %v1420 = vmax.f32 %v1378, 0.0
    %v1421 = vmax.f32 %v1380, 0.0
    %v1422 = vmax.f32 %v1382, 0.0
    %v1423 = vmax.f32 %v1384, 0.0
    %v1424 = vmax.f32 %v1388, 0.0
    %v1425 = vmax.f32 %v1390, 0.0
    %v1426 = vmax.f32 %v1392, 0.0
    %v1427 = vmax.f32 %v1394, 0.0
    %v1428 = vpack.c.bf16 %v1398, %v1396
    %v1429 = vpack.c.bf16 %v1399, %v1397
    %v1430 = vpack.c.bf16 %v1402, %v1400
    %v1431 = vpack.c.bf16 %v1403, %v1401
    %v1432 = vpack.c.bf16 %v1406, %v1404
    %v1433 = vpack.c.bf16 %v1407, %v1405
    %v1434 = vpack.c.bf16 %v1410, %v1408
    %v1435 = vpack.c.bf16 %v1411, %v1409
    %v1436 = vpack.c.bf16 %v1414, %v1412
    %v1437 = vpack.c.bf16 %v1415, %v1413
    %v1438 = vpack.c.bf16 %v1418, %v1416
    %v1439 = vpack.c.bf16 %v1419, %v1417
    %v1440 = vpack.c.bf16 %v1422, %v1420
    %v1441 = vpack.c.bf16 %v1423, %v1421
    %v1442 = vpack.c.bf16 %v1426, %v1424
    %v1443 = vpack.c.bf16 %v1427, %v1425
    %v1444 = vld [vmem:[#allocation11] sm:$0xf]
    %v1445 = vld [vmem:[#allocation11 + $0x4] sm:$0xf]
    %v1446 = vld [vmem:[#allocation11 + $0x8] sm:$0xf]
    %v1447 = vld [vmem:[#allocation11 + $0xc] sm:$0xf]
    %v1448 = vld [vmem:[#allocation11 + $0x10] sm:$0xf]
    %v1449 = vld [vmem:[#allocation11 + $0x14] sm:$0xf]
    %v1450 = vld [vmem:[#allocation11 + $0x18] sm:$0xf]
    %v1451 = vld [vmem:[#allocation11 + $0x1c] sm:$0xf]
    %v1452 = vld [vmem:[#allocation11 + $0x20] sm:$0xf]
    %v1453 = vld [vmem:[#allocation11 + $0x24] sm:$0xf]
    %v1454 = vld [vmem:[#allocation11 + $0x28] sm:$0xf]
    %v1455 = vld [vmem:[#allocation11 + $0x2c] sm:$0xf]
    %v1456 = vld [vmem:[#allocation11 + $0x30] sm:$0xf]
    %v1457 = vld [vmem:[#allocation11 + $0x34] sm:$0xf]
    %v1458 = vld [vmem:[#allocation11 + $0x38] sm:$0xf]
    %v1459 = vld [vmem:[#allocation11 + $0x3c] sm:$0xf]
    %v1460 = vld [vmem:[#allocation11 + $0x40] sm:$0xf]
    %v1461 = vld [vmem:[#allocation11 + $0x44] sm:$0xf]
    %v1462 = vld [vmem:[#allocation11 + $0x48] sm:$0xf]
    %v1463 = vld [vmem:[#allocation11 + $0x4c] sm:$0xf]
    %v1464 = vld [vmem:[#allocation11 + $0x50] sm:$0xf]
    %v1465 = vld [vmem:[#allocation11 + $0x54] sm:$0xf]
    %v1466 = vld [vmem:[#allocation11 + $0x58] sm:$0xf]
    %v1467 = vld [vmem:[#allocation11 + $0x5c] sm:$0xf]
    %v1468 = vld [vmem:[#allocation11 + $0x60] sm:$0xf]
    %v1469 = vld [vmem:[#allocation11 + $0x64] sm:$0xf]
    %v1470 = vld [vmem:[#allocation11 + $0x68] sm:$0xf]
    %v1471 = vld [vmem:[#allocation11 + $0x6c] sm:$0xf]
    %v1472 = vld [vmem:[#allocation11 + $0x70] sm:$0xf]
    %v1473 = vld [vmem:[#allocation11 + $0x74] sm:$0xf]
    %v1474 = vld [vmem:[#allocation11 + $0x78] sm:$0xf]
    %v1475 = vld [vmem:[#allocation11 + $0x7c] sm:$0xf]
    %v1476 = vld [vmem:[#allocation13] sm:$0x1]
    %v1478 = vlaneseq
    %v1479 = vshrl.u32 %v1478, 7
    %v1480 = vsub.s32 0, %v1479
    %v1481 = vrot.slane %v1476, %v1480
    %v1515 = vunpack.c.l.b16 %v1444
    %v1516 = vunpack.c.l.b16 %v1445
    %v1517 = vunpack.c.l.b16 %v1446
    %v1518 = vunpack.c.l.b16 %v1447
    %v1519 = vunpack.c.l.b16 %v1448
    %v1520 = vunpack.c.l.b16 %v1449
    %v1521 = vunpack.c.l.b16 %v1450
    %v1522 = vunpack.c.l.b16 %v1451
    %v1523 = vunpack.c.l.b16 %v1452
    %v1524 = vunpack.c.l.b16 %v1453
    %v1525 = vunpack.c.l.b16 %v1454
    %v1526 = vunpack.c.l.b16 %v1455
    %v1527 = vunpack.c.l.b16 %v1456
    %v1528 = vunpack.c.l.b16 %v1457
    %v1529 = vunpack.c.l.b16 %v1458
    %v1530 = vunpack.c.l.b16 %v1459
    %v1531 = vunpack.c.l.b16 %v1460
    %v1532 = vunpack.c.l.b16 %v1461
    %v1533 = vunpack.c.l.b16 %v1462
    %v1534 = vunpack.c.l.b16 %v1463
    %v1535 = vunpack.c.l.b16 %v1464
    %v1536 = vunpack.c.l.b16 %v1465
    %v1537 = vunpack.c.l.b16 %v1466
    %v1538 = vunpack.c.l.b16 %v1467
    %v1539 = vunpack.c.l.b16 %v1468
    %v1540 = vunpack.c.l.b16 %v1469
    %v1541 = vunpack.c.l.b16 %v1470
    %v1542 = vunpack.c.l.b16 %v1471
    %v1543 = vunpack.c.l.b16 %v1472
    %v1544 = vunpack.c.l.b16 %v1473
    %v1545 = vunpack.c.l.b16 %v1474
    %v1546 = vunpack.c.l.b16 %v1475
    %v1547 = vpack.c.b16 %v1516, %v1515
    %v1548 = vpack.c.b16 %v1518, %v1517
    %v1549 = vpack.c.b16 %v1520, %v1519
    %v1550 = vpack.c.b16 %v1522, %v1521
    %v1551 = vpack.c.b16 %v1524, %v1523
    %v1552 = vpack.c.b16 %v1526, %v1525
    %v1553 = vpack.c.b16 %v1528, %v1527
    %v1554 = vpack.c.b16 %v1530, %v1529
    %v1555 = vpack.c.b16 %v1532, %v1531
    %v1556 = vpack.c.b16 %v1534, %v1533
    %v1557 = vpack.c.b16 %v1536, %v1535
    %v1558 = vpack.c.b16 %v1538, %v1537
    %v1559 = vpack.c.b16 %v1540, %v1539
    %v1560 = vpack.c.b16 %v1542, %v1541
    %v1561 = vpack.c.b16 %v1544, %v1543
    %v1562 = vpack.c.b16 %v1546, %v1545
    %1579 = vmatprep.subr.bf16.mxu0 0
    %1580 = vmatpush1.bf16.msra.mxu0 %v1547
    %1581 = vmatprep.subr.bf16.mxu0 0
    %1582 = vmatpush1.bf16.msra.mxu0 %v1548
    %1583 = vmatprep.subr.bf16.mxu0 0
    %1584 = vmatpush1.bf16.msra.mxu0 %v1549
    %1585 = vmatprep.subr.bf16.mxu0 0
    %1586 = vmatpush1.bf16.msra.mxu0 %v1550
    %1587 = vmatprep.subr.bf16.mxu0 0
    %1588 = vmatpush1.bf16.msra.mxu0 %v1551
    %1589 = vmatprep.subr.bf16.mxu0 0
    %1590 = vmatpush1.bf16.msra.mxu0 %v1552
    %1591 = vmatprep.subr.bf16.mxu0 0
    %1592 = vmatpush1.bf16.msra.mxu0 %v1553
    %1593 = vmatprep.subr.bf16.mxu0 0
    %1594 = vmatpush1.bf16.msra.mxu0 %v1554
    %1595 = vmatprep.subr.bf16.mxu0 0
    %1596 = vmatpush1.bf16.msra.mxu0 %v1555
    %1597 = vmatprep.subr.bf16.mxu0 0
    %1598 = vmatpush1.bf16.msra.mxu0 %v1556
    %1599 = vmatprep.subr.bf16.mxu0 0
    %1600 = vmatpush1.bf16.msra.mxu0 %v1557
    %1601 = vmatprep.subr.bf16.mxu0 0
    %1602 = vmatpush1.bf16.msra.mxu0 %v1558
    %1603 = vmatprep.subr.bf16.mxu0 0
    %1604 = vmatpush1.bf16.msra.mxu0 %v1559
    %1605 = vmatprep.subr.bf16.mxu0 0
    %1606 = vmatpush1.bf16.msra.mxu0 %v1560
    %1607 = vmatprep.subr.bf16.mxu0 0
    %1608 = vmatpush1.bf16.msra.mxu0 %v1561
    %1609 = vmatprep.subr.bf16.mxu0 0
    %1610 = vmatpush1.bf16.msra.mxu0 %v1562
    %1611 = vmatprep.mubr.bf16.mxu0 %v1429
    %1612 = vmatmul.mubr.bf16.gmra.mrb[0].mxu0 %v1428
    %v1613 = vpop.f32.mrb[0].mxu0
    %v1614 = vadd.f32 %v1481, %v1613
    %v1615 = vpop.f32.mrb[0].mxu0
    %v1616 = vpop.f32.mrb[0].mxu0
    %v1617 = vadd.f32 %v1481, %v1616
    %v1618 = vpop.f32.mrb[0].mxu0
    %1619 = vmatprep.mubr.bf16.mxu0 %v1431
    %1620 = vmatmul.mubr.bf16.gmra.mrb[0].mxu0 %v1430
    %v1621 = vpop.f32.mrb[0].mxu0
    %v1622 = vadd.f32 %v1481, %v1621
    %v1623 = vpop.f32.mrb[0].mxu0
    %v1624 = vpop.f32.mrb[0].mxu0
    %v1625 = vadd.f32 %v1481, %v1624
    %v1626 = vpop.f32.mrb[0].mxu0
    %1627 = vmatprep.mubr.bf16.mxu0 %v1433
    %1628 = vmatmul.mubr.bf16.gmra.mrb[0].mxu0 %v1432
    %v1629 = vpop.f32.mrb[0].mxu0
    %v1630 = vadd.f32 %v1481, %v1629
    %v1631 = vpop.f32.mrb[0].mxu0
    %v1632 = vpop.f32.mrb[0].mxu0
    %v1633 = vadd.f32 %v1481, %v1632
    %v1634 = vpop.f32.mrb[0].mxu0
    %1635 = vmatprep.mubr.bf16.mxu0 %v1435
    %1636 = vmatmul.mubr.bf16.gmra.mrb[0].mxu0 %v1434
    %v1637 = vpop.f32.mrb[0].mxu0
    %v1638 = vadd.f32 %v1481, %v1637
    %v1639 = vpop.f32.mrb[0].mxu0
    %v1640 = vpop.f32.mrb[0].mxu0
    %v1641 = vadd.f32 %v1481, %v1640
    %v1642 = vpop.f32.mrb[0].mxu0
    %1643 = vmatprep.mubr.bf16.mxu0 %v1437
    %1644 = vmatmul.mubr.bf16.gmra.mrb[0].mxu0 %v1436
    %v1645 = vpop.f32.mrb[0].mxu0
    %v1646 = vadd.f32 %v1481, %v1645
    %v1647 = vpop.f32.mrb[0].mxu0
    %v1648 = vpop.f32.mrb[0].mxu0
    %v1649 = vadd.f32 %v1481, %v1648
    %v1650 = vpop.f32.mrb[0].mxu0
    %1651 = vmatprep.mubr.bf16.mxu0 %v1439
    %1652 = vmatmul.mubr.bf16.gmra.mrb[0].mxu0 %v1438
    %v1653 = vpop.f32.mrb[0].mxu0
    %v1654 = vadd.f32 %v1481, %v1653
    %v1655 = vpop.f32.mrb[0].mxu0
    %v1656 = vpop.f32.mrb[0].mxu0
    %v1657 = vadd.f32 %v1481, %v1656
    %v1658 = vpop.f32.mrb[0].mxu0
    %1659 = vmatprep.mubr.bf16.mxu0 %v1441
    %1660 = vmatmul.mubr.bf16.gmra.mrb[0].mxu0 %v1440
    %v1661 = vpop.f32.mrb[0].mxu0
    %v1662 = vadd.f32 %v1481, %v1661
    %v1663 = vpop.f32.mrb[0].mxu0
    %v1664 = vpop.f32.mrb[0].mxu0
    %v1665 = vadd.f32 %v1481, %v1664
    %v1666 = vpop.f32.mrb[0].mxu0
    %1667 = vmatprep.mubr.bf16.mxu0 %v1443
    %1668 = vmatmul.mubr.bf16.gmra.mrb[0].mxu0 %v1442
    %v1669 = vpop.f32.mrb[0].mxu0
    %v1670 = vadd.f32 %v1481, %v1669
    %v1671 = vpop.f32.mrb[0].mxu0
    %v1672 = vpop.f32.mrb[0].mxu0
    %v1673 = vadd.f32 %v1481, %v1672
    %v1674 = vpop.f32.mrb[0].mxu0
    %1675 = vdwg.mxu0
    %v1676 = vmax.f32 %v1614, 0.0
    %v1677 = vmax.f32 %v1617, 0.0
    %v1678 = vmax.f32 %v1622, 0.0
    %v1679 = vmax.f32 %v1625, 0.0
    %v1680 = vmax.f32 %v1630, 0.0
    %v1681 = vmax.f32 %v1633, 0.0
    %v1682 = vmax.f32 %v1638, 0.0
    %v1683 = vmax.f32 %v1641, 0.0
    %v1684 = vmax.f32 %v1646, 0.0
    %v1685 = vmax.f32 %v1649, 0.0
    %v1686 = vmax.f32 %v1654, 0.0
    %v1687 = vmax.f32 %v1657, 0.0
    %v1688 = vmax.f32 %v1662, 0.0
    %v1689 = vmax.f32 %v1665, 0.0
    %v1690 = vmax.f32 %v1670, 0.0
    %v1691 = vmax.f32 %v1673, 0.0
    %v1692 = vld [vmem:[#allocation14] sm:$0x1]
    %v1694 = vlaneseq
    %v1695 = vshrl.u32 %v1694, 7
    %v1696 = vsub.s32 0, %v1695
    %v1697 = vrot.slane %v1692, %v1696
    %v1699 = vmul.f32 %v1676, %v1697
    %v1700 = vmul.f32 %v1677, %v1697
    %v1701 = vmul.f32 %v1678, %v1697
    %v1702 = vmul.f32 %v1679, %v1697
    %v1703 = vmul.f32 %v1680, %v1697
    %v1704 = vmul.f32 %v1681, %v1697
    %v1705 = vmul.f32 %v1682, %v1697
    %v1706 = vmul.f32 %v1683, %v1697
    %v1707 = vmul.f32 %v1684, %v1697
    %v1708 = vmul.f32 %v1685, %v1697
    %v1709 = vmul.f32 %v1686, %v1697
    %v1710 = vmul.f32 %v1687, %v1697
    %v1711 = vmul.f32 %v1688, %v1697
    %v1712 = vmul.f32 %v1689, %v1697
    %v1713 = vmul.f32 %v1690, %v1697
    %v1714 = vmul.f32 %v1691, %v1697
    %1715 = vadd.xlane.f32.xlu0 %v1699
    %v1716 = vpop.xlane.xlu0 %1715
    %1717 = vadd.xlane.f32.xlu0 %v1700
    %v1718 = vpop.xlane.xlu0 %1717
    %1719 = vadd.xlane.f32.xlu0 %v1701
    %v1720 = vpop.xlane.xlu0 %1719
    %1721 = vadd.xlane.f32.xlu0 %v1702
    %v1722 = vpop.xlane.xlu0 %1721
    %1723 = vadd.xlane.f32.xlu0 %v1703
    %v1724 = vpop.xlane.xlu0 %1723
    %1725 = vadd.xlane.f32.xlu0 %v1704
    %v1726 = vpop.xlane.xlu0 %1725
    %1727 = vadd.xlane.f32.xlu0 %v1705
    %v1728 = vpop.xlane.xlu0 %1727
    %1729 = vadd.xlane.f32.xlu0 %v1706
    %v1730 = vpop.xlane.xlu0 %1729
    %1731 = vadd.xlane.f32.xlu0 %v1707
    %v1732 = vpop.xlane.xlu0 %1731
    %1733 = vadd.xlane.f32.xlu0 %v1708
    %v1734 = vpop.xlane.xlu0 %1733
    %1735 = vadd.xlane.f32.xlu0 %v1709
    %v1736 = vpop.xlane.xlu0 %1735
    %1737 = vadd.xlane.f32.xlu0 %v1710
    %v1738 = vpop.xlane.xlu0 %1737
    %1739 = vadd.xlane.f32.xlu0 %v1711
    %v1740 = vpop.xlane.xlu0 %1739
    %1741 = vadd.xlane.f32.xlu0 %v1712
    %v1742 = vpop.xlane.xlu0 %1741
    %1743 = vadd.xlane.f32.xlu0 %v1713
    %v1744 = vpop.xlane.xlu0 %1743
    %1745 = vadd.xlane.f32.xlu0 %v1714
    %v1746 = vpop.xlane.xlu0 %1745
    %v1747 = vadd.f32 %v1716, -0.09806679
    %v1748 = vadd.f32 %v1718, -0.09806679
    %v1749 = vadd.f32 %v1720, -0.09806679
    %v1750 = vadd.f32 %v1722, -0.09806679
    %v1751 = vadd.f32 %v1724, -0.09806679
    %v1752 = vadd.f32 %v1726, -0.09806679
    %v1753 = vadd.f32 %v1728, -0.09806679
    %v1754 = vadd.f32 %v1730, -0.09806679
    %v1755 = vadd.f32 %v1732, -0.09806679
    %v1756 = vadd.f32 %v1734, -0.09806679
    %v1757 = vadd.f32 %v1736, -0.09806679
    %v1758 = vadd.f32 %v1738, -0.09806679
    %v1759 = vadd.f32 %v1740, -0.09806679
    %v1760 = vadd.f32 %v1742, -0.09806679
    %v1761 = vadd.f32 %v1744, -0.09806679
    %v1762 = vadd.f32 %v1746, -0.09806679
    %v1779 = vlaneseq
    %v1780 = vshrl.u32 %v1779, 7
    %v1781 = vsub.s32 %v432, %v1780
    %v1782 = vrot.slane %v1747, %v1781
    %v1783 = vlaneseq
    %v1784 = vshrl.u32 %v1783, 7
    %v1785 = vsub.s32 %v432, %v1784
    %v1786 = vrot.slane %v1748, %v1785
    %v1787 = vlaneseq
    %v1788 = vshrl.u32 %v1787, 7
    %v1789 = vsub.s32 %v432, %v1788
    %v1790 = vrot.slane %v1749, %v1789
    %v1791 = vlaneseq
    %v1792 = vshrl.u32 %v1791, 7
    %v1793 = vsub.s32 %v432, %v1792
    %v1794 = vrot.slane %v1750, %v1793
    %v1795 = vlaneseq
    %v1796 = vshrl.u32 %v1795, 7
    %v1797 = vsub.s32 %v432, %v1796
    %v1798 = vrot.slane %v1751, %v1797
    %v1799 = vlaneseq
    %v1800 = vshrl.u32 %v1799, 7
    %v1801 = vsub.s32 %v432, %v1800
    %v1802 = vrot.slane %v1752, %v1801
    %v1803 = vlaneseq
    %v1804 = vshrl.u32 %v1803, 7
    %v1805 = vsub.s32 %v432, %v1804
    %v1806 = vrot.slane %v1753, %v1805
    %v1807 = vlaneseq
    %v1808 = vshrl.u32 %v1807, 7
    %v1809 = vsub.s32 %v432, %v1808
    %v1810 = vrot.slane %v1754, %v1809
    %v1811 = vlaneseq
    %v1812 = vshrl.u32 %v1811, 7
    %v1813 = vsub.s32 %v432, %v1812
    %v1814 = vrot.slane %v1755, %v1813
    %v1815 = vlaneseq
    %v1816 = vshrl.u32 %v1815, 7
    %v1817 = vsub.s32 %v432, %v1816
    %v1818 = vrot.slane %v1756, %v1817
    %v1819 = vlaneseq
    %v1820 = vshrl.u32 %v1819, 7
    %v1821 = vsub.s32 %v432, %v1820
    %v1822 = vrot.slane %v1757, %v1821
    %v1823 = vlaneseq
    %v1824 = vshrl.u32 %v1823, 7
    %v1825 = vsub.s32 %v432, %v1824
    %v1826 = vrot.slane %v1758, %v1825
    %v1827 = vlaneseq
    %v1828 = vshrl.u32 %v1827, 7
    %v1829 = vsub.s32 %v432, %v1828
    %v1830 = vrot.slane %v1759, %v1829
    %v1831 = vlaneseq
    %v1832 = vshrl.u32 %v1831, 7
    %v1833 = vsub.s32 %v432, %v1832
    %v1834 = vrot.slane %v1760, %v1833
    %v1835 = vlaneseq
    %v1836 = vshrl.u32 %v1835, 7
    %v1837 = vsub.s32 %v432, %v1836
    %v1838 = vrot.slane %v1761, %v1837
    %v1839 = vlaneseq
    %v1840 = vshrl.u32 %v1839, 7
    %v1841 = vsub.s32 %v432, %v1840
    %v1842 = vrot.slane %v1762, %v1841
    %v1843 = vsel %vm497, %v1786, %v1782
    %v1844 = vsel %vm499, %v1790, %v1843
    %v1845 = vsel %vm501, %v1794, %v1844
    %v1846 = vsel %vm503, %v1798, %v1845
    %v1847 = vsel %vm505, %v1802, %v1846
    %v1848 = vsel %vm507, %v1806, %v1847
    %v1849 = vsel %vm509, %v1810, %v1848
    %v1850 = vsel %vm497, %v1818, %v1814
    %v1851 = vsel %vm499, %v1822, %v1850
    %v1852 = vsel %vm501, %v1826, %v1851
    %v1853 = vsel %vm503, %v1830, %v1852
    %v1854 = vsel %vm505, %v1834, %v1853
    %v1855 = vsel %vm507, %v1838, %v1854
    %v1856 = vsel %vm509, %v1842, %v1855
    %1859 = vst.msk [vmem:[#allocation16] sm:$0xff] %vm520, %v1849
    %1860 = vst.msk [vmem:[#allocation16 + $0x8] sm:$0xff] %vm520, %v1856
    // Predicated region
    $region66: #{tpu_custom_call.1} parent=1 // pred_check
      _
    $region67: #{tpu_custom_call.1} parent=1 // pred_check_branch
      %1862 = sbr.rel (0) target = $region69
    $region68: #{tpu_custom_call.1} parent=1 // pred_region
      %s1864 = ssub.s32 256, 256
      %1865 = vsyncadd [#allocation4], %s1864
      %s1866 = sshll.u32 [#allocation16], 4
      %s1867 = int_to_ptr.vmem [resolvable:$true] %s1866
      %1872 = dma.vmem_to_hbm [thread:$0]  %s1867, 256, %s8, [#allocation4], 128, 128, 8
    $region69: #{tpu_custom_call.1} parent=1 // pred_fallthru
      _
    // Predicated region
    $region70: #{tpu_custom_call.1} parent=1 // pred_check
      _
    $region71: #{tpu_custom_call.1} parent=1 // pred_check_branch
      %1874 = sbr.rel (0) target = $region73
    $region72: #{tpu_custom_call.1} parent=1 // pred_region
      %1875 = dma.done [#allocation4], 256
    $region73: #{tpu_custom_call.1} parent=1 // pred_fallthru
      _
    %1876 = vsyncpa [#allocation3], 1
    %1877 = vsyncpa [#allocation6], 1
    %1878 = vsyncpa [#allocation9], 1
    %1879 = vsyncpa [#allocation12], 1
    %1880 = vsyncpa [#allocation15], 1
    %1881 = vsyncpa [#allocation4], 1

</llo_original>
